<compile_context>
chip_gen: v5e
topology: v5e:2x2
jax: 0.10.0
libtpu: 0.0.40
codegen_flags: <defaults>
</compile_context>

<pallas_src>
import numpy as np
import jax
import jax.numpy as jnp
from jax.experimental import pallas as pl
from jax.experimental.pallas import tpu as pltpu

# ------------------- fixed module hyper-parameters --------------------------
SR = 22050
WIN_LENGTH = 1024
HOP_LENGTH = 256
N_FFT = 1024
F_MIN = 0.0
F_MAX = 8000.0
N_MELS = 80
POWER = 1.0                     # magnitude spectrogram
CLAMP_MIN = 1e-5

N_FREQS = N_FFT // 2 + 1        # 513
M_PAD = 128                     # 80 mel bins padded to one full lane tile
TAIL_ROWS = 8                   # extra hop-rows per tile (>= n_fft/hop - 1), sublane aligned
MATMUL_DTYPE = jnp.bfloat16     # MXU-native; use jnp.float32 for bit-exact-ish output

assert N_FFT % HOP_LENGTH == 0
assert TAIL_ROWS >= N_FFT // HOP_LENGTH - 1
assert HOP_LENGTH % 128 == 0


def _round_up(x, m):
    return (x + m - 1) // m * m


# ---------------- librosa slaney mel filterbank (numpy, deterministic) ------
def _hz_to_mel(freq):
    freq = np.atleast_1d(np.asarray(freq, dtype=np.float64))
    f_sp = 200.0 / 3.0
    mels = freq / f_sp
    min_log_hz = 1000.0
    min_log_mel = min_log_hz / f_sp
    logstep = np.log(6.4) / 27.0
    log_reg = freq >= min_log_hz
    mels[log_reg] = min_log_mel + np.log(freq[log_reg] / min_log_hz) / logstep
    return mels


def _mel_to_hz(mels):
    mels = np.asarray(mels, dtype=np.float64)
    f_sp = 200.0 / 3.0
    freqs = f_sp * mels
    min_log_hz = 1000.0
    min_log_mel = min_log_hz / f_sp
    logstep = np.log(6.4) / 27.0
    log_reg = mels >= min_log_mel
    freqs[log_reg] = min_log_hz * np.exp(logstep * (mels[log_reg] - min_log_mel))
    return freqs


def mel_filterbank(sr, n_fft, n_mels, fmin, fmax):
    """librosa.filters.mel(...) equivalent, shape [n_mels, n_freqs], slaney norm."""
    n_freqs = n_fft // 2 + 1
    fftfreqs = np.linspace(0.0, sr / 2.0, n_freqs)
    mel_min = _hz_to_mel(fmin)[0]
    mel_max = _hz_to_mel(fmax)[0]
    mel_pts = np.linspace(mel_min, mel_max, n_mels + 2)
    mel_f = _mel_to_hz(mel_pts)
    fdiff = np.diff(mel_f)
    ramps = mel_f[:, None] - fftfreqs[None, :]
    lower = -ramps[:-2] / fdiff[:-1, None]
    upper = ramps[2:] / fdiff[1:, None]
    weights = np.maximum(0.0, np.minimum(lower, upper))
    enorm = 2.0 / (mel_f[2: n_mels + 2] - mel_f[:n_mels])
    weights = weights * enorm[:, None]
    return weights.astype(np.float32)       # [n_mels, n_freqs]


def build_constants(dtype=MATMUL_DTYPE):
    """Fused windowed DFT matrix [n_fft, 2*F_KEEP] and mel filterbank
    [F_KEEP, M_PAD].  F_KEEP = smallest multiple of 128 covering every
    frequency bin with a nonzero mel weight (384 for f_max=8000 < Nyquist)."""
    fb = mel_filterbank(SR, N_FFT, N_MELS, F_MIN, F_MAX)        # [n_mels, n_freqs]
    nz = np.where(fb.max(axis=0) > 0.0)[0]
    cutoff = int(nz[-1]) + 1 if nz.size else 1                  # 372 for these params
    f_keep = max(128, _round_up(cutoff, 128))                   # -> 384

    n = np.arange(N_FFT, dtype=np.float64)
    k = np.arange(f_keep, dtype=np.float64)
    # periodic Hann (torch.hann_window default; win_length == n_fft)
    window = 0.5 - 0.5 * np.cos(2.0 * np.pi * n / WIN_LENGTH)
    ang = 2.0 * np.pi * np.outer(n, k) / N_FFT                  # [n_fft, f_keep]
    dft = np.concatenate(
        [window[:, None] * np.cos(ang), -window[:, None] * np.sin(ang)], axis=1
    )                                                           # [n_fft, 2*f_keep]

    fb_t = fb.T                                                 # [n_freqs, n_mels]
    if f_keep <= N_FREQS:
        fb_t = fb_t[:f_keep]                                    # dropped rows are all zero
    else:
        fb_t = np.pad(fb_t, ((0, f_keep - N_FREQS), (0, 0)))
    fb_t = np.pad(fb_t, ((0, 0), (0, M_PAD - N_MELS)))

    return jnp.asarray(dft, dtype=dtype), jnp.asarray(fb_t, dtype=dtype)


# ---------------- Pallas kernel ---------------------------------------------
def melspec_kernel(main_ref, tail_ref, dft_ref, fb_ref, out_ref):
    # main_ref: [1, TM, hop]   non-overlapping audio rows for this tile
    # tail_ref: [1, 8,  hop]   next 8 rows (overlap for the last frames)
    # dft_ref : [n_fft, 2*F_KEEP]   fused [cos | -sin] windowed DFT
    # fb_ref  : [F_KEEP, M_PAD]     mel filterbank
    # out_ref : [1, TM, M_PAD]
    tm = main_ref.shape[1]
    hop = main_ref.shape[2]
    n_fft = dft_ref.shape[0]
    f_keep = dft_ref.shape[1] // 2
    n_sub = n_fft // hop                         # 4 hop-rows per frame

    main = main_ref[0]                           # [TM, hop]  f32
    tail = tail_ref[0]                           # [8,  hop]  f32
    chunk = jnp.concatenate([main, tail], axis=0)            # [TM+8, hop]

    # frame t = audio[t*hop : t*hop + n_fft]  ==  concat(chunk[t : t+n_sub])
    frames = jnp.concatenate(
        [chunk[s: s + tm] for s in range(n_sub)], axis=1     # [TM, n_fft]
    ).astype(dft_ref.dtype)

    spec = jnp.dot(frames, dft_ref[...], preferred_element_type=jnp.float32)
    re = spec[:, :f_keep]
    im = spec[:, f_keep:]
    mag = jnp.sqrt(re * re + im * im)                        # power = 1.0

    mel = jnp.dot(mag.astype(fb_ref.dtype), fb_ref[...],
                  preferred_element_type=jnp.float32)        # [TM, M_PAD]
    out_ref[0] = jnp.log(jnp.maximum(mel, CLAMP_MIN))


def melspec_pallas(xp2d, dft, fb, tm, n_tiles):
    B, s_total, hop = xp2d.shape
    n_fft, f2 = dft.shape
    f_keep, m_pad = fb.shape
    assert f2 == 2 * f_keep and n_fft == N_FFT and hop == HOP_LENGTH
    assert tm % TAIL_ROWS == 0 and s_total == n_tiles * tm + TAIL_ROWS

    return pl.pallas_call(
        melspec_kernel,
        out_shape=jax.ShapeDtypeStruct((B, n_tiles * tm, m_pad), jnp.float32),
        grid_spec=pltpu.PrefetchScalarGridSpec(
            num_scalar_prefetch=0,
            grid=(B, n_tiles),
            in_specs=[
                # non-overlapping body rows of this frame tile
                pl.BlockSpec((1, tm, hop), lambda b, i: (b, i, 0)),
                # 8-row tail right after the body (overlap for the last frames)
                pl.BlockSpec((1, TAIL_ROWS, hop),
                             lambda b, i: (b, (i + 1) * (tm // TAIL_ROWS), 0)),
                # resident constants
                pl.BlockSpec((n_fft, f2), lambda b, i: (0, 0)),
                pl.BlockSpec((f_keep, m_pad), lambda b, i: (0, 0)),
            ],
            out_specs=pl.BlockSpec((1, tm, m_pad), lambda b, i: (b, i, 0)),
        ),
        compiler_params=pltpu.CompilerParams(
            dimension_semantics=("parallel", "parallel"),
        ),
    )(xp2d, xp2d, dft, fb)


def _choose_tm(n_frames, batch):
    """Frame tile: 256 for large inputs (full MXU M-dim); small inputs use the
    smallest multiple of 8 covering the frames, split in two when that keeps
    >= 2 grid steps for megacore."""
    if n_frames >= 512:
        return 256
    tm = min(256, _round_up(n_frames, 8))
    if batch == 1 and n_frames >= 16:
        tm = min(256, _round_up((n_frames + 1) // 2, 8))
    return tm


# ---------------- wrapper: [B,1,T] -> [B, n_mels, T'] ------------------------
def mel_spectrogram(audio, dft, fb):
    B, C, T = audio.shape
    assert C == 1
    x = audio[:, 0, :].astype(jnp.float32)                     # [B, T]
    pad = N_FFT // 2
    xp = jnp.pad(x, ((0, 0), (pad, pad)), mode="reflect")      # center=True

    n_frames = T // HOP_LENGTH + 1
    tm = _choose_tm(n_frames, B)
    n_tiles = -(-n_frames // tm)
    s_total = n_tiles * tm + TAIL_ROWS
    total_len = s_total * HOP_LENGTH                           # always >= T + n_fft
    xp = jnp.pad(xp, ((0, 0), (0, total_len - xp.shape[1])))
    xp2d = xp.reshape(B, s_total, HOP_LENGTH)                  # hop-rows of audio

    out = melspec_pallas(xp2d, dft, fb, tm, n_tiles)           # [B, n_tiles*tm, M_PAD]
    mel = out[:, :n_frames, :N_MELS]
    return jnp.transpose(mel, (0, 2, 1))                       # [B, n_mels, T']


# ---------------- independent numpy reference (rfft path) -------------------
def reference_melspec(audio_np):
    x = audio_np[:, 0, :].astype(np.float64)
    pad = N_FFT // 2
    xp = np.pad(x, ((0, 0), (pad, pad)), mode="reflect")
    n_frames = x.shape[1] // HOP_LENGTH + 1
    n = np.arange(N_FFT, dtype=np.float64)
    window = 0.5 - 0.5 * np.cos(2.0 * np.pi * n / WIN_LENGTH)
    frames = np.stack(
        [xp[:, t * HOP_LENGTH: t * HOP_LENGTH + N_FFT] for t in range(n_frames)],
        axis=1)                                                # [B, T', n_fft]
    spec = np.fft.rfft(frames * window, n=N_FFT, axis=-1)
    mag = np.abs(spec)                                         # [B, T', 513]
    fb = mel_filterbank(SR, N_FFT, N_MELS, F_MIN, F_MAX).astype(np.float64)
    mel = mag @ fb.T                                           # [B, T', 80]
    return np.log(np.maximum(mel, CLAMP_MIN)).transpose(0, 2, 1)


if __name__ == "__main__":
    key = jax.random.PRNGKey(0)
    B, T = 2, 2048                                             # small deterministic input
    audio = jax.random.normal(key, (B, 1, T), dtype=jnp.float32)

    dft, fb = build_constants()
    mel = jax.jit(mel_spectrogram)(audio, dft, fb)
    mel = jax.block_until_ready(mel)

    n_frames = T // HOP_LENGTH + 1
    assert mel.shape == (B, N_MELS, n_frames), mel.shape
    assert bool(jnp.all(jnp.isfinite(mel)))

    ref = reference_melspec(np.asarray(audio))
    max_err = float(np.max(np.abs(np.asarray(mel, dtype=np.float64) - ref)))
    # bf16 matmul inputs with f32 accumulation: log-mel agrees to ~1e-2.
    assert max_err < 0.15, f"max log-mel abs error {max_err}"
    print("KERNEL_OK")
</pallas_src>

<mosaic_0001>
module attributes {stable_mosaic.version = 11 : i64} {
  func.func @melspec_kernel(%arg0: i32, %arg1: i32, %arg2: memref<1x16x256xf32, #tpu.memory_space<vmem>>, %arg3: memref<1x8x256xf32, #tpu.memory_space<vmem>>, %arg4: memref<1024x768xbf16, #tpu.memory_space<vmem>>, %arg5: memref<384x128xbf16, #tpu.memory_space<vmem>>, %arg6: memref<1x16x128xf32, #tpu.memory_space<vmem>>) attributes {dimension_semantics = [#tpu.dimension_semantics<parallel>, #tpu.dimension_semantics<parallel>], iteration_bounds = array<i64: 2, 1>, scalar_prefetch = 0 : i64, scratch_operands = 0 : i64, tpu.core_type = #tpu.core_type<tc>, window_params = [{transform_indices = @transform_0, window_bounds = array<i64: 1, 16, 256>}, {transform_indices = @transform_1, window_bounds = array<i64: 1, 8, 256>}, {pipeline_mode = #tpu.pipeline_mode<synchronous>, transform_indices = @transform_2, window_bounds = array<i64: 1024, 768>}, {pipeline_mode = #tpu.pipeline_mode<synchronous>, transform_indices = @transform_3, window_bounds = array<i64: 384, 128>}, {transform_indices = @transform_4, window_bounds = array<i64: 1, 16, 128>}]} {
    %c0 = arith.constant 0 : index
    %c0_0 = arith.constant 0 : index
    %c0_1 = arith.constant 0 : index
    %0 = vector.load %arg2[%c0, %c0_0, %c0_1] : memref<1x16x256xf32, #tpu.memory_space<vmem>>, vector<1x16x256xf32>
    %1 = vector.shape_cast %0 : vector<1x16x256xf32> to vector<16x256xf32>
    %c0_2 = arith.constant 0 : index
    %c0_3 = arith.constant 0 : index
    %c0_4 = arith.constant 0 : index
    %2 = vector.load %arg3[%c0_2, %c0_3, %c0_4] : memref<1x8x256xf32, #tpu.memory_space<vmem>>, vector<1x8x256xf32>
    %3 = vector.shape_cast %2 : vector<1x8x256xf32> to vector<8x256xf32>
    %4 = tpu.concatenate %1, %3 in 0 : vector<16x256xf32>, vector<8x256xf32> -> vector<24x256xf32>
    %5 = vector.extract_strided_slice %4 {offsets = [0, 0], sizes = [16, 256], strides = [1, 1]} : vector<24x256xf32> to vector<16x256xf32>
    %6 = vector.extract_strided_slice %4 {offsets = [1, 0], sizes = [16, 256], strides = [1, 1]} : vector<24x256xf32> to vector<16x256xf32>
    %7 = vector.extract_strided_slice %4 {offsets = [2, 0], sizes = [16, 256], strides = [1, 1]} : vector<24x256xf32> to vector<16x256xf32>
    %8 = vector.extract_strided_slice %4 {offsets = [3, 0], sizes = [16, 256], strides = [1, 1]} : vector<24x256xf32> to vector<16x256xf32>
    %9 = tpu.concatenate %5, %6, %7, %8 in 1 : vector<16x256xf32>, vector<16x256xf32>, vector<16x256xf32>, vector<16x256xf32> -> vector<16x1024xf32>
    %10 = arith.truncf %9 : vector<16x1024xf32> to vector<16x1024xbf16>
    %c0_5 = arith.constant 0 : index
    %c0_6 = arith.constant 0 : index
    %11 = vector.load %arg4[%c0_5, %c0_6] : memref<1024x768xbf16, #tpu.memory_space<vmem>>, vector<1024x768xbf16>
    %cst = arith.constant dense<0.000000e+00> : vector<16x768xf32>
    %12 = tpu.matmul %10, %11, %cst {dimension_numbers = #tpu.dot_dimension_numbers<[1], [0], [0], [1], [0, 0, 1, 1], [], []>} : vector<16x1024xbf16>, vector<1024x768xbf16>, vector<16x768xf32> -> vector<16x768xf32>
    %13 = vector.extract_strided_slice %12 {offsets = [0, 0], sizes = [16, 384], strides = [1, 1]} : vector<16x768xf32> to vector<16x384xf32>
    %14 = vector.extract_strided_slice %12 {offsets = [0, 384], sizes = [16, 384], strides = [1, 1]} : vector<16x768xf32> to vector<16x384xf32>
    %15 = arith.mulf %13, %13 : vector<16x384xf32>
    %16 = arith.mulf %14, %14 : vector<16x384xf32>
    %17 = arith.addf %15, %16 : vector<16x384xf32>
    %18 = math.sqrt %17 : vector<16x384xf32>
    %19 = arith.truncf %18 : vector<16x384xf32> to vector<16x384xbf16>
    %c0_7 = arith.constant 0 : index
    %c0_8 = arith.constant 0 : index
    %20 = vector.load %arg5[%c0_7, %c0_8] : memref<384x128xbf16, #tpu.memory_space<vmem>>, vector<384x128xbf16>
    %cst_9 = arith.constant dense<0.000000e+00> : vector<16x128xf32>
    %21 = tpu.matmul %19, %20, %cst_9 {dimension_numbers = #tpu.dot_dimension_numbers<[1], [0], [0], [1], [0, 0, 1, 1], [], []>} : vector<16x384xbf16>, vector<384x128xbf16>, vector<16x128xf32> -> vector<16x128xf32>
    %cst_10 = arith.constant 9.99999974E-6 : f32
    %22 = vector.broadcast %cst_10 : f32 to vector<16x128xf32>
    %23 = arith.maximumf %21, %22 : vector<16x128xf32>
    %24 = math.log %23 : vector<16x128xf32>
    %c0_11 = arith.constant 0 : index
    %c0_12 = arith.constant 0 : index
    %c0_13 = arith.constant 0 : index
    %25 = vector.load %arg6[%c0_11, %c0_12, %c0_13] : memref<1x16x128xf32, #tpu.memory_space<vmem>>, vector<1x16x128xf32>
    %26 = vector.shape_cast %25 : vector<1x16x128xf32> to vector<16x128xf32>
    %27 = vector.shape_cast %24 : vector<16x128xf32> to vector<1x16x128xf32>
    tpu.vector_store %arg6[%c0_11, %c0_12, %c0_13], %27 {strides = array<i32>} : memref<1x16x128xf32, #tpu.memory_space<vmem>>, vector<1x16x128xf32>,
    return
  }
  func.func @transform_0(%arg0: i32, %arg1: i32) -> (i32, i32, i32) {
    %c0_i32 = arith.constant 0 : i32
    %c0_i32_0 = arith.constant 0 : i32
    return %arg0, %arg1, %c0_i32 : i32, i32, i32
  }
  func.func @transform_1(%arg0: i32, %arg1: i32) -> (i32, i32, i32) {
    %c1_i32 = arith.constant 1 : i32
    %0 = arith.addi %arg1, %c1_i32 : i32
    %c2_i32 = arith.constant 2 : i32
    %1 = arith.muli %0, %c2_i32 : i32
    %c0_i32 = arith.constant 0 : i32
    %c0_i32_0 = arith.constant 0 : i32
    return %arg0, %1, %c0_i32 : i32, i32, i32
  }
  func.func @transform_2(%arg0: i32, %arg1: i32) -> (i32, i32) {
    %c0_i32 = arith.constant 0 : i32
    %c0_i32_0 = arith.constant 0 : i32
    %c0_i32_1 = arith.constant 0 : i32
    return %c0_i32, %c0_i32_0 : i32, i32
  }
  func.func @transform_3(%arg0: i32, %arg1: i32) -> (i32, i32) {
    %c0_i32 = arith.constant 0 : i32
    %c0_i32_0 = arith.constant 0 : i32
    %c0_i32_1 = arith.constant 0 : i32
    return %c0_i32, %c0_i32_0 : i32, i32
  }
  func.func @transform_4(%arg0: i32, %arg1: i32) -> (i32, i32, i32) {
    %c0_i32 = arith.constant 0 : i32
    %c0_i32_0 = arith.constant 0 : i32
    return %arg0, %arg1, %c0_i32 : i32, i32, i32
  }
}

</mosaic_0001>

<llo_original>
// kernel: mel_spectrogram.1
$region0: #{mel_spectrogram.1}
  #allocation0 [shape = 'u32[]', space=smem, size = 0x4, offset = 0x4, fixed_abs, tag = 'smem constant byte address 0x4 - core index']
  #allocation1 [shape = 'u32[72,128]{1,0:T(1,128)}', space=vmem, size = 0x9000, scoped, tag = 'internal scratch']
  %s0 = inlined_call_operand.vmem [shape: f32[2,24,256], index: 0, kind: input, shape index: {}, may-alias: {0,1}]
  %s1 = inlined_call_operand.vmem [shape: f32[2,24,256], index: 1, kind: input, shape index: {}, may-alias: {0,1}]
  %s2 = inlined_call_operand.hbm [shape: bf16[1024,768], index: 2, kind: input, shape index: {}]
  %s3 = inlined_call_operand.hbm [shape: bf16[384,128], index: 3, kind: input, shape index: {}]
  %s4 = inlined_call_operand.vmem [shape: f32[2,16,128], index: 4, kind: output, shape index: {}]
  %s5 = sld [smem:[#allocation0]]
  $region57: #{mel_spectrogram.1} parent=0
    _
  %s7 = ssub.s32 1, %s5
  %s8 = scalar_select 0, %s7, %s5
  $region1: #{mel_spectrogram.1} parent=0
    #allocation2 [shape = 'u8[1572864]{0}', space=vmem, size = 0x180000, scoped, tag = 'input window, operand 2, single buffered']
    #allocation3 [shape = 's32[2]{0}', space=sflag, size = 0x8, scoped, tag = 'scoped memory for mel_spectrogram.1']
    #allocation4 [shape = 'u8[98304]{0}', space=vmem, size = 0x18000, scoped, tag = 'input window, operand 3, single buffered']
    #allocation5 [shape = 's32[1]{0}', space=sflag, size = 0x4, scoped, tag = 'scoped memory for mel_spectrogram.1']
    %9 = vsyncpa [#allocation3], 0
    %10 = vsyncpa [#allocation5], 0
    loop: start=0, step=1, limit=4
    $region2: #{mel_spectrogram.1} parent=1 // loop_pre_header
      _
    $region3: #{mel_spectrogram.1} parent=1 // loop_header
      %s12 = sphi 0, %s16
      %p13 = scmp.ge.s32.totalorder %s12, 4
      %s19 = sphi 0, %s31
      %s20 = sphi 0, %s27
      %s21 = sphi 0, %s19
      %s22 = sphi 0, %s20
      %s23 = sphi 0, %s21
      %s24 = sphi 0, %s22
      %s36 = sphi 0, %s38
      %s39 = sphi 0, %s36
      %s40 = sphi 0, %s39
      %s56 = sphi 0, %s40
      %s68 = sphi 0, %s70
      %s71 = sphi 0, %s68
      %s72 = sphi 0, %s71
      %s88 = sphi 0, %s72
      %s92 = sphi 0, %s92
      %s94 = sphi 0, %s92
      %s95 = sphi 0, %s94
      %s109 = sphi 0, %s95
      %s113 = sphi 0, %s113
      %s115 = sphi 0, %s113
      %s116 = sphi 0, %s115
      %s130 = sphi 0, %s116
      %s138 = sphi 0, %s140
      %s141 = sphi 0, %s138
      %s142 = sphi 0, %s141
      %s158 = sphi 0, %s142
    $region4: #{mel_spectrogram.1} parent=1 // loop_header_branch
      %15 = sbr.rel (%p13) target = $region8
    $region5: #{mel_spectrogram.1} parent=1 // loop_body
      %s17 = ssub.s32 %s12, 1
      %s18 = ssub.s32 %s12, 2
      %s25 = sadd.s32 1, %s20
      %p26 = scmp.ge.s32.totalorder %s25, 1
      %s27 = scalar_select %p26, 0, %s25
      %s28 = sadd.s32 1, %s19
      %s29 = scalar_select %p26, %s28, %s19
      %p30 = scmp.ge.s32.totalorder %s29, 2
      %s31 = scalar_select %p30, 0, %s29
      %s32 = ssub.s32 %s19, %s31
      %s33 = ssub.s32 %s20, %s27
      %s34 = sor.u32 %s32, %s33
      %p35 = scmp.eq.s32.totalorder %s34, 0
      %s37 = sadd.s32 %s36, 1
      %s38 = scalar_select %p35, %s36, %s37
      %p41 = pneg %p35
      %p42 = scmp.eq.s32.totalorder %s12, 1
      %p43 = por %p41, %p42
      %p44 = scmp.ne.s32.totalorder %s36, %s39
      %p45 = scmp.eq.s32.totalorder %s12, 0
      %p46 = por %p44, %p45
      %p47 = scmp.ne.s32.totalorder %s36, %s39
      %p48 = scmp.eq.s32.totalorder %s17, 1
      %p49 = por %p47, %p48
      %p50 = scmp.ne.s32.totalorder %s39, %s40
      %p51 = scmp.eq.s32.totalorder %s17, 0
      %p52 = por %p50, %p51
      %p53 = scmp.ne.s32.totalorder %s39, %s40
      %p54 = scmp.eq.s32.totalorder %s18, 1
      %p55 = por %p53, %p54
      %p57 = scmp.ne.s32.totalorder %s40, %s56
      %p58 = scmp.eq.s32.totalorder %s18, 0
      %p59 = por %p57, %p58
      %s60 = sadd.s32 %s20, 1
      %s61 = smul.u32 %s60, 2
      %s62 = sadd.s32 %s27, 1
      %s63 = smul.u32 %s62, 2
      %s64 = ssub.s32 %s19, %s31
      %s65 = ssub.s32 %s61, %s63
      %s66 = sor.u32 %s64, %s65
      %p67 = scmp.eq.s32.totalorder %s66, 0
      %s69 = sadd.s32 %s68, 1
      %s70 = scalar_select %p67, %s68, %s69
      %p73 = pneg %p67
      %p74 = scmp.eq.s32.totalorder %s12, 1
      %p75 = por %p73, %p74
      %p76 = scmp.ne.s32.totalorder %s68, %s71
      %p77 = scmp.eq.s32.totalorder %s12, 0
      %p78 = por %p76, %p77
      %p79 = scmp.ne.s32.totalorder %s68, %s71
      %p80 = scmp.eq.s32.totalorder %s17, 1
      %p81 = por %p79, %p80
      %p82 = scmp.ne.s32.totalorder %s71, %s72
      %p83 = scmp.eq.s32.totalorder %s17, 0
      %p84 = por %p82, %p83
      %p85 = scmp.ne.s32.totalorder %s71, %s72
      %p86 = scmp.eq.s32.totalorder %s18, 1
      %p87 = por %p85, %p86
      %p89 = scmp.ne.s32.totalorder %s72, %s88
      %p90 = scmp.eq.s32.totalorder %s18, 0
      %p91 = por %p89, %p90
      %s93 = sadd.s32 %s92, 1
      %p96 = scmp.eq.s32.totalorder %s12, 1
      %p97 = scmp.ne.s32.totalorder %s92, %s94
      %p98 = scmp.eq.s32.totalorder %s12, 0
      %p99 = por %p97, %p98
      %p100 = scmp.ne.s32.totalorder %s92, %s94
      %p101 = scmp.eq.s32.totalorder %s17, 1
      %p102 = por %p100, %p101
      %p103 = scmp.ne.s32.totalorder %s94, %s95
      %p104 = scmp.eq.s32.totalorder %s17, 0
      %p105 = por %p103, %p104
      %p106 = scmp.ne.s32.totalorder %s94, %s95
      %p107 = scmp.eq.s32.totalorder %s18, 1
      %p108 = por %p106, %p107
      %p110 = scmp.ne.s32.totalorder %s95, %s109
      %p111 = scmp.eq.s32.totalorder %s18, 0
      %p112 = por %p110, %p111
      %s114 = sadd.s32 %s113, 1
      %p117 = scmp.eq.s32.totalorder %s12, 1
      %p118 = scmp.ne.s32.totalorder %s113, %s115
      %p119 = scmp.eq.s32.totalorder %s12, 0
      %p120 = por %p118, %p119
      %p121 = scmp.ne.s32.totalorder %s113, %s115
      %p122 = scmp.eq.s32.totalorder %s17, 1
      %p123 = por %p121, %p122
      %p124 = scmp.ne.s32.totalorder %s115, %s116
      %p125 = scmp.eq.s32.totalorder %s17, 0
      %p126 = por %p124, %p125
      %p127 = scmp.ne.s32.totalorder %s115, %s116
      %p128 = scmp.eq.s32.totalorder %s18, 1
      %p129 = por %p127, %p128
      %p131 = scmp.ne.s32.totalorder %s116, %s130
      %p132 = scmp.eq.s32.totalorder %s18, 0
      %p133 = por %p131, %p132
      %s134 = ssub.s32 %s19, %s31
      %s135 = ssub.s32 %s20, %s27
      %s136 = sor.u32 %s134, %s135
      %p137 = scmp.eq.s32.totalorder %s136, 0
      %s139 = sadd.s32 %s138, 1
      %s140 = scalar_select %p137, %s138, %s139
      %p143 = pneg %p137
      %p144 = scmp.eq.s32.totalorder %s12, 1
      %p145 = por %p143, %p144
      %p146 = scmp.ne.s32.totalorder %s138, %s141
      %p147 = scmp.eq.s32.totalorder %s12, 0
      %p148 = por %p146, %p147
      %p149 = scmp.ne.s32.totalorder %s138, %s141
      %p150 = scmp.eq.s32.totalorder %s17, 1
      %p151 = por %p149, %p150
      %p152 = scmp.ne.s32.totalorder %s141, %s142
      %p153 = scmp.eq.s32.totalorder %s17, 0
      %p154 = por %p152, %p153
      %p155 = scmp.ne.s32.totalorder %s141, %s142
      %p156 = scmp.eq.s32.totalorder %s18, 1
      %p157 = por %p155, %p156
      %p159 = scmp.ne.s32.totalorder %s142, %s158
      %p160 = scmp.eq.s32.totalorder %s18, 0
      %p161 = por %p159, %p160
      %p162 = scmp.le.s32.totalorder 1, %s12
      %p163 = scmp.lt.s32.totalorder %s12, 3
      %p164 = pnand %p162, %p163
      %p165 = pneg %p164
      // Predicated region
      $region9: #{mel_spectrogram.1} parent=5 // pred_check
        _
      $region10: #{mel_spectrogram.1} parent=5 // pred_check_branch
        %167 = sbr.rel (%p164) target = $region12
      $region11: #{mel_spectrogram.1} parent=5 // pred_region
        %s168 = ssub.s32 %s12, 1
        // Predicated region
        $region13: #{mel_spectrogram.1} parent=11 // pred_check
          %p169 = pneg %p105
        $region14: #{mel_spectrogram.1} parent=11 // pred_check_branch
          %171 = sbr.rel (%p169) target = $region16
        $region15: #{mel_spectrogram.1} parent=11 // pred_region
          %173 = vsyncadd [#allocation3], 0
          %s174 = sshll.u32 %s2, 4
          %s175 = int_to_ptr.hbm [resolvable:$true] %s174
          %s176 = sshll.u32 [#allocation2], 4
          %s177 = int_to_ptr.vmem [resolvable:$true] %s176
          %182 = dma.hbm_to_vmem [thread:$0]  %s175, 49152, %s177, [#allocation3], 384, 384, 24
        $region16: #{mel_spectrogram.1} parent=11 // pred_fallthru
          _
        // Predicated region
        $region17: #{mel_spectrogram.1} parent=11 // pred_check
          %p183 = pneg %p126
        $region18: #{mel_spectrogram.1} parent=11 // pred_check_branch
          %185 = sbr.rel (%p183) target = $region20
        $region19: #{mel_spectrogram.1} parent=11 // pred_region
          %187 = vsyncadd [#allocation5], 0
          %s188 = sshll.u32 %s3, 4
          %s189 = int_to_ptr.hbm [resolvable:$true] %s188
          %s190 = sshll.u32 [#allocation4], 4
          %s191 = int_to_ptr.vmem [resolvable:$true] %s190
          %196 = dma.hbm_to_vmem [thread:$0]  %s189, 3072, %s191, [#allocation5], 64, 64, 4
        $region20: #{mel_spectrogram.1} parent=11 // pred_fallthru
          _
      $region12: #{mel_spectrogram.1} parent=5 // pred_fallthru
        _
      %p197 = scmp.lt.s32.totalorder %s12, 2
      // Predicated region
      $region21: #{mel_spectrogram.1} parent=5 // pred_check
        %p198 = pneg %p197
      $region22: #{mel_spectrogram.1} parent=5 // pred_check_branch
        %200 = sbr.rel (%p198) target = $region24
      $region23: #{mel_spectrogram.1} parent=5 // pred_region
        // Predicated region
        $region25: #{mel_spectrogram.1} parent=23 // pred_check
          %p201 = pneg %p46
        $region26: #{mel_spectrogram.1} parent=23 // pred_check_branch
          %203 = sbr.rel (%p201) target = $region28
        $region27: #{mel_spectrogram.1} parent=23 // pred_region
          %s204 = smul.u32 2, %s20
          %s205 = ssub.s32 3, %s204
          %p206 = scmp.lt.s32.totalorder %s205, 2
          %s207 = scalar_select %p206, %s205, 2
          %s208 = smul.u32 8, %s207
          %s209 = smul.u32 %s208, 2
          %p210 = scmp.lt.s32.totalorder %s19, 1
          %s211 = scalar_select %p210, %s19, 1
          %p212 = scmp.lt.s32.totalorder %s204, 2
          %s213 = scalar_select %p212, %s204, 2
          %s214 = smul.addr %s213, 2
          %s215 = smul.addr %s211, 6
          %s216 = sadd.s32 %s214, %s215
          %s217 = smul.addr %s216, 8
          %s218 = scalar_lea.vmem %s0, %s217
          %s219 = smul.u32 2, %s20
          %s220 = ssub.s32 3, %s219
          %p221 = scmp.lt.s32.totalorder %s220, 2
          %s222 = scalar_select %p221, %s220, 2
          %s223 = smul.u32 8, %s222
          %s224 = smul.u32 %s223, 2
        $region28: #{mel_spectrogram.1} parent=23 // pred_fallthru
          _
        // Predicated region
        $region29: #{mel_spectrogram.1} parent=23 // pred_check
          %p225 = pneg %p78
        $region30: #{mel_spectrogram.1} parent=23 // pred_check_branch
          %227 = sbr.rel (%p225) target = $region32
        $region31: #{mel_spectrogram.1} parent=23 // pred_region
          %s228 = sadd.s32 %s20, 1
          %s229 = smul.u32 %s228, 2
          %p230 = scmp.lt.s32.totalorder %s19, 1
          %s231 = scalar_select %p230, %s19, 1
          %p232 = scmp.lt.s32.totalorder %s229, 2
          %s233 = scalar_select %p232, %s229, 2
          %s234 = smul.addr %s233, 2
          %s235 = smul.addr %s231, 6
          %s236 = sadd.s32 %s234, %s235
          %s237 = smul.addr %s236, 8
          %s238 = scalar_lea.vmem %s1, %s237
          %s239 = sadd.s32 %s20, 1
          %s240 = smul.u32 %s239, 2
        $region32: #{mel_spectrogram.1} parent=23 // pred_fallthru
          _
      $region24: #{mel_spectrogram.1} parent=5 // pred_fallthru
        _
      %p241 = scmp.le.s32.totalorder 1, %s12
      %p242 = scmp.lt.s32.totalorder %s12, 3
      %p243 = pnand %p241, %p242
      %p244 = pneg %p243
      // Predicated region
      $region33: #{mel_spectrogram.1} parent=5 // pred_check
        _
      $region34: #{mel_spectrogram.1} parent=5 // pred_check_branch
        %246 = sbr.rel (%p243) target = $region36
      $region35: #{mel_spectrogram.1} parent=5 // pred_region
        %s247 = ssub.s32 %s12, 1
        // Predicated region
        $region37: #{mel_spectrogram.1} parent=35 // pred_check
          %p248 = pneg %p105
        $region38: #{mel_spectrogram.1} parent=35 // pred_check_branch
          %250 = sbr.rel (%p248) target = $region40
        $region39: #{mel_spectrogram.1} parent=35 // pred_region
          %252 = dma.done [#allocation3], 49152
        $region40: #{mel_spectrogram.1} parent=35 // pred_fallthru
          _
        // Predicated region
        $region41: #{mel_spectrogram.1} parent=35 // pred_check
          %p253 = pneg %p126
        $region42: #{mel_spectrogram.1} parent=35 // pred_check_branch
          %255 = sbr.rel (%p253) target = $region44
        $region43: #{mel_spectrogram.1} parent=35 // pred_region
          %257 = dma.done [#allocation5], 3072
        $region44: #{mel_spectrogram.1} parent=35 // pred_fallthru
          _
        %s258 = smul.u32 2, %s22
        %s259 = ssub.s32 3, %s258
        %p260 = scmp.lt.s32.totalorder %s259, 2
        %s261 = scalar_select %p260, %s259, 2
        %s262 = smul.u32 8, %s261
        %s263 = smul.u32 %s262, 2
        %p264 = scmp.lt.s32.totalorder %s21, 1
        %s265 = scalar_select %p264, %s21, 1
        %p266 = scmp.lt.s32.totalorder %s258, 2
        %s267 = scalar_select %p266, %s258, 2
        %s268 = smul.addr %s267, 2
        %s269 = smul.addr %s265, 6
        %s270 = sadd.s32 %s268, %s269
        %s271 = smul.addr %s270, 8
        %s272 = scalar_lea.vmem %s0, %s271
        %p273 = pneg %p52
        %p274 = pneg %p49
        %s275 = sadd.s32 %s22, 1
        %s276 = smul.u32 %s275, 2
        %p277 = scmp.lt.s32.totalorder %s21, 1
        %s278 = scalar_select %p277, %s21, 1
        %p279 = scmp.lt.s32.totalorder %s276, 2
        %s280 = scalar_select %p279, %s276, 2
        %s281 = smul.addr %s280, 2
        %s282 = smul.addr %s278, 6
        %s283 = sadd.s32 %s281, %s282
        %s284 = smul.addr %s283, 8
        %s285 = scalar_lea.vmem %s1, %s284
        %p286 = pneg %p84
        %p287 = pneg %p81
        %p288 = pneg %p105
        %p289 = pneg %p102
        %p290 = pneg %p126
        %p291 = pneg %p123
        %p292 = pneg %p154
        %p293 = pneg %p151
        %s294 = smul.u32 2, %s22
        %p295 = scmp.lt.s32.totalorder %s21, 1
        %s296 = scalar_select %p295, %s21, 1
        %p297 = scmp.lt.s32.totalorder %s294, 1
        %s298 = scalar_select %p297, %s294, 1
        %s299 = smul.addr %s296, 2
        %s300 = sadd.s32 %s298, %s299
        %s301 = smul.addr %s300, 8
        %s302 = scalar_lea.vmem %s4, %s301
        %s303 = smul.u32 2, %s22
        %s304 = ssub.s32 3, %s303
        %p305 = scmp.lt.s32.totalorder %s304, 2
        %s306 = scalar_select %p305, %s304, 2
        %s307 = smul.u32 8, %s306
        %s308 = smul.u32 %s307, 2
        %p309 = scmp.lt.s32.totalorder %s21, 1
        %s310 = scalar_select %p309, %s21, 1
        %p311 = scmp.lt.s32.totalorder %s303, 2
        %s312 = scalar_select %p311, %s303, 2
        %s313 = smul.addr %s312, 2
        %s314 = smul.addr %s310, 6
        %s315 = sadd.s32 %s313, %s314
        %s316 = smul.addr %s315, 8
        %s317 = scalar_lea.vmem %s0, %s316
        %s318 = smul.u32 2, %s22
        %s319 = ssub.s32 3, %s318
        %p320 = scmp.lt.s32.totalorder %s319, 2
        %s321 = scalar_select %p320, %s319, 2
        %s322 = smul.u32 8, %s321
        %s323 = smul.u32 %s322, 2
        %s324 = sadd.s32 %s22, 1
        %s325 = smul.u32 %s324, 2
        %p326 = scmp.lt.s32.totalorder %s21, 1
        %s327 = scalar_select %p326, %s21, 1
        %p328 = scmp.lt.s32.totalorder %s325, 2
        %s329 = scalar_select %p328, %s325, 2
        %s330 = smul.addr %s329, 2
        %s331 = smul.addr %s327, 6
        %s332 = sadd.s32 %s330, %s331
        %s333 = smul.addr %s332, 8
        %s334 = scalar_lea.vmem %s1, %s333
        %s335 = sadd.s32 %s22, 1
        %s336 = smul.u32 %s335, 2
        %s337 = smul.u32 2, %s22
        %p338 = scmp.lt.s32.totalorder %s21, 1
        %s339 = scalar_select %p338, %s21, 1
        %p340 = scmp.lt.s32.totalorder %s337, 1
        %s341 = scalar_select %p340, %s337, 1
        %s342 = smul.addr %s339, 2
        %s343 = sadd.s32 %s341, %s342
        %s344 = smul.addr %s343, 8
        %s345 = scalar_lea.vmem %s4, %s344
        %s346 = smul.u32 2, %s22
        %v347 = vld [vmem:[%s317] sm:$0xff]
        %v348 = vld [vmem:[%s317 + $0x8] sm:$0xff]
        %v349 = vld [vmem:[%s317 + $0x10] sm:$0xff]
        %v350 = vld [vmem:[%s317 + $0x18] sm:$0xff]
        %v351 = vld [vmem:[%s334] sm:$0xff]
        %v352 = vld [vmem:[%s334 + $0x8] sm:$0xff]
        %vm359 = vcmask 1046528
        %v360 = vrot.slane %v347, 1
        %v361 = vrot.slane %v349, 1
        %v362 = vsel %vm359, %v360, %v361
        %v363 = vrot.slane %v348, 1
        %v364 = vrot.slane %v350, 1
        %v365 = vsel %vm359, %v363, %v364
        %v366 = vrot.slane %v351, 1
        %v367 = vsel %vm359, %v361, %v366
        %v368 = vrot.slane %v352, 1
        %v369 = vsel %vm359, %v364, %v368
        %vm374 = vcmask 1045504
        %v375 = vrot.slane %v347, 2
        %v376 = vrot.slane %v349, 2
        %v377 = vsel %vm374, %v375, %v376
        %v378 = vrot.slane %v348, 2
        %v379 = vrot.slane %v350, 2
        %v380 = vsel %vm374, %v378, %v379
        %v381 = vrot.slane %v351, 2
        %v382 = vsel %vm374, %v376, %v381
        %v383 = vrot.slane %v352, 2
        %v384 = vsel %vm374, %v379, %v383
        %vm389 = vcmask 1044480
        %v390 = vrot.slane %v347, 3
        %v391 = vrot.slane %v349, 3
        %v392 = vsel %vm389, %v390, %v391
        %v393 = vrot.slane %v348, 3
        %v394 = vrot.slane %v350, 3
        %v395 = vsel %vm389, %v393, %v394
        %v396 = vrot.slane %v351, 3
        %v397 = vsel %vm389, %v391, %v396
        %v398 = vrot.slane %v352, 3
        %v399 = vsel %vm389, %v394, %v398
        %v404 = vpack.c.bf16 %v349, %v347
        %v405 = vpack.c.bf16 %v350, %v348
        %v406 = vpack.c.bf16 %v367, %v362
        %v407 = vpack.c.bf16 %v369, %v365
        %v408 = vpack.c.bf16 %v382, %v377
        %v409 = vpack.c.bf16 %v384, %v380
        %v410 = vpack.c.bf16 %v397, %v392
        %v411 = vpack.c.bf16 %v399, %v395
        %v412 = vld [vmem:[#allocation2] sm:$0xff]
        %v413 = vld [vmem:[#allocation2 + $0x8] sm:$0xff]
        %v414 = vld [vmem:[#allocation2 + $0x10] sm:$0xff]
        %v415 = vld [vmem:[#allocation2 + $0x18] sm:$0xff]
        %v416 = vld [vmem:[#allocation2 + $0x20] sm:$0xff]
        %v417 = vld [vmem:[#allocation2 + $0x28] sm:$0xff]
        %v418 = vld [vmem:[#allocation2 + $0x30] sm:$0xff]
        %v419 = vld [vmem:[#allocation2 + $0x38] sm:$0xff]
        %v420 = vld [vmem:[#allocation2 + $0x40] sm:$0xff]
        %v421 = vld [vmem:[#allocation2 + $0x48] sm:$0xff]
        %v422 = vld [vmem:[#allocation2 + $0x50] sm:$0xff]
        %v423 = vld [vmem:[#allocation2 + $0x58] sm:$0xff]
        %v424 = vld [vmem:[#allocation2 + $0x60] sm:$0xff]
        %v425 = vld [vmem:[#allocation2 + $0x68] sm:$0xff]
        %v426 = vld [vmem:[#allocation2 + $0x70] sm:$0xff]
        %v427 = vld [vmem:[#allocation2 + $0x78] sm:$0xff]
        %v428 = vld [vmem:[#allocation2 + $0x80] sm:$0xff]
        %v429 = vld [vmem:[#allocation2 + $0x88] sm:$0xff]
        %v430 = vld [vmem:[#allocation2 + $0x90] sm:$0xff]
        %v431 = vld [vmem:[#allocation2 + $0x98] sm:$0xff]
        %v432 = vld [vmem:[#allocation2 + $0xa0] sm:$0xff]
        %v433 = vld [vmem:[#allocation2 + $0xa8] sm:$0xff]
        %v434 = vld [vmem:[#allocation2 + $0xb0] sm:$0xff]
        %v435 = vld [vmem:[#allocation2 + $0xb8] sm:$0xff]
        %v436 = vld [vmem:[#allocation2 + $0xc0] sm:$0xff]
        %v437 = vld [vmem:[#allocation2 + $0xc8] sm:$0xff]
        %v438 = vld [vmem:[#allocation2 + $0xd0] sm:$0xff]
        %v439 = vld [vmem:[#allocation2 + $0xd8] sm:$0xff]
        %v440 = vld [vmem:[#allocation2 + $0xe0] sm:$0xff]
        %v441 = vld [vmem:[#allocation2 + $0xe8] sm:$0xff]
        %v442 = vld [vmem:[#allocation2 + $0xf0] sm:$0xff]
        %v443 = vld [vmem:[#allocation2 + $0xf8] sm:$0xff]
        %v444 = vld [vmem:[#allocation2 + $0x100] sm:$0xff]
        %v445 = vld [vmem:[#allocation2 + $0x108] sm:$0xff]
        %v446 = vld [vmem:[#allocation2 + $0x110] sm:$0xff]
        %v447 = vld [vmem:[#allocation2 + $0x118] sm:$0xff]
        %v448 = vld [vmem:[#allocation2 + $0x120] sm:$0xff]
        %v449 = vld [vmem:[#allocation2 + $0x128] sm:$0xff]
        %v450 = vld [vmem:[#allocation2 + $0x130] sm:$0xff]
        %v451 = vld [vmem:[#allocation2 + $0x138] sm:$0xff]
        %v452 = vld [vmem:[#allocation2 + $0x140] sm:$0xff]
        %v453 = vld [vmem:[#allocation2 + $0x148] sm:$0xff]
        %v454 = vld [vmem:[#allocation2 + $0x150] sm:$0xff]
        %v455 = vld [vmem:[#allocation2 + $0x158] sm:$0xff]
        %v456 = vld [vmem:[#allocation2 + $0x160] sm:$0xff]
        %v457 = vld [vmem:[#allocation2 + $0x168] sm:$0xff]
        %v458 = vld [vmem:[#allocation2 + $0x170] sm:$0xff]
        %v459 = vld [vmem:[#allocation2 + $0x178] sm:$0xff]
        %v460 = vld [vmem:[#allocation2 + $0x180] sm:$0xff]
        %v461 = vld [vmem:[#allocation2 + $0x188] sm:$0xff]
        %v462 = vld [vmem:[#allocation2 + $0x190] sm:$0xff]
        %v463 = vld [vmem:[#allocation2 + $0x198] sm:$0xff]
        %v464 = vld [vmem:[#allocation2 + $0x1a0] sm:$0xff]
        %v465 = vld [vmem:[#allocation2 + $0x1a8] sm:$0xff]
        %v466 = vld [vmem:[#allocation2 + $0x1b0] sm:$0xff]
        %v467 = vld [vmem:[#allocation2 + $0x1b8] sm:$0xff]
        %v468 = vld [vmem:[#allocation2 + $0x1c0] sm:$0xff]
        %v469 = vld [vmem:[#allocation2 + $0x1c8] sm:$0xff]
        %v470 = vld [vmem:[#allocation2 + $0x1d0] sm:$0xff]
        %v471 = vld [vmem:[#allocation2 + $0x1d8] sm:$0xff]
        %v472 = vld [vmem:[#allocation2 + $0x1e0] sm:$0xff]
        %v473 = vld [vmem:[#allocation2 + $0x1e8] sm:$0xff]
        %v474 = vld [vmem:[#allocation2 + $0x1f0] sm:$0xff]
        %v475 = vld [vmem:[#allocation2 + $0x1f8] sm:$0xff]
        %v476 = vld [vmem:[#allocation2 + $0x200] sm:$0xff]
        %v477 = vld [vmem:[#allocation2 + $0x208] sm:$0xff]
        %v478 = vld [vmem:[#allocation2 + $0x210] sm:$0xff]
        %v479 = vld [vmem:[#allocation2 + $0x218] sm:$0xff]
        %v480 = vld [vmem:[#allocation2 + $0x220] sm:$0xff]
        %v481 = vld [vmem:[#allocation2 + $0x228] sm:$0xff]
        %v482 = vld [vmem:[#allocation2 + $0x230] sm:$0xff]
        %v483 = vld [vmem:[#allocation2 + $0x238] sm:$0xff]
        %v484 = vld [vmem:[#allocation2 + $0x240] sm:$0xff]
        %v485 = vld [vmem:[#allocation2 + $0x248] sm:$0xff]
        %v486 = vld [vmem:[#allocation2 + $0x250] sm:$0xff]
        %v487 = vld [vmem:[#allocation2 + $0x258] sm:$0xff]
        %v488 = vld [vmem:[#allocation2 + $0x260] sm:$0xff]
        %v489 = vld [vmem:[#allocation2 + $0x268] sm:$0xff]
        %v490 = vld [vmem:[#allocation2 + $0x270] sm:$0xff]
        %v491 = vld [vmem:[#allocation2 + $0x278] sm:$0xff]
        %v492 = vld [vmem:[#allocation2 + $0x280] sm:$0xff]
        %v493 = vld [vmem:[#allocation2 + $0x288] sm:$0xff]
        %v494 = vld [vmem:[#allocation2 + $0x290] sm:$0xff]
        %v495 = vld [vmem:[#allocation2 + $0x298] sm:$0xff]
        %v496 = vld [vmem:[#allocation2 + $0x2a0] sm:$0xff]
        %v497 = vld [vmem:[#allocation2 + $0x2a8] sm:$0xff]
        %v498 = vld [vmem:[#allocation2 + $0x2b0] sm:$0xff]
        %v499 = vld [vmem:[#allocation2 + $0x2b8] sm:$0xff]
        %v500 = vld [vmem:[#allocation2 + $0x2c0] sm:$0xff]
        %v501 = vld [vmem:[#allocation2 + $0x2c8] sm:$0xff]
        %v502 = vld [vmem:[#allocation2 + $0x2d0] sm:$0xff]
        %v503 = vld [vmem:[#allocation2 + $0x2d8] sm:$0xff]
        %v504 = vld [vmem:[#allocation2 + $0x2e0] sm:$0xff]
        %v505 = vld [vmem:[#allocation2 + $0x2e8] sm:$0xff]
        %v506 = vld [vmem:[#allocation2 + $0x2f0] sm:$0xff]
        %v507 = vld [vmem:[#allocation2 + $0x2f8] sm:$0xff]
        %v508 = vld [vmem:[#allocation2 + $0x300] sm:$0xff]
        %v509 = vld [vmem:[#allocation2 + $0x308] sm:$0xff]
        %v510 = vld [vmem:[#allocation2 + $0x310] sm:$0xff]
        %v511 = vld [vmem:[#allocation2 + $0x318] sm:$0xff]
        %v512 = vld [vmem:[#allocation2 + $0x320] sm:$0xff]
        %v513 = vld [vmem:[#allocation2 + $0x328] sm:$0xff]
        %v514 = vld [vmem:[#allocation2 + $0x330] sm:$0xff]
        %v515 = vld [vmem:[#allocation2 + $0x338] sm:$0xff]
        %v516 = vld [vmem:[#allocation2 + $0x340] sm:$0xff]
        %v517 = vld [vmem:[#allocation2 + $0x348] sm:$0xff]
        %v518 = vld [vmem:[#allocation2 + $0x350] sm:$0xff]
        %v519 = vld [vmem:[#allocation2 + $0x358] sm:$0xff]
        %v520 = vld [vmem:[#allocation2 + $0x360] sm:$0xff]
        %v521 = vld [vmem:[#allocation2 + $0x368] sm:$0xff]
        %v522 = vld [vmem:[#allocation2 + $0x370] sm:$0xff]
        %v523 = vld [vmem:[#allocation2 + $0x378] sm:$0xff]
        %v524 = vld [vmem:[#allocation2 + $0x380] sm:$0xff]
        %v525 = vld [vmem:[#allocation2 + $0x388] sm:$0xff]
        %v526 = vld [vmem:[#allocation2 + $0x390] sm:$0xff]
        %v527 = vld [vmem:[#allocation2 + $0x398] sm:$0xff]
        %v528 = vld [vmem:[#allocation2 + $0x3a0] sm:$0xff]
        %v529 = vld [vmem:[#allocation2 + $0x3a8] sm:$0xff]
        %v530 = vld [vmem:[#allocation2 + $0x3b0] sm:$0xff]
        %v531 = vld [vmem:[#allocation2 + $0x3b8] sm:$0xff]
        %v532 = vld [vmem:[#allocation2 + $0x3c0] sm:$0xff]
        %v533 = vld [vmem:[#allocation2 + $0x3c8] sm:$0xff]
        %v534 = vld [vmem:[#allocation2 + $0x3d0] sm:$0xff]
        %v535 = vld [vmem:[#allocation2 + $0x3d8] sm:$0xff]
        %v536 = vld [vmem:[#allocation2 + $0x3e0] sm:$0xff]
        %v537 = vld [vmem:[#allocation2 + $0x3e8] sm:$0xff]
        %v538 = vld [vmem:[#allocation2 + $0x3f0] sm:$0xff]
        %v539 = vld [vmem:[#allocation2 + $0x3f8] sm:$0xff]
        %v540 = vld [vmem:[#allocation2 + $0x400] sm:$0xff]
        %v541 = vld [vmem:[#allocation2 + $0x408] sm:$0xff]
        %v542 = vld [vmem:[#allocation2 + $0x410] sm:$0xff]
        %v543 = vld [vmem:[#allocation2 + $0x418] sm:$0xff]
        %v544 = vld [vmem:[#allocation2 + $0x420] sm:$0xff]
        %v545 = vld [vmem:[#allocation2 + $0x428] sm:$0xff]
        %v546 = vld [vmem:[#allocation2 + $0x430] sm:$0xff]
        %v547 = vld [vmem:[#allocation2 + $0x438] sm:$0xff]
        %v548 = vld [vmem:[#allocation2 + $0x440] sm:$0xff]
        %v549 = vld [vmem:[#allocation2 + $0x448] sm:$0xff]
        %v550 = vld [vmem:[#allocation2 + $0x450] sm:$0xff]
        %v551 = vld [vmem:[#allocation2 + $0x458] sm:$0xff]
        %v552 = vld [vmem:[#allocation2 + $0x460] sm:$0xff]
        %v553 = vld [vmem:[#allocation2 + $0x468] sm:$0xff]
        %v554 = vld [vmem:[#allocation2 + $0x470] sm:$0xff]
        %v555 = vld [vmem:[#allocation2 + $0x478] sm:$0xff]
        %v556 = vld [vmem:[#allocation2 + $0x480] sm:$0xff]
        %v557 = vld [vmem:[#allocation2 + $0x488] sm:$0xff]
        %v558 = vld [vmem:[#allocation2 + $0x490] sm:$0xff]
        %v559 = vld [vmem:[#allocation2 + $0x498] sm:$0xff]
        %v560 = vld [vmem:[#allocation2 + $0x4a0] sm:$0xff]
        %v561 = vld [vmem:[#allocation2 + $0x4a8] sm:$0xff]
        %v562 = vld [vmem:[#allocation2 + $0x4b0] sm:$0xff]
        %v563 = vld [vmem:[#allocation2 + $0x4b8] sm:$0xff]
        %v564 = vld [vmem:[#allocation2 + $0x4c0] sm:$0xff]
        %v565 = vld [vmem:[#allocation2 + $0x4c8] sm:$0xff]
        %v566 = vld [vmem:[#allocation2 + $0x4d0] sm:$0xff]
        %v567 = vld [vmem:[#allocation2 + $0x4d8] sm:$0xff]
        %v568 = vld [vmem:[#allocation2 + $0x4e0] sm:$0xff]
        %v569 = vld [vmem:[#allocation2 + $0x4e8] sm:$0xff]
        %v570 = vld [vmem:[#allocation2 + $0x4f0] sm:$0xff]
        %v571 = vld [vmem:[#allocation2 + $0x4f8] sm:$0xff]
        %v572 = vld [vmem:[#allocation2 + $0x500] sm:$0xff]
        %v573 = vld [vmem:[#allocation2 + $0x508] sm:$0xff]
        %v574 = vld [vmem:[#allocation2 + $0x510] sm:$0xff]
        %v575 = vld [vmem:[#allocation2 + $0x518] sm:$0xff]
        %v576 = vld [vmem:[#allocation2 + $0x520] sm:$0xff]
        %v577 = vld [vmem:[#allocation2 + $0x528] sm:$0xff]
        %v578 = vld [vmem:[#allocation2 + $0x530] sm:$0xff]
        %v579 = vld [vmem:[#allocation2 + $0x538] sm:$0xff]
        %v580 = vld [vmem:[#allocation2 + $0x540] sm:$0xff]
        %v581 = vld [vmem:[#allocation2 + $0x548] sm:$0xff]
        %v582 = vld [vmem:[#allocation2 + $0x550] sm:$0xff]
        %v583 = vld [vmem:[#allocation2 + $0x558] sm:$0xff]
        %v584 = vld [vmem:[#allocation2 + $0x560] sm:$0xff]
        %v585 = vld [vmem:[#allocation2 + $0x568] sm:$0xff]
        %v586 = vld [vmem:[#allocation2 + $0x570] sm:$0xff]
        %v587 = vld [vmem:[#allocation2 + $0x578] sm:$0xff]
        %v588 = vld [vmem:[#allocation2 + $0x580] sm:$0xff]
        %v589 = vld [vmem:[#allocation2 + $0x588] sm:$0xff]
        %v590 = vld [vmem:[#allocation2 + $0x590] sm:$0xff]
        %v591 = vld [vmem:[#allocation2 + $0x598] sm:$0xff]
        %v592 = vld [vmem:[#allocation2 + $0x5a0] sm:$0xff]
        %v593 = vld [vmem:[#allocation2 + $0x5a8] sm:$0xff]
        %v594 = vld [vmem:[#allocation2 + $0x5b0] sm:$0xff]
        %v595 = vld [vmem:[#allocation2 + $0x5b8] sm:$0xff]
        %v596 = vld [vmem:[#allocation2 + $0x5c0] sm:$0xff]
        %v597 = vld [vmem:[#allocation2 + $0x5c8] sm:$0xff]
        %v598 = vld [vmem:[#allocation2 + $0x5d0] sm:$0xff]
        %v599 = vld [vmem:[#allocation2 + $0x5d8] sm:$0xff]
        %v600 = vld [vmem:[#allocation2 + $0x5e0] sm:$0xff]
        %v601 = vld [vmem:[#allocation2 + $0x5e8] sm:$0xff]
        %v602 = vld [vmem:[#allocation2 + $0x5f0] sm:$0xff]
        %v603 = vld [vmem:[#allocation2 + $0x5f8] sm:$0xff]
        %v604 = vld [vmem:[#allocation2 + $0x600] sm:$0xff]
        %v605 = vld [vmem:[#allocation2 + $0x608] sm:$0xff]
        %v606 = vld [vmem:[#allocation2 + $0x610] sm:$0xff]
        %v607 = vld [vmem:[#allocation2 + $0x618] sm:$0xff]
        %v608 = vld [vmem:[#allocation2 + $0x620] sm:$0xff]
        %v609 = vld [vmem:[#allocation2 + $0x628] sm:$0xff]
        %v610 = vld [vmem:[#allocation2 + $0x630] sm:$0xff]
        %v611 = vld [vmem:[#allocation2 + $0x638] sm:$0xff]
        %v612 = vld [vmem:[#allocation2 + $0x640] sm:$0xff]
        %v613 = vld [vmem:[#allocation2 + $0x648] sm:$0xff]
        %v614 = vld [vmem:[#allocation2 + $0x650] sm:$0xff]
        %v615 = vld [vmem:[#allocation2 + $0x658] sm:$0xff]
        %v616 = vld [vmem:[#allocation2 + $0x660] sm:$0xff]
        %v617 = vld [vmem:[#allocation2 + $0x668] sm:$0xff]
        %v618 = vld [vmem:[#allocation2 + $0x670] sm:$0xff]
        %v619 = vld [vmem:[#allocation2 + $0x678] sm:$0xff]
        %v620 = vld [vmem:[#allocation2 + $0x680] sm:$0xff]
        %v621 = vld [vmem:[#allocation2 + $0x688] sm:$0xff]
        %v622 = vld [vmem:[#allocation2 + $0x690] sm:$0xff]
        %v623 = vld [vmem:[#allocation2 + $0x698] sm:$0xff]
        %v624 = vld [vmem:[#allocation2 + $0x6a0] sm:$0xff]
        %v625 = vld [vmem:[#allocation2 + $0x6a8] sm:$0xff]
        %v626 = vld [vmem:[#allocation2 + $0x6b0] sm:$0xff]
        %v627 = vld [vmem:[#allocation2 + $0x6b8] sm:$0xff]
        %v628 = vld [vmem:[#allocation2 + $0x6c0] sm:$0xff]
        %v629 = vld [vmem:[#allocation2 + $0x6c8] sm:$0xff]
        %v630 = vld [vmem:[#allocation2 + $0x6d0] sm:$0xff]
        %v631 = vld [vmem:[#allocation2 + $0x6d8] sm:$0xff]
        %v632 = vld [vmem:[#allocation2 + $0x6e0] sm:$0xff]
        %v633 = vld [vmem:[#allocation2 + $0x6e8] sm:$0xff]
        %v634 = vld [vmem:[#allocation2 + $0x6f0] sm:$0xff]
        %v635 = vld [vmem:[#allocation2 + $0x6f8] sm:$0xff]
        %v636 = vld [vmem:[#allocation2 + $0x700] sm:$0xff]
        %v637 = vld [vmem:[#allocation2 + $0x708] sm:$0xff]
        %v638 = vld [vmem:[#allocation2 + $0x710] sm:$0xff]
        %v639 = vld [vmem:[#allocation2 + $0x718] sm:$0xff]
        %v640 = vld [vmem:[#allocation2 + $0x720] sm:$0xff]
        %v641 = vld [vmem:[#allocation2 + $0x728] sm:$0xff]
        %v642 = vld [vmem:[#allocation2 + $0x730] sm:$0xff]
        %v643 = vld [vmem:[#allocation2 + $0x738] sm:$0xff]
        %v644 = vld [vmem:[#allocation2 + $0x740] sm:$0xff]
        %v645 = vld [vmem:[#allocation2 + $0x748] sm:$0xff]
        %v646 = vld [vmem:[#allocation2 + $0x750] sm:$0xff]
        %v647 = vld [vmem:[#allocation2 + $0x758] sm:$0xff]
        %v648 = vld [vmem:[#allocation2 + $0x760] sm:$0xff]
        %v649 = vld [vmem:[#allocation2 + $0x768] sm:$0xff]
        %v650 = vld [vmem:[#allocation2 + $0x770] sm:$0xff]
        %v651 = vld [vmem:[#allocation2 + $0x778] sm:$0xff]
        %v652 = vld [vmem:[#allocation2 + $0x780] sm:$0xff]
        %v653 = vld [vmem:[#allocation2 + $0x788] sm:$0xff]
        %v654 = vld [vmem:[#allocation2 + $0x790] sm:$0xff]
        %v655 = vld [vmem:[#allocation2 + $0x798] sm:$0xff]
        %v656 = vld [vmem:[#allocation2 + $0x7a0] sm:$0xff]
        %v657 = vld [vmem:[#allocation2 + $0x7a8] sm:$0xff]
        %v658 = vld [vmem:[#allocation2 + $0x7b0] sm:$0xff]
        %v659 = vld [vmem:[#allocation2 + $0x7b8] sm:$0xff]
        %v660 = vld [vmem:[#allocation2 + $0x7c0] sm:$0xff]
        %v661 = vld [vmem:[#allocation2 + $0x7c8] sm:$0xff]
        %v662 = vld [vmem:[#allocation2 + $0x7d0] sm:$0xff]
        %v663 = vld [vmem:[#allocation2 + $0x7d8] sm:$0xff]
        %v664 = vld [vmem:[#allocation2 + $0x7e0] sm:$0xff]
        %v665 = vld [vmem:[#allocation2 + $0x7e8] sm:$0xff]
        %v666 = vld [vmem:[#allocation2 + $0x7f0] sm:$0xff]
        %v667 = vld [vmem:[#allocation2 + $0x7f8] sm:$0xff]
        %v668 = vld [vmem:[#allocation2 + $0x800] sm:$0xff]
        %v669 = vld [vmem:[#allocation2 + $0x808] sm:$0xff]
        %v670 = vld [vmem:[#allocation2 + $0x810] sm:$0xff]
        %v671 = vld [vmem:[#allocation2 + $0x818] sm:$0xff]
        %v672 = vld [vmem:[#allocation2 + $0x820] sm:$0xff]
        %v673 = vld [vmem:[#allocation2 + $0x828] sm:$0xff]
        %v674 = vld [vmem:[#allocation2 + $0x830] sm:$0xff]
        %v675 = vld [vmem:[#allocation2 + $0x838] sm:$0xff]
        %v676 = vld [vmem:[#allocation2 + $0x840] sm:$0xff]
        %v677 = vld [vmem:[#allocation2 + $0x848] sm:$0xff]
        %v678 = vld [vmem:[#allocation2 + $0x850] sm:$0xff]
        %v679 = vld [vmem:[#allocation2 + $0x858] sm:$0xff]
        %v680 = vld [vmem:[#allocation2 + $0x860] sm:$0xff]
        %v681 = vld [vmem:[#allocation2 + $0x868] sm:$0xff]
        %v682 = vld [vmem:[#allocation2 + $0x870] sm:$0xff]
        %v683 = vld [vmem:[#allocation2 + $0x878] sm:$0xff]
        %v684 = vld [vmem:[#allocation2 + $0x880] sm:$0xff]
        %v685 = vld [vmem:[#allocation2 + $0x888] sm:$0xff]
        %v686 = vld [vmem:[#allocation2 + $0x890] sm:$0xff]
        %v687 = vld [vmem:[#allocation2 + $0x898] sm:$0xff]
        %v688 = vld [vmem:[#allocation2 + $0x8a0] sm:$0xff]
        %v689 = vld [vmem:[#allocation2 + $0x8a8] sm:$0xff]
        %v690 = vld [vmem:[#allocation2 + $0x8b0] sm:$0xff]
        %v691 = vld [vmem:[#allocation2 + $0x8b8] sm:$0xff]
        %v692 = vld [vmem:[#allocation2 + $0x8c0] sm:$0xff]
        %v693 = vld [vmem:[#allocation2 + $0x8c8] sm:$0xff]
        %v694 = vld [vmem:[#allocation2 + $0x8d0] sm:$0xff]
        %v695 = vld [vmem:[#allocation2 + $0x8d8] sm:$0xff]
        %v696 = vld [vmem:[#allocation2 + $0x8e0] sm:$0xff]
        %v697 = vld [vmem:[#allocation2 + $0x8e8] sm:$0xff]
        %v698 = vld [vmem:[#allocation2 + $0x8f0] sm:$0xff]
        %v699 = vld [vmem:[#allocation2 + $0x8f8] sm:$0xff]
        %v700 = vld [vmem:[#allocation2 + $0x900] sm:$0xff]
        %v701 = vld [vmem:[#allocation2 + $0x908] sm:$0xff]
        %v702 = vld [vmem:[#allocation2 + $0x910] sm:$0xff]
        %v703 = vld [vmem:[#allocation2 + $0x918] sm:$0xff]
        %v704 = vld [vmem:[#allocation2 + $0x920] sm:$0xff]
        %v705 = vld [vmem:[#allocation2 + $0x928] sm:$0xff]
        %v706 = vld [vmem:[#allocation2 + $0x930] sm:$0xff]
        %v707 = vld [vmem:[#allocation2 + $0x938] sm:$0xff]
        %v708 = vld [vmem:[#allocation2 + $0x940] sm:$0xff]
        %v709 = vld [vmem:[#allocation2 + $0x948] sm:$0xff]
        %v710 = vld [vmem:[#allocation2 + $0x950] sm:$0xff]
        %v711 = vld [vmem:[#allocation2 + $0x958] sm:$0xff]
        %v712 = vld [vmem:[#allocation2 + $0x960] sm:$0xff]
        %v713 = vld [vmem:[#allocation2 + $0x968] sm:$0xff]
        %v714 = vld [vmem:[#allocation2 + $0x970] sm:$0xff]
        %v715 = vld [vmem:[#allocation2 + $0x978] sm:$0xff]
        %v716 = vld [vmem:[#allocation2 + $0x980] sm:$0xff]
        %v717 = vld [vmem:[#allocation2 + $0x988] sm:$0xff]
        %v718 = vld [vmem:[#allocation2 + $0x990] sm:$0xff]
        %v719 = vld [vmem:[#allocation2 + $0x998] sm:$0xff]
        %v720 = vld [vmem:[#allocation2 + $0x9a0] sm:$0xff]
        %v721 = vld [vmem:[#allocation2 + $0x9a8] sm:$0xff]
        %v722 = vld [vmem:[#allocation2 + $0x9b0] sm:$0xff]
        %v723 = vld [vmem:[#allocation2 + $0x9b8] sm:$0xff]
        %v724 = vld [vmem:[#allocation2 + $0x9c0] sm:$0xff]
        %v725 = vld [vmem:[#allocation2 + $0x9c8] sm:$0xff]
        %v726 = vld [vmem:[#allocation2 + $0x9d0] sm:$0xff]
        %v727 = vld [vmem:[#allocation2 + $0x9d8] sm:$0xff]
        %v728 = vld [vmem:[#allocation2 + $0x9e0] sm:$0xff]
        %v729 = vld [vmem:[#allocation2 + $0x9e8] sm:$0xff]
        %v730 = vld [vmem:[#allocation2 + $0x9f0] sm:$0xff]
        %v731 = vld [vmem:[#allocation2 + $0x9f8] sm:$0xff]
        %v732 = vld [vmem:[#allocation2 + $0xa00] sm:$0xff]
        %v733 = vld [vmem:[#allocation2 + $0xa08] sm:$0xff]
        %v734 = vld [vmem:[#allocation2 + $0xa10] sm:$0xff]
        %v735 = vld [vmem:[#allocation2 + $0xa18] sm:$0xff]
        %v736 = vld [vmem:[#allocation2 + $0xa20] sm:$0xff]
        %v737 = vld [vmem:[#allocation2 + $0xa28] sm:$0xff]
        %v738 = vld [vmem:[#allocation2 + $0xa30] sm:$0xff]
        %v739 = vld [vmem:[#allocation2 + $0xa38] sm:$0xff]
        %v740 = vld [vmem:[#allocation2 + $0xa40] sm:$0xff]
        %v741 = vld [vmem:[#allocation2 + $0xa48] sm:$0xff]
        %v742 = vld [vmem:[#allocation2 + $0xa50] sm:$0xff]
        %v743 = vld [vmem:[#allocation2 + $0xa58] sm:$0xff]
        %v744 = vld [vmem:[#allocation2 + $0xa60] sm:$0xff]
        %v745 = vld [vmem:[#allocation2 + $0xa68] sm:$0xff]
        %v746 = vld [vmem:[#allocation2 + $0xa70] sm:$0xff]
        %v747 = vld [vmem:[#allocation2 + $0xa78] sm:$0xff]
        %v748 = vld [vmem:[#allocation2 + $0xa80] sm:$0xff]
        %v749 = vld [vmem:[#allocation2 + $0xa88] sm:$0xff]
        %v750 = vld [vmem:[#allocation2 + $0xa90] sm:$0xff]
        %v751 = vld [vmem:[#allocation2 + $0xa98] sm:$0xff]
        %v752 = vld [vmem:[#allocation2 + $0xaa0] sm:$0xff]
        %v753 = vld [vmem:[#allocation2 + $0xaa8] sm:$0xff]
        %v754 = vld [vmem:[#allocation2 + $0xab0] sm:$0xff]
        %v755 = vld [vmem:[#allocation2 + $0xab8] sm:$0xff]
        %v756 = vld [vmem:[#allocation2 + $0xac0] sm:$0xff]
        %v757 = vld [vmem:[#allocation2 + $0xac8] sm:$0xff]
        %v758 = vld [vmem:[#allocation2 + $0xad0] sm:$0xff]
        %v759 = vld [vmem:[#allocation2 + $0xad8] sm:$0xff]
        %v760 = vld [vmem:[#allocation2 + $0xae0] sm:$0xff]
        %v761 = vld [vmem:[#allocation2 + $0xae8] sm:$0xff]
        %v762 = vld [vmem:[#allocation2 + $0xaf0] sm:$0xff]
        %v763 = vld [vmem:[#allocation2 + $0xaf8] sm:$0xff]
        %v764 = vld [vmem:[#allocation2 + $0xb00] sm:$0xff]
        %v765 = vld [vmem:[#allocation2 + $0xb08] sm:$0xff]
        %v766 = vld [vmem:[#allocation2 + $0xb10] sm:$0xff]
        %v767 = vld [vmem:[#allocation2 + $0xb18] sm:$0xff]
        %v768 = vld [vmem:[#allocation2 + $0xb20] sm:$0xff]
        %v769 = vld [vmem:[#allocation2 + $0xb28] sm:$0xff]
        %v770 = vld [vmem:[#allocation2 + $0xb30] sm:$0xff]
        %v771 = vld [vmem:[#allocation2 + $0xb38] sm:$0xff]
        %v772 = vld [vmem:[#allocation2 + $0xb40] sm:$0xff]
        %v773 = vld [vmem:[#allocation2 + $0xb48] sm:$0xff]
        %v774 = vld [vmem:[#allocation2 + $0xb50] sm:$0xff]
        %v775 = vld [vmem:[#allocation2 + $0xb58] sm:$0xff]
        %v776 = vld [vmem:[#allocation2 + $0xb60] sm:$0xff]
        %v777 = vld [vmem:[#allocation2 + $0xb68] sm:$0xff]
        %v778 = vld [vmem:[#allocation2 + $0xb70] sm:$0xff]
        %v779 = vld [vmem:[#allocation2 + $0xb78] sm:$0xff]
        %v780 = vld [vmem:[#allocation2 + $0xb80] sm:$0xff]
        %v781 = vld [vmem:[#allocation2 + $0xb88] sm:$0xff]
        %v782 = vld [vmem:[#allocation2 + $0xb90] sm:$0xff]
        %v783 = vld [vmem:[#allocation2 + $0xb98] sm:$0xff]
        %v784 = vld [vmem:[#allocation2 + $0xba0] sm:$0xff]
        %v785 = vld [vmem:[#allocation2 + $0xba8] sm:$0xff]
        %v786 = vld [vmem:[#allocation2 + $0xbb0] sm:$0xff]
        %v787 = vld [vmem:[#allocation2 + $0xbb8] sm:$0xff]
        %v788 = vld [vmem:[#allocation2 + $0xbc0] sm:$0xff]
        %v789 = vld [vmem:[#allocation2 + $0xbc8] sm:$0xff]
        %v790 = vld [vmem:[#allocation2 + $0xbd0] sm:$0xff]
        %v791 = vld [vmem:[#allocation2 + $0xbd8] sm:$0xff]
        %v792 = vld [vmem:[#allocation2 + $0xbe0] sm:$0xff]
        %v793 = vld [vmem:[#allocation2 + $0xbe8] sm:$0xff]
        %v794 = vld [vmem:[#allocation2 + $0xbf0] sm:$0xff]
        %v795 = vld [vmem:[#allocation2 + $0xbf8] sm:$0xff]
        %v1180 = vunpack.c.l.b16 %v412
        %v1181 = vunpack.c.h.b16 %v412
        %v1182 = vunpack.c.l.b16 %v413
        %v1183 = vunpack.c.h.b16 %v413
        %v1184 = vunpack.c.l.b16 %v414
        %v1185 = vunpack.c.h.b16 %v414
        %v1186 = vunpack.c.l.b16 %v415
        %v1187 = vunpack.c.h.b16 %v415
        %v1188 = vunpack.c.l.b16 %v416
        %v1189 = vunpack.c.h.b16 %v416
        %v1190 = vunpack.c.l.b16 %v417
        %v1191 = vunpack.c.h.b16 %v417
        %v1192 = vunpack.c.l.b16 %v418
        %v1193 = vunpack.c.h.b16 %v418
        %v1194 = vunpack.c.l.b16 %v419
        %v1195 = vunpack.c.h.b16 %v419
        %v1196 = vunpack.c.l.b16 %v420
        %v1197 = vunpack.c.h.b16 %v420
        %v1198 = vunpack.c.l.b16 %v421
        %v1199 = vunpack.c.h.b16 %v421
        %v1200 = vunpack.c.l.b16 %v422
        %v1201 = vunpack.c.h.b16 %v422
        %v1202 = vunpack.c.l.b16 %v423
        %v1203 = vunpack.c.h.b16 %v423
        %v1204 = vunpack.c.l.b16 %v424
        %v1205 = vunpack.c.h.b16 %v424
        %v1206 = vunpack.c.l.b16 %v425
        %v1207 = vunpack.c.h.b16 %v425
        %v1208 = vunpack.c.l.b16 %v426
        %v1209 = vunpack.c.h.b16 %v426
        %v1210 = vunpack.c.l.b16 %v427
        %v1211 = vunpack.c.h.b16 %v427
        %v1212 = vunpack.c.l.b16 %v428
        %v1213 = vunpack.c.h.b16 %v428
        %v1214 = vunpack.c.l.b16 %v429
        %v1215 = vunpack.c.h.b16 %v429
        %v1216 = vunpack.c.l.b16 %v430
        %v1217 = vunpack.c.h.b16 %v430
        %v1218 = vunpack.c.l.b16 %v431
        %v1219 = vunpack.c.h.b16 %v431
        %v1220 = vunpack.c.l.b16 %v432
        %v1221 = vunpack.c.h.b16 %v432
        %v1222 = vunpack.c.l.b16 %v433
        %v1223 = vunpack.c.h.b16 %v433
        %v1224 = vunpack.c.l.b16 %v434
        %v1225 = vunpack.c.h.b16 %v434
        %v1226 = vunpack.c.l.b16 %v435
        %v1227 = vunpack.c.h.b16 %v435
        %v1228 = vunpack.c.l.b16 %v436
        %v1229 = vunpack.c.h.b16 %v436
        %v1230 = vunpack.c.l.b16 %v437
        %v1231 = vunpack.c.h.b16 %v437
        %v1232 = vunpack.c.l.b16 %v438
        %v1233 = vunpack.c.h.b16 %v438
        %v1234 = vunpack.c.l.b16 %v439
        %v1235 = vunpack.c.h.b16 %v439
        %v1236 = vunpack.c.l.b16 %v440
        %v1237 = vunpack.c.h.b16 %v440
        %v1238 = vunpack.c.l.b16 %v441
        %v1239 = vunpack.c.h.b16 %v441
        %v1240 = vunpack.c.l.b16 %v442
        %v1241 = vunpack.c.h.b16 %v442
        %v1242 = vunpack.c.l.b16 %v443
        %v1243 = vunpack.c.h.b16 %v443
        %v1244 = vunpack.c.l.b16 %v444
        %v1245 = vunpack.c.h.b16 %v444
        %v1246 = vunpack.c.l.b16 %v445
        %v1247 = vunpack.c.h.b16 %v445
        %v1248 = vunpack.c.l.b16 %v446
        %v1249 = vunpack.c.h.b16 %v446
        %v1250 = vunpack.c.l.b16 %v447
        %v1251 = vunpack.c.h.b16 %v447
        %v1252 = vunpack.c.l.b16 %v448
        %v1253 = vunpack.c.h.b16 %v448
        %v1254 = vunpack.c.l.b16 %v449
        %v1255 = vunpack.c.h.b16 %v449
        %v1256 = vunpack.c.l.b16 %v450
        %v1257 = vunpack.c.h.b16 %v450
        %v1258 = vunpack.c.l.b16 %v451
        %v1259 = vunpack.c.h.b16 %v451
        %v1260 = vunpack.c.l.b16 %v452
        %v1261 = vunpack.c.h.b16 %v452
        %v1262 = vunpack.c.l.b16 %v453
        %v1263 = vunpack.c.h.b16 %v453
        %v1264 = vunpack.c.l.b16 %v454
        %v1265 = vunpack.c.h.b16 %v454
        %v1266 = vunpack.c.l.b16 %v455
        %v1267 = vunpack.c.h.b16 %v455
        %v1268 = vunpack.c.l.b16 %v456
        %v1269 = vunpack.c.h.b16 %v456
        %v1270 = vunpack.c.l.b16 %v457
        %v1271 = vunpack.c.h.b16 %v457
        %v1272 = vunpack.c.l.b16 %v458
        %v1273 = vunpack.c.h.b16 %v458
        %v1274 = vunpack.c.l.b16 %v459
        %v1275 = vunpack.c.h.b16 %v459
        %v1276 = vunpack.c.l.b16 %v460
        %v1277 = vunpack.c.h.b16 %v460
        %v1278 = vunpack.c.l.b16 %v461
        %v1279 = vunpack.c.h.b16 %v461
        %v1280 = vunpack.c.l.b16 %v462
        %v1281 = vunpack.c.h.b16 %v462
        %v1282 = vunpack.c.l.b16 %v463
        %v1283 = vunpack.c.h.b16 %v463
        %v1284 = vunpack.c.l.b16 %v464
        %v1285 = vunpack.c.h.b16 %v464
        %v1286 = vunpack.c.l.b16 %v465
        %v1287 = vunpack.c.h.b16 %v465
        %v1288 = vunpack.c.l.b16 %v466
        %v1289 = vunpack.c.h.b16 %v466
        %v1290 = vunpack.c.l.b16 %v467
        %v1291 = vunpack.c.h.b16 %v467
        %v1292 = vunpack.c.l.b16 %v468
        %v1293 = vunpack.c.h.b16 %v468
        %v1294 = vunpack.c.l.b16 %v469
        %v1295 = vunpack.c.h.b16 %v469
        %v1296 = vunpack.c.l.b16 %v470
        %v1297 = vunpack.c.h.b16 %v470
        %v1298 = vunpack.c.l.b16 %v471
        %v1299 = vunpack.c.h.b16 %v471
        %v1300 = vunpack.c.l.b16 %v472
        %v1301 = vunpack.c.h.b16 %v472
        %v1302 = vunpack.c.l.b16 %v473
        %v1303 = vunpack.c.h.b16 %v473
        %v1304 = vunpack.c.l.b16 %v474
        %v1305 = vunpack.c.h.b16 %v474
        %v1306 = vunpack.c.l.b16 %v475
        %v1307 = vunpack.c.h.b16 %v475
        %v1308 = vunpack.c.l.b16 %v476
        %v1309 = vunpack.c.h.b16 %v476
        %v1310 = vunpack.c.l.b16 %v477
        %v1311 = vunpack.c.h.b16 %v477
        %v1312 = vunpack.c.l.b16 %v478
        %v1313 = vunpack.c.h.b16 %v478
        %v1314 = vunpack.c.l.b16 %v479
        %v1315 = vunpack.c.h.b16 %v479
        %v1316 = vunpack.c.l.b16 %v480
        %v1317 = vunpack.c.h.b16 %v480
        %v1318 = vunpack.c.l.b16 %v481
        %v1319 = vunpack.c.h.b16 %v481
        %v1320 = vunpack.c.l.b16 %v482
        %v1321 = vunpack.c.h.b16 %v482
        %v1322 = vunpack.c.l.b16 %v483
        %v1323 = vunpack.c.h.b16 %v483
        %v1324 = vunpack.c.l.b16 %v484
        %v1325 = vunpack.c.h.b16 %v484
        %v1326 = vunpack.c.l.b16 %v485
        %v1327 = vunpack.c.h.b16 %v485
        %v1328 = vunpack.c.l.b16 %v486
        %v1329 = vunpack.c.h.b16 %v486
        %v1330 = vunpack.c.l.b16 %v487
        %v1331 = vunpack.c.h.b16 %v487
        %v1332 = vunpack.c.l.b16 %v488
        %v1333 = vunpack.c.h.b16 %v488
        %v1334 = vunpack.c.l.b16 %v489
        %v1335 = vunpack.c.h.b16 %v489
        %v1336 = vunpack.c.l.b16 %v490
        %v1337 = vunpack.c.h.b16 %v490
        %v1338 = vunpack.c.l.b16 %v491
        %v1339 = vunpack.c.h.b16 %v491
        %v1340 = vunpack.c.l.b16 %v492
        %v1341 = vunpack.c.h.b16 %v492
        %v1342 = vunpack.c.l.b16 %v493
        %v1343 = vunpack.c.h.b16 %v493
        %v1344 = vunpack.c.l.b16 %v494
        %v1345 = vunpack.c.h.b16 %v494
        %v1346 = vunpack.c.l.b16 %v495
        %v1347 = vunpack.c.h.b16 %v495
        %v1348 = vunpack.c.l.b16 %v496
        %v1349 = vunpack.c.h.b16 %v496
        %v1350 = vunpack.c.l.b16 %v497
        %v1351 = vunpack.c.h.b16 %v497
        %v1352 = vunpack.c.l.b16 %v498
        %v1353 = vunpack.c.h.b16 %v498
        %v1354 = vunpack.c.l.b16 %v499
        %v1355 = vunpack.c.h.b16 %v499
        %v1356 = vunpack.c.l.b16 %v500
        %v1357 = vunpack.c.h.b16 %v500
        %v1358 = vunpack.c.l.b16 %v501
        %v1359 = vunpack.c.h.b16 %v501
        %v1360 = vunpack.c.l.b16 %v502
        %v1361 = vunpack.c.h.b16 %v502
        %v1362 = vunpack.c.l.b16 %v503
        %v1363 = vunpack.c.h.b16 %v503
        %v1364 = vunpack.c.l.b16 %v504
        %v1365 = vunpack.c.h.b16 %v504
        %v1366 = vunpack.c.l.b16 %v505
        %v1367 = vunpack.c.h.b16 %v505
        %v1368 = vunpack.c.l.b16 %v506
        %v1369 = vunpack.c.h.b16 %v506
        %v1370 = vunpack.c.l.b16 %v507
        %v1371 = vunpack.c.h.b16 %v507
        %v1372 = vunpack.c.l.b16 %v508
        %v1373 = vunpack.c.h.b16 %v508
        %v1374 = vunpack.c.l.b16 %v509
        %v1375 = vunpack.c.h.b16 %v509
        %v1376 = vunpack.c.l.b16 %v510
        %v1377 = vunpack.c.h.b16 %v510
        %v1378 = vunpack.c.l.b16 %v511
        %v1379 = vunpack.c.h.b16 %v511
        %v1380 = vunpack.c.l.b16 %v512
        %v1381 = vunpack.c.h.b16 %v512
        %v1382 = vunpack.c.l.b16 %v513
        %v1383 = vunpack.c.h.b16 %v513
        %v1384 = vunpack.c.l.b16 %v514
        %v1385 = vunpack.c.h.b16 %v514
        %v1386 = vunpack.c.l.b16 %v515
        %v1387 = vunpack.c.h.b16 %v515
        %v1388 = vunpack.c.l.b16 %v516
        %v1389 = vunpack.c.h.b16 %v516
        %v1390 = vunpack.c.l.b16 %v517
        %v1391 = vunpack.c.h.b16 %v517
        %v1392 = vunpack.c.l.b16 %v518
        %v1393 = vunpack.c.h.b16 %v518
        %v1394 = vunpack.c.l.b16 %v519
        %v1395 = vunpack.c.h.b16 %v519
        %v1396 = vunpack.c.l.b16 %v520
        %v1397 = vunpack.c.h.b16 %v520
        %v1398 = vunpack.c.l.b16 %v521
        %v1399 = vunpack.c.h.b16 %v521
        %v1400 = vunpack.c.l.b16 %v522
        %v1401 = vunpack.c.h.b16 %v522
        %v1402 = vunpack.c.l.b16 %v523
        %v1403 = vunpack.c.h.b16 %v523
        %v1404 = vunpack.c.l.b16 %v524
        %v1405 = vunpack.c.h.b16 %v524
        %v1406 = vunpack.c.l.b16 %v525
        %v1407 = vunpack.c.h.b16 %v525
        %v1408 = vunpack.c.l.b16 %v526
        %v1409 = vunpack.c.h.b16 %v526
        %v1410 = vunpack.c.l.b16 %v527
        %v1411 = vunpack.c.h.b16 %v527
        %v1412 = vunpack.c.l.b16 %v528
        %v1413 = vunpack.c.h.b16 %v528
        %v1414 = vunpack.c.l.b16 %v529
        %v1415 = vunpack.c.h.b16 %v529
        %v1416 = vunpack.c.l.b16 %v530
        %v1417 = vunpack.c.h.b16 %v530
        %v1418 = vunpack.c.l.b16 %v531
        %v1419 = vunpack.c.h.b16 %v531
        %v1420 = vunpack.c.l.b16 %v532
        %v1421 = vunpack.c.h.b16 %v532
        %v1422 = vunpack.c.l.b16 %v533
        %v1423 = vunpack.c.h.b16 %v533
        %v1424 = vunpack.c.l.b16 %v534
        %v1425 = vunpack.c.h.b16 %v534
        %v1426 = vunpack.c.l.b16 %v535
        %v1427 = vunpack.c.h.b16 %v535
        %v1428 = vunpack.c.l.b16 %v536
        %v1429 = vunpack.c.h.b16 %v536
        %v1430 = vunpack.c.l.b16 %v537
        %v1431 = vunpack.c.h.b16 %v537
        %v1432 = vunpack.c.l.b16 %v538
        %v1433 = vunpack.c.h.b16 %v538
        %v1434 = vunpack.c.l.b16 %v539
        %v1435 = vunpack.c.h.b16 %v539
        %v1436 = vunpack.c.l.b16 %v540
        %v1437 = vunpack.c.h.b16 %v540
        %v1438 = vunpack.c.l.b16 %v541
        %v1439 = vunpack.c.h.b16 %v541
        %v1440 = vunpack.c.l.b16 %v542
        %v1441 = vunpack.c.h.b16 %v542
        %v1442 = vunpack.c.l.b16 %v543
        %v1443 = vunpack.c.h.b16 %v543
        %v1444 = vunpack.c.l.b16 %v544
        %v1445 = vunpack.c.h.b16 %v544
        %v1446 = vunpack.c.l.b16 %v545
        %v1447 = vunpack.c.h.b16 %v545
        %v1448 = vunpack.c.l.b16 %v546
        %v1449 = vunpack.c.h.b16 %v546
        %v1450 = vunpack.c.l.b16 %v547
        %v1451 = vunpack.c.h.b16 %v547
        %v1452 = vunpack.c.l.b16 %v548
        %v1453 = vunpack.c.h.b16 %v548
        %v1454 = vunpack.c.l.b16 %v549
        %v1455 = vunpack.c.h.b16 %v549
        %v1456 = vunpack.c.l.b16 %v550
        %v1457 = vunpack.c.h.b16 %v550
        %v1458 = vunpack.c.l.b16 %v551
        %v1459 = vunpack.c.h.b16 %v551
        %v1460 = vunpack.c.l.b16 %v552
        %v1461 = vunpack.c.h.b16 %v552
        %v1462 = vunpack.c.l.b16 %v553
        %v1463 = vunpack.c.h.b16 %v553
        %v1464 = vunpack.c.l.b16 %v554
        %v1465 = vunpack.c.h.b16 %v554
        %v1466 = vunpack.c.l.b16 %v555
        %v1467 = vunpack.c.h.b16 %v555
        %v1468 = vunpack.c.l.b16 %v556
        %v1469 = vunpack.c.h.b16 %v556
        %v1470 = vunpack.c.l.b16 %v557
        %v1471 = vunpack.c.h.b16 %v557
        %v1472 = vunpack.c.l.b16 %v558
        %v1473 = vunpack.c.h.b16 %v558
        %v1474 = vunpack.c.l.b16 %v559
        %v1475 = vunpack.c.h.b16 %v559
        %v1476 = vunpack.c.l.b16 %v560
        %v1477 = vunpack.c.h.b16 %v560
        %v1478 = vunpack.c.l.b16 %v561
        %v1479 = vunpack.c.h.b16 %v561
        %v1480 = vunpack.c.l.b16 %v562
        %v1481 = vunpack.c.h.b16 %v562
        %v1482 = vunpack.c.l.b16 %v563
        %v1483 = vunpack.c.h.b16 %v563
        %v1484 = vunpack.c.l.b16 %v564
        %v1485 = vunpack.c.h.b16 %v564
        %v1486 = vunpack.c.l.b16 %v565
        %v1487 = vunpack.c.h.b16 %v565
        %v1488 = vunpack.c.l.b16 %v566
        %v1489 = vunpack.c.h.b16 %v566
        %v1490 = vunpack.c.l.b16 %v567
        %v1491 = vunpack.c.h.b16 %v567
        %v1492 = vunpack.c.l.b16 %v568
        %v1493 = vunpack.c.h.b16 %v568
        %v1494 = vunpack.c.l.b16 %v569
        %v1495 = vunpack.c.h.b16 %v569
        %v1496 = vunpack.c.l.b16 %v570
        %v1497 = vunpack.c.h.b16 %v570
        %v1498 = vunpack.c.l.b16 %v571
        %v1499 = vunpack.c.h.b16 %v571
        %v1500 = vunpack.c.l.b16 %v572
        %v1501 = vunpack.c.h.b16 %v572
        %v1502 = vunpack.c.l.b16 %v573
        %v1503 = vunpack.c.h.b16 %v573
        %v1504 = vunpack.c.l.b16 %v574
        %v1505 = vunpack.c.h.b16 %v574
        %v1506 = vunpack.c.l.b16 %v575
        %v1507 = vunpack.c.h.b16 %v575
        %v1508 = vunpack.c.l.b16 %v576
        %v1509 = vunpack.c.h.b16 %v576
        %v1510 = vunpack.c.l.b16 %v577
        %v1511 = vunpack.c.h.b16 %v577
        %v1512 = vunpack.c.l.b16 %v578
        %v1513 = vunpack.c.h.b16 %v578
        %v1514 = vunpack.c.l.b16 %v579
        %v1515 = vunpack.c.h.b16 %v579
        %v1516 = vunpack.c.l.b16 %v580
        %v1517 = vunpack.c.h.b16 %v580
        %v1518 = vunpack.c.l.b16 %v581
        %v1519 = vunpack.c.h.b16 %v581
        %v1520 = vunpack.c.l.b16 %v582
        %v1521 = vunpack.c.h.b16 %v582
        %v1522 = vunpack.c.l.b16 %v583
        %v1523 = vunpack.c.h.b16 %v583
        %v1524 = vunpack.c.l.b16 %v584
        %v1525 = vunpack.c.h.b16 %v584
        %v1526 = vunpack.c.l.b16 %v585
        %v1527 = vunpack.c.h.b16 %v585
        %v1528 = vunpack.c.l.b16 %v586
        %v1529 = vunpack.c.h.b16 %v586
        %v1530 = vunpack.c.l.b16 %v587
        %v1531 = vunpack.c.h.b16 %v587
        %v1532 = vunpack.c.l.b16 %v588
        %v1533 = vunpack.c.h.b16 %v588
        %v1534 = vunpack.c.l.b16 %v589
        %v1535 = vunpack.c.h.b16 %v589
        %v1536 = vunpack.c.l.b16 %v590
        %v1537 = vunpack.c.h.b16 %v590
        %v1538 = vunpack.c.l.b16 %v591
        %v1539 = vunpack.c.h.b16 %v591
        %v1540 = vunpack.c.l.b16 %v592
        %v1541 = vunpack.c.h.b16 %v592
        %v1542 = vunpack.c.l.b16 %v593
        %v1543 = vunpack.c.h.b16 %v593
        %v1544 = vunpack.c.l.b16 %v594
        %v1545 = vunpack.c.h.b16 %v594
        %v1546 = vunpack.c.l.b16 %v595
        %v1547 = vunpack.c.h.b16 %v595
        %v1548 = vunpack.c.l.b16 %v596
        %v1549 = vunpack.c.h.b16 %v596
        %v1550 = vunpack.c.l.b16 %v597
        %v1551 = vunpack.c.h.b16 %v597
        %v1552 = vunpack.c.l.b16 %v598
        %v1553 = vunpack.c.h.b16 %v598
        %v1554 = vunpack.c.l.b16 %v599
        %v1555 = vunpack.c.h.b16 %v599
        %v1556 = vunpack.c.l.b16 %v600
        %v1557 = vunpack.c.h.b16 %v600
        %v1558 = vunpack.c.l.b16 %v601
        %v1559 = vunpack.c.h.b16 %v601
        %v1560 = vunpack.c.l.b16 %v602
        %v1561 = vunpack.c.h.b16 %v602
        %v1562 = vunpack.c.l.b16 %v603
        %v1563 = vunpack.c.h.b16 %v603
        %v1564 = vunpack.c.l.b16 %v604
        %v1565 = vunpack.c.h.b16 %v604
        %v1566 = vunpack.c.l.b16 %v605
        %v1567 = vunpack.c.h.b16 %v605
        %v1568 = vunpack.c.l.b16 %v606
        %v1569 = vunpack.c.h.b16 %v606
        %v1570 = vunpack.c.l.b16 %v607
        %v1571 = vunpack.c.h.b16 %v607
        %v1572 = vunpack.c.l.b16 %v608
        %v1573 = vunpack.c.h.b16 %v608
        %v1574 = vunpack.c.l.b16 %v609
        %v1575 = vunpack.c.h.b16 %v609
        %v1576 = vunpack.c.l.b16 %v610
        %v1577 = vunpack.c.h.b16 %v610
        %v1578 = vunpack.c.l.b16 %v611
        %v1579 = vunpack.c.h.b16 %v611
        %v1580 = vunpack.c.l.b16 %v612
        %v1581 = vunpack.c.h.b16 %v612
        %v1582 = vunpack.c.l.b16 %v613
        %v1583 = vunpack.c.h.b16 %v613
        %v1584 = vunpack.c.l.b16 %v614
        %v1585 = vunpack.c.h.b16 %v614
        %v1586 = vunpack.c.l.b16 %v615
        %v1587 = vunpack.c.h.b16 %v615
        %v1588 = vunpack.c.l.b16 %v616
        %v1589 = vunpack.c.h.b16 %v616
        %v1590 = vunpack.c.l.b16 %v617
        %v1591 = vunpack.c.h.b16 %v617
        %v1592 = vunpack.c.l.b16 %v618
        %v1593 = vunpack.c.h.b16 %v618
        %v1594 = vunpack.c.l.b16 %v619
        %v1595 = vunpack.c.h.b16 %v619
        %v1596 = vunpack.c.l.b16 %v620
        %v1597 = vunpack.c.h.b16 %v620
        %v1598 = vunpack.c.l.b16 %v621
        %v1599 = vunpack.c.h.b16 %v621
        %v1600 = vunpack.c.l.b16 %v622
        %v1601 = vunpack.c.h.b16 %v622
        %v1602 = vunpack.c.l.b16 %v623
        %v1603 = vunpack.c.h.b16 %v623
        %v1604 = vunpack.c.l.b16 %v624
        %v1605 = vunpack.c.h.b16 %v624
        %v1606 = vunpack.c.l.b16 %v625
        %v1607 = vunpack.c.h.b16 %v625
        %v1608 = vunpack.c.l.b16 %v626
        %v1609 = vunpack.c.h.b16 %v626
        %v1610 = vunpack.c.l.b16 %v627
        %v1611 = vunpack.c.h.b16 %v627
        %v1612 = vunpack.c.l.b16 %v628
        %v1613 = vunpack.c.h.b16 %v628
        %v1614 = vunpack.c.l.b16 %v629
        %v1615 = vunpack.c.h.b16 %v629
        %v1616 = vunpack.c.l.b16 %v630
        %v1617 = vunpack.c.h.b16 %v630
        %v1618 = vunpack.c.l.b16 %v631
        %v1619 = vunpack.c.h.b16 %v631
        %v1620 = vunpack.c.l.b16 %v632
        %v1621 = vunpack.c.h.b16 %v632
        %v1622 = vunpack.c.l.b16 %v633
        %v1623 = vunpack.c.h.b16 %v633
        %v1624 = vunpack.c.l.b16 %v634
        %v1625 = vunpack.c.h.b16 %v634
        %v1626 = vunpack.c.l.b16 %v635
        %v1627 = vunpack.c.h.b16 %v635
        %v1628 = vunpack.c.l.b16 %v636
        %v1629 = vunpack.c.h.b16 %v636
        %v1630 = vunpack.c.l.b16 %v637
        %v1631 = vunpack.c.h.b16 %v637
        %v1632 = vunpack.c.l.b16 %v638
        %v1633 = vunpack.c.h.b16 %v638
        %v1634 = vunpack.c.l.b16 %v639
        %v1635 = vunpack.c.h.b16 %v639
        %v1636 = vunpack.c.l.b16 %v640
        %v1637 = vunpack.c.h.b16 %v640
        %v1638 = vunpack.c.l.b16 %v641
        %v1639 = vunpack.c.h.b16 %v641
        %v1640 = vunpack.c.l.b16 %v642
        %v1641 = vunpack.c.h.b16 %v642
        %v1642 = vunpack.c.l.b16 %v643
        %v1643 = vunpack.c.h.b16 %v643
        %v1644 = vunpack.c.l.b16 %v644
        %v1645 = vunpack.c.h.b16 %v644
        %v1646 = vunpack.c.l.b16 %v645
        %v1647 = vunpack.c.h.b16 %v645
        %v1648 = vunpack.c.l.b16 %v646
        %v1649 = vunpack.c.h.b16 %v646
        %v1650 = vunpack.c.l.b16 %v647
        %v1651 = vunpack.c.h.b16 %v647
        %v1652 = vunpack.c.l.b16 %v648
        %v1653 = vunpack.c.h.b16 %v648
        %v1654 = vunpack.c.l.b16 %v649
        %v1655 = vunpack.c.h.b16 %v649
        %v1656 = vunpack.c.l.b16 %v650
        %v1657 = vunpack.c.h.b16 %v650
        %v1658 = vunpack.c.l.b16 %v651
        %v1659 = vunpack.c.h.b16 %v651
        %v1660 = vunpack.c.l.b16 %v652
        %v1661 = vunpack.c.h.b16 %v652
        %v1662 = vunpack.c.l.b16 %v653
        %v1663 = vunpack.c.h.b16 %v653
        %v1664 = vunpack.c.l.b16 %v654
        %v1665 = vunpack.c.h.b16 %v654
        %v1666 = vunpack.c.l.b16 %v655
        %v1667 = vunpack.c.h.b16 %v655
        %v1668 = vunpack.c.l.b16 %v656
        %v1669 = vunpack.c.h.b16 %v656
        %v1670 = vunpack.c.l.b16 %v657
        %v1671 = vunpack.c.h.b16 %v657
        %v1672 = vunpack.c.l.b16 %v658
        %v1673 = vunpack.c.h.b16 %v658
        %v1674 = vunpack.c.l.b16 %v659
        %v1675 = vunpack.c.h.b16 %v659
        %v1676 = vunpack.c.l.b16 %v660
        %v1677 = vunpack.c.h.b16 %v660
        %v1678 = vunpack.c.l.b16 %v661
        %v1679 = vunpack.c.h.b16 %v661
        %v1680 = vunpack.c.l.b16 %v662
        %v1681 = vunpack.c.h.b16 %v662
        %v1682 = vunpack.c.l.b16 %v663
        %v1683 = vunpack.c.h.b16 %v663
        %v1684 = vunpack.c.l.b16 %v664
        %v1685 = vunpack.c.h.b16 %v664
        %v1686 = vunpack.c.l.b16 %v665
        %v1687 = vunpack.c.h.b16 %v665
        %v1688 = vunpack.c.l.b16 %v666
        %v1689 = vunpack.c.h.b16 %v666
        %v1690 = vunpack.c.l.b16 %v667
        %v1691 = vunpack.c.h.b16 %v667
        %v1692 = vunpack.c.l.b16 %v668
        %v1693 = vunpack.c.h.b16 %v668
        %v1694 = vunpack.c.l.b16 %v669
        %v1695 = vunpack.c.h.b16 %v669
        %v1696 = vunpack.c.l.b16 %v670
        %v1697 = vunpack.c.h.b16 %v670
        %v1698 = vunpack.c.l.b16 %v671
        %v1699 = vunpack.c.h.b16 %v671
        %v1700 = vunpack.c.l.b16 %v672
        %v1701 = vunpack.c.h.b16 %v672
        %v1702 = vunpack.c.l.b16 %v673
        %v1703 = vunpack.c.h.b16 %v673
        %v1704 = vunpack.c.l.b16 %v674
        %v1705 = vunpack.c.h.b16 %v674
        %v1706 = vunpack.c.l.b16 %v675
        %v1707 = vunpack.c.h.b16 %v675
        %v1708 = vunpack.c.l.b16 %v676
        %v1709 = vunpack.c.h.b16 %v676
        %v1710 = vunpack.c.l.b16 %v677
        %v1711 = vunpack.c.h.b16 %v677
        %v1712 = vunpack.c.l.b16 %v678
        %v1713 = vunpack.c.h.b16 %v678
        %v1714 = vunpack.c.l.b16 %v679
        %v1715 = vunpack.c.h.b16 %v679
        %v1716 = vunpack.c.l.b16 %v680
        %v1717 = vunpack.c.h.b16 %v680
        %v1718 = vunpack.c.l.b16 %v681
        %v1719 = vunpack.c.h.b16 %v681
        %v1720 = vunpack.c.l.b16 %v682
        %v1721 = vunpack.c.h.b16 %v682
        %v1722 = vunpack.c.l.b16 %v683
        %v1723 = vunpack.c.h.b16 %v683
        %v1724 = vunpack.c.l.b16 %v684
        %v1725 = vunpack.c.h.b16 %v684
        %v1726 = vunpack.c.l.b16 %v685
        %v1727 = vunpack.c.h.b16 %v685
        %v1728 = vunpack.c.l.b16 %v686
        %v1729 = vunpack.c.h.b16 %v686
        %v1730 = vunpack.c.l.b16 %v687
        %v1731 = vunpack.c.h.b16 %v687
        %v1732 = vunpack.c.l.b16 %v688
        %v1733 = vunpack.c.h.b16 %v688
        %v1734 = vunpack.c.l.b16 %v689
        %v1735 = vunpack.c.h.b16 %v689
        %v1736 = vunpack.c.l.b16 %v690
        %v1737 = vunpack.c.h.b16 %v690
        %v1738 = vunpack.c.l.b16 %v691
        %v1739 = vunpack.c.h.b16 %v691
        %v1740 = vunpack.c.l.b16 %v692
        %v1741 = vunpack.c.h.b16 %v692
        %v1742 = vunpack.c.l.b16 %v693
        %v1743 = vunpack.c.h.b16 %v693
        %v1744 = vunpack.c.l.b16 %v694
        %v1745 = vunpack.c.h.b16 %v694
        %v1746 = vunpack.c.l.b16 %v695
        %v1747 = vunpack.c.h.b16 %v695
        %v1748 = vunpack.c.l.b16 %v696
        %v1749 = vunpack.c.h.b16 %v696
        %v1750 = vunpack.c.l.b16 %v697
        %v1751 = vunpack.c.h.b16 %v697
        %v1752 = vunpack.c.l.b16 %v698
        %v1753 = vunpack.c.h.b16 %v698
        %v1754 = vunpack.c.l.b16 %v699
        %v1755 = vunpack.c.h.b16 %v699
        %v1756 = vunpack.c.l.b16 %v700
        %v1757 = vunpack.c.h.b16 %v700
        %v1758 = vunpack.c.l.b16 %v701
        %v1759 = vunpack.c.h.b16 %v701
        %v1760 = vunpack.c.l.b16 %v702
        %v1761 = vunpack.c.h.b16 %v702
        %v1762 = vunpack.c.l.b16 %v703
        %v1763 = vunpack.c.h.b16 %v703
        %v1764 = vunpack.c.l.b16 %v704
        %v1765 = vunpack.c.h.b16 %v704
        %v1766 = vunpack.c.l.b16 %v705
        %v1767 = vunpack.c.h.b16 %v705
        %v1768 = vunpack.c.l.b16 %v706
        %v1769 = vunpack.c.h.b16 %v706
        %v1770 = vunpack.c.l.b16 %v707
        %v1771 = vunpack.c.h.b16 %v707
        %v1772 = vunpack.c.l.b16 %v708
        %v1773 = vunpack.c.h.b16 %v708
        %v1774 = vunpack.c.l.b16 %v709
        %v1775 = vunpack.c.h.b16 %v709
        %v1776 = vunpack.c.l.b16 %v710
        %v1777 = vunpack.c.h.b16 %v710
        %v1778 = vunpack.c.l.b16 %v711
        %v1779 = vunpack.c.h.b16 %v711
        %v1780 = vunpack.c.l.b16 %v712
        %v1781 = vunpack.c.h.b16 %v712
        %v1782 = vunpack.c.l.b16 %v713
        %v1783 = vunpack.c.h.b16 %v713
        %v1784 = vunpack.c.l.b16 %v714
        %v1785 = vunpack.c.h.b16 %v714
        %v1786 = vunpack.c.l.b16 %v715
        %v1787 = vunpack.c.h.b16 %v715
        %v1788 = vunpack.c.l.b16 %v716
        %v1789 = vunpack.c.h.b16 %v716
        %v1790 = vunpack.c.l.b16 %v717
        %v1791 = vunpack.c.h.b16 %v717
        %v1792 = vunpack.c.l.b16 %v718
        %v1793 = vunpack.c.h.b16 %v718
        %v1794 = vunpack.c.l.b16 %v719
        %v1795 = vunpack.c.h.b16 %v719
        %v1796 = vunpack.c.l.b16 %v720
        %v1797 = vunpack.c.h.b16 %v720
        %v1798 = vunpack.c.l.b16 %v721
        %v1799 = vunpack.c.h.b16 %v721
        %v1800 = vunpack.c.l.b16 %v722
        %v1801 = vunpack.c.h.b16 %v722
        %v1802 = vunpack.c.l.b16 %v723
        %v1803 = vunpack.c.h.b16 %v723
        %v1804 = vunpack.c.l.b16 %v724
        %v1805 = vunpack.c.h.b16 %v724
        %v1806 = vunpack.c.l.b16 %v725
        %v1807 = vunpack.c.h.b16 %v725
        %v1808 = vunpack.c.l.b16 %v726
        %v1809 = vunpack.c.h.b16 %v726
        %v1810 = vunpack.c.l.b16 %v727
        %v1811 = vunpack.c.h.b16 %v727
        %v1812 = vunpack.c.l.b16 %v728
        %v1813 = vunpack.c.h.b16 %v728
        %v1814 = vunpack.c.l.b16 %v729
        %v1815 = vunpack.c.h.b16 %v729
        %v1816 = vunpack.c.l.b16 %v730
        %v1817 = vunpack.c.h.b16 %v730
        %v1818 = vunpack.c.l.b16 %v731
        %v1819 = vunpack.c.h.b16 %v731
        %v1820 = vunpack.c.l.b16 %v732
        %v1821 = vunpack.c.h.b16 %v732
        %v1822 = vunpack.c.l.b16 %v733
        %v1823 = vunpack.c.h.b16 %v733
        %v1824 = vunpack.c.l.b16 %v734
        %v1825 = vunpack.c.h.b16 %v734
        %v1826 = vunpack.c.l.b16 %v735
        %v1827 = vunpack.c.h.b16 %v735
        %v1828 = vunpack.c.l.b16 %v736
        %v1829 = vunpack.c.h.b16 %v736
        %v1830 = vunpack.c.l.b16 %v737
        %v1831 = vunpack.c.h.b16 %v737
        %v1832 = vunpack.c.l.b16 %v738
        %v1833 = vunpack.c.h.b16 %v738
        %v1834 = vunpack.c.l.b16 %v739
        %v1835 = vunpack.c.h.b16 %v739
        %v1836 = vunpack.c.l.b16 %v740
        %v1837 = vunpack.c.h.b16 %v740
        %v1838 = vunpack.c.l.b16 %v741
        %v1839 = vunpack.c.h.b16 %v741
        %v1840 = vunpack.c.l.b16 %v742
        %v1841 = vunpack.c.h.b16 %v742
        %v1842 = vunpack.c.l.b16 %v743
        %v1843 = vunpack.c.h.b16 %v743
        %v1844 = vunpack.c.l.b16 %v744
        %v1845 = vunpack.c.h.b16 %v744
        %v1846 = vunpack.c.l.b16 %v745
        %v1847 = vunpack.c.h.b16 %v745
        %v1848 = vunpack.c.l.b16 %v746
        %v1849 = vunpack.c.h.b16 %v746
        %v1850 = vunpack.c.l.b16 %v747
        %v1851 = vunpack.c.h.b16 %v747
        %v1852 = vunpack.c.l.b16 %v748
        %v1853 = vunpack.c.h.b16 %v748
        %v1854 = vunpack.c.l.b16 %v749
        %v1855 = vunpack.c.h.b16 %v749
        %v1856 = vunpack.c.l.b16 %v750
        %v1857 = vunpack.c.h.b16 %v750
        %v1858 = vunpack.c.l.b16 %v751
        %v1859 = vunpack.c.h.b16 %v751
        %v1860 = vunpack.c.l.b16 %v752
        %v1861 = vunpack.c.h.b16 %v752
        %v1862 = vunpack.c.l.b16 %v753
        %v1863 = vunpack.c.h.b16 %v753
        %v1864 = vunpack.c.l.b16 %v754
        %v1865 = vunpack.c.h.b16 %v754
        %v1866 = vunpack.c.l.b16 %v755
        %v1867 = vunpack.c.h.b16 %v755
        %v1868 = vunpack.c.l.b16 %v756
        %v1869 = vunpack.c.h.b16 %v756
        %v1870 = vunpack.c.l.b16 %v757
        %v1871 = vunpack.c.h.b16 %v757
        %v1872 = vunpack.c.l.b16 %v758
        %v1873 = vunpack.c.h.b16 %v758
        %v1874 = vunpack.c.l.b16 %v759
        %v1875 = vunpack.c.h.b16 %v759
        %v1876 = vunpack.c.l.b16 %v760
        %v1877 = vunpack.c.h.b16 %v760
        %v1878 = vunpack.c.l.b16 %v761
        %v1879 = vunpack.c.h.b16 %v761
        %v1880 = vunpack.c.l.b16 %v762
        %v1881 = vunpack.c.h.b16 %v762
        %v1882 = vunpack.c.l.b16 %v763
        %v1883 = vunpack.c.h.b16 %v763
        %v1884 = vunpack.c.l.b16 %v764
        %v1885 = vunpack.c.h.b16 %v764
        %v1886 = vunpack.c.l.b16 %v765
        %v1887 = vunpack.c.h.b16 %v765
        %v1888 = vunpack.c.l.b16 %v766
        %v1889 = vunpack.c.h.b16 %v766
        %v1890 = vunpack.c.l.b16 %v767
        %v1891 = vunpack.c.h.b16 %v767
        %v1892 = vunpack.c.l.b16 %v768
        %v1893 = vunpack.c.h.b16 %v768
        %v1894 = vunpack.c.l.b16 %v769
        %v1895 = vunpack.c.h.b16 %v769
        %v1896 = vunpack.c.l.b16 %v770
        %v1897 = vunpack.c.h.b16 %v770
        %v1898 = vunpack.c.l.b16 %v771
        %v1899 = vunpack.c.h.b16 %v771
        %v1900 = vunpack.c.l.b16 %v772
        %v1901 = vunpack.c.h.b16 %v772
        %v1902 = vunpack.c.l.b16 %v773
        %v1903 = vunpack.c.h.b16 %v773
        %v1904 = vunpack.c.l.b16 %v774
        %v1905 = vunpack.c.h.b16 %v774
        %v1906 = vunpack.c.l.b16 %v775
        %v1907 = vunpack.c.h.b16 %v775
        %v1908 = vunpack.c.l.b16 %v776
        %v1909 = vunpack.c.h.b16 %v776
        %v1910 = vunpack.c.l.b16 %v777
        %v1911 = vunpack.c.h.b16 %v777
        %v1912 = vunpack.c.l.b16 %v778
        %v1913 = vunpack.c.h.b16 %v778
        %v1914 = vunpack.c.l.b16 %v779
        %v1915 = vunpack.c.h.b16 %v779
        %v1916 = vunpack.c.l.b16 %v780
        %v1917 = vunpack.c.h.b16 %v780
        %v1918 = vunpack.c.l.b16 %v781
        %v1919 = vunpack.c.h.b16 %v781
        %v1920 = vunpack.c.l.b16 %v782
        %v1921 = vunpack.c.h.b16 %v782
        %v1922 = vunpack.c.l.b16 %v783
        %v1923 = vunpack.c.h.b16 %v783
        %v1924 = vunpack.c.l.b16 %v784
        %v1925 = vunpack.c.h.b16 %v784
        %v1926 = vunpack.c.l.b16 %v785
        %v1927 = vunpack.c.h.b16 %v785
        %v1928 = vunpack.c.l.b16 %v786
        %v1929 = vunpack.c.h.b16 %v786
        %v1930 = vunpack.c.l.b16 %v787
        %v1931 = vunpack.c.h.b16 %v787
        %v1932 = vunpack.c.l.b16 %v788
        %v1933 = vunpack.c.h.b16 %v788
        %v1934 = vunpack.c.l.b16 %v789
        %v1935 = vunpack.c.h.b16 %v789
        %v1936 = vunpack.c.l.b16 %v790
        %v1937 = vunpack.c.h.b16 %v790
        %v1938 = vunpack.c.l.b16 %v791
        %v1939 = vunpack.c.h.b16 %v791
        %v1940 = vunpack.c.l.b16 %v792
        %v1941 = vunpack.c.h.b16 %v792
        %v1942 = vunpack.c.l.b16 %v793
        %v1943 = vunpack.c.h.b16 %v793
        %v1944 = vunpack.c.l.b16 %v794
        %v1945 = vunpack.c.h.b16 %v794
        %v1946 = vunpack.c.l.b16 %v795
        %v1947 = vunpack.c.h.b16 %v795
        %v1948 = vpack.c.b16 %v1186, %v1180
        %v1949 = vpack.c.b16 %v1187, %v1181
        %v1950 = vpack.c.b16 %v1188, %v1182
        %v1951 = vpack.c.b16 %v1189, %v1183
        %v1952 = vpack.c.b16 %v1190, %v1184
        %v1953 = vpack.c.b16 %v1191, %v1185
        %v1954 = vpack.c.b16 %v1198, %v1192
        %v1955 = vpack.c.b16 %v1199, %v1193
        %v1956 = vpack.c.b16 %v1200, %v1194
        %v1957 = vpack.c.b16 %v1201, %v1195
        %v1958 = vpack.c.b16 %v1202, %v1196
        %v1959 = vpack.c.b16 %v1203, %v1197
        %v1960 = vpack.c.b16 %v1210, %v1204
        %v1961 = vpack.c.b16 %v1211, %v1205
        %v1962 = vpack.c.b16 %v1212, %v1206
        %v1963 = vpack.c.b16 %v1213, %v1207
        %v1964 = vpack.c.b16 %v1214, %v1208
        %v1965 = vpack.c.b16 %v1215, %v1209
        %v1966 = vpack.c.b16 %v1222, %v1216
        %v1967 = vpack.c.b16 %v1223, %v1217
        %v1968 = vpack.c.b16 %v1224, %v1218
        %v1969 = vpack.c.b16 %v1225, %v1219
        %v1970 = vpack.c.b16 %v1226, %v1220
        %v1971 = vpack.c.b16 %v1227, %v1221
        %v1972 = vpack.c.b16 %v1234, %v1228
        %v1973 = vpack.c.b16 %v1235, %v1229
        %v1974 = vpack.c.b16 %v1236, %v1230
        %v1975 = vpack.c.b16 %v1237, %v1231
        %v1976 = vpack.c.b16 %v1238, %v1232
        %v1977 = vpack.c.b16 %v1239, %v1233
        %v1978 = vpack.c.b16 %v1246, %v1240
        %v1979 = vpack.c.b16 %v1247, %v1241
        %v1980 = vpack.c.b16 %v1248, %v1242
        %v1981 = vpack.c.b16 %v1249, %v1243
        %v1982 = vpack.c.b16 %v1250, %v1244
        %v1983 = vpack.c.b16 %v1251, %v1245
        %v1984 = vpack.c.b16 %v1258, %v1252
        %v1985 = vpack.c.b16 %v1259, %v1253
        %v1986 = vpack.c.b16 %v1260, %v1254
        %v1987 = vpack.c.b16 %v1261, %v1255
        %v1988 = vpack.c.b16 %v1262, %v1256
        %v1989 = vpack.c.b16 %v1263, %v1257
        %v1990 = vpack.c.b16 %v1270, %v1264
        %v1991 = vpack.c.b16 %v1271, %v1265
        %v1992 = vpack.c.b16 %v1272, %v1266
        %v1993 = vpack.c.b16 %v1273, %v1267
        %v1994 = vpack.c.b16 %v1274, %v1268
        %v1995 = vpack.c.b16 %v1275, %v1269
        %v1996 = vpack.c.b16 %v1282, %v1276
        %v1997 = vpack.c.b16 %v1283, %v1277
        %v1998 = vpack.c.b16 %v1284, %v1278
        %v1999 = vpack.c.b16 %v1285, %v1279
        %v2000 = vpack.c.b16 %v1286, %v1280
        %v2001 = vpack.c.b16 %v1287, %v1281
        %v2002 = vpack.c.b16 %v1294, %v1288
        %v2003 = vpack.c.b16 %v1295, %v1289
        %v2004 = vpack.c.b16 %v1296, %v1290
        %v2005 = vpack.c.b16 %v1297, %v1291
        %v2006 = vpack.c.b16 %v1298, %v1292
        %v2007 = vpack.c.b16 %v1299, %v1293
        %v2008 = vpack.c.b16 %v1306, %v1300
        %v2009 = vpack.c.b16 %v1307, %v1301
        %v2010 = vpack.c.b16 %v1308, %v1302
        %v2011 = vpack.c.b16 %v1309, %v1303
        %v2012 = vpack.c.b16 %v1310, %v1304
        %v2013 = vpack.c.b16 %v1311, %v1305
        %v2014 = vpack.c.b16 %v1318, %v1312
        %v2015 = vpack.c.b16 %v1319, %v1313
        %v2016 = vpack.c.b16 %v1320, %v1314
        %v2017 = vpack.c.b16 %v1321, %v1315
        %v2018 = vpack.c.b16 %v1322, %v1316
        %v2019 = vpack.c.b16 %v1323, %v1317
        %v2020 = vpack.c.b16 %v1330, %v1324
        %v2021 = vpack.c.b16 %v1331, %v1325
        %v2022 = vpack.c.b16 %v1332, %v1326
        %v2023 = vpack.c.b16 %v1333, %v1327
        %v2024 = vpack.c.b16 %v1334, %v1328
        %v2025 = vpack.c.b16 %v1335, %v1329
        %v2026 = vpack.c.b16 %v1342, %v1336
        %v2027 = vpack.c.b16 %v1343, %v1337
        %v2028 = vpack.c.b16 %v1344, %v1338
        %v2029 = vpack.c.b16 %v1345, %v1339
        %v2030 = vpack.c.b16 %v1346, %v1340
        %v2031 = vpack.c.b16 %v1347, %v1341
        %v2032 = vpack.c.b16 %v1354, %v1348
        %v2033 = vpack.c.b16 %v1355, %v1349
        %v2034 = vpack.c.b16 %v1356, %v1350
        %v2035 = vpack.c.b16 %v1357, %v1351
        %v2036 = vpack.c.b16 %v1358, %v1352
        %v2037 = vpack.c.b16 %v1359, %v1353
        %v2038 = vpack.c.b16 %v1366, %v1360
        %v2039 = vpack.c.b16 %v1367, %v1361
        %v2040 = vpack.c.b16 %v1368, %v1362
        %v2041 = vpack.c.b16 %v1369, %v1363
        %v2042 = vpack.c.b16 %v1370, %v1364
        %v2043 = vpack.c.b16 %v1371, %v1365
        %v2044 = vpack.c.b16 %v1378, %v1372
        %v2045 = vpack.c.b16 %v1379, %v1373
        %v2046 = vpack.c.b16 %v1380, %v1374
        %v2047 = vpack.c.b16 %v1381, %v1375
        %v2048 = vpack.c.b16 %v1382, %v1376
        %v2049 = vpack.c.b16 %v1383, %v1377
        %v2050 = vpack.c.b16 %v1390, %v1384
        %v2051 = vpack.c.b16 %v1391, %v1385
        %v2052 = vpack.c.b16 %v1392, %v1386
        %v2053 = vpack.c.b16 %v1393, %v1387
        %v2054 = vpack.c.b16 %v1394, %v1388
        %v2055 = vpack.c.b16 %v1395, %v1389
        %v2056 = vpack.c.b16 %v1402, %v1396
        %v2057 = vpack.c.b16 %v1403, %v1397
        %v2058 = vpack.c.b16 %v1404, %v1398
        %v2059 = vpack.c.b16 %v1405, %v1399
        %v2060 = vpack.c.b16 %v1406, %v1400
        %v2061 = vpack.c.b16 %v1407, %v1401
        %v2062 = vpack.c.b16 %v1414, %v1408
        %v2063 = vpack.c.b16 %v1415, %v1409
        %v2064 = vpack.c.b16 %v1416, %v1410
        %v2065 = vpack.c.b16 %v1417, %v1411
        %v2066 = vpack.c.b16 %v1418, %v1412
        %v2067 = vpack.c.b16 %v1419, %v1413
        %v2068 = vpack.c.b16 %v1426, %v1420
        %v2069 = vpack.c.b16 %v1427, %v1421
        %v2070 = vpack.c.b16 %v1428, %v1422
        %v2071 = vpack.c.b16 %v1429, %v1423
        %v2072 = vpack.c.b16 %v1430, %v1424
        %v2073 = vpack.c.b16 %v1431, %v1425
        %v2074 = vpack.c.b16 %v1438, %v1432
        %v2075 = vpack.c.b16 %v1439, %v1433
        %v2076 = vpack.c.b16 %v1440, %v1434
        %v2077 = vpack.c.b16 %v1441, %v1435
        %v2078 = vpack.c.b16 %v1442, %v1436
        %v2079 = vpack.c.b16 %v1443, %v1437
        %v2080 = vpack.c.b16 %v1450, %v1444
        %v2081 = vpack.c.b16 %v1451, %v1445
        %v2082 = vpack.c.b16 %v1452, %v1446
        %v2083 = vpack.c.b16 %v1453, %v1447
        %v2084 = vpack.c.b16 %v1454, %v1448
        %v2085 = vpack.c.b16 %v1455, %v1449
        %v2086 = vpack.c.b16 %v1462, %v1456
        %v2087 = vpack.c.b16 %v1463, %v1457
        %v2088 = vpack.c.b16 %v1464, %v1458
        %v2089 = vpack.c.b16 %v1465, %v1459
        %v2090 = vpack.c.b16 %v1466, %v1460
        %v2091 = vpack.c.b16 %v1467, %v1461
        %v2092 = vpack.c.b16 %v1474, %v1468
        %v2093 = vpack.c.b16 %v1475, %v1469
        %v2094 = vpack.c.b16 %v1476, %v1470
        %v2095 = vpack.c.b16 %v1477, %v1471
        %v2096 = vpack.c.b16 %v1478, %v1472
        %v2097 = vpack.c.b16 %v1479, %v1473
        %v2098 = vpack.c.b16 %v1486, %v1480
        %v2099 = vpack.c.b16 %v1487, %v1481
        %v2100 = vpack.c.b16 %v1488, %v1482
        %v2101 = vpack.c.b16 %v1489, %v1483
        %v2102 = vpack.c.b16 %v1490, %v1484
        %v2103 = vpack.c.b16 %v1491, %v1485
        %v2104 = vpack.c.b16 %v1498, %v1492
        %v2105 = vpack.c.b16 %v1499, %v1493
        %v2106 = vpack.c.b16 %v1500, %v1494
        %v2107 = vpack.c.b16 %v1501, %v1495
        %v2108 = vpack.c.b16 %v1502, %v1496
        %v2109 = vpack.c.b16 %v1503, %v1497
        %v2110 = vpack.c.b16 %v1510, %v1504
        %v2111 = vpack.c.b16 %v1511, %v1505
        %v2112 = vpack.c.b16 %v1512, %v1506
        %v2113 = vpack.c.b16 %v1513, %v1507
        %v2114 = vpack.c.b16 %v1514, %v1508
        %v2115 = vpack.c.b16 %v1515, %v1509
        %v2116 = vpack.c.b16 %v1522, %v1516
        %v2117 = vpack.c.b16 %v1523, %v1517
        %v2118 = vpack.c.b16 %v1524, %v1518
        %v2119 = vpack.c.b16 %v1525, %v1519
        %v2120 = vpack.c.b16 %v1526, %v1520
        %v2121 = vpack.c.b16 %v1527, %v1521
        %v2122 = vpack.c.b16 %v1534, %v1528
        %v2123 = vpack.c.b16 %v1535, %v1529
        %v2124 = vpack.c.b16 %v1536, %v1530
        %v2125 = vpack.c.b16 %v1537, %v1531
        %v2126 = vpack.c.b16 %v1538, %v1532
        %v2127 = vpack.c.b16 %v1539, %v1533
        %v2128 = vpack.c.b16 %v1546, %v1540
        %v2129 = vpack.c.b16 %v1547, %v1541
        %v2130 = vpack.c.b16 %v1548, %v1542
        %v2131 = vpack.c.b16 %v1549, %v1543
        %v2132 = vpack.c.b16 %v1550, %v1544
        %v2133 = vpack.c.b16 %v1551, %v1545
        %v2134 = vpack.c.b16 %v1558, %v1552
        %v2135 = vpack.c.b16 %v1559, %v1553
        %v2136 = vpack.c.b16 %v1560, %v1554
        %v2137 = vpack.c.b16 %v1561, %v1555
        %v2138 = vpack.c.b16 %v1562, %v1556
        %v2139 = vpack.c.b16 %v1563, %v1557
        %v2140 = vpack.c.b16 %v1570, %v1564
        %v2141 = vpack.c.b16 %v1571, %v1565
        %v2142 = vpack.c.b16 %v1572, %v1566
        %v2143 = vpack.c.b16 %v1573, %v1567
        %v2144 = vpack.c.b16 %v1574, %v1568
        %v2145 = vpack.c.b16 %v1575, %v1569
        %v2146 = vpack.c.b16 %v1582, %v1576
        %v2147 = vpack.c.b16 %v1583, %v1577
        %v2148 = vpack.c.b16 %v1584, %v1578
        %v2149 = vpack.c.b16 %v1585, %v1579
        %v2150 = vpack.c.b16 %v1586, %v1580
        %v2151 = vpack.c.b16 %v1587, %v1581
        %v2152 = vpack.c.b16 %v1594, %v1588
        %v2153 = vpack.c.b16 %v1595, %v1589
        %v2154 = vpack.c.b16 %v1596, %v1590
        %v2155 = vpack.c.b16 %v1597, %v1591
        %v2156 = vpack.c.b16 %v1598, %v1592
        %v2157 = vpack.c.b16 %v1599, %v1593
        %v2158 = vpack.c.b16 %v1606, %v1600
        %v2159 = vpack.c.b16 %v1607, %v1601
        %v2160 = vpack.c.b16 %v1608, %v1602
        %v2161 = vpack.c.b16 %v1609, %v1603
        %v2162 = vpack.c.b16 %v1610, %v1604
        %v2163 = vpack.c.b16 %v1611, %v1605
        %v2164 = vpack.c.b16 %v1618, %v1612
        %v2165 = vpack.c.b16 %v1619, %v1613
        %v2166 = vpack.c.b16 %v1620, %v1614
        %v2167 = vpack.c.b16 %v1621, %v1615
        %v2168 = vpack.c.b16 %v1622, %v1616
        %v2169 = vpack.c.b16 %v1623, %v1617
        %v2170 = vpack.c.b16 %v1630, %v1624
        %v2171 = vpack.c.b16 %v1631, %v1625
        %v2172 = vpack.c.b16 %v1632, %v1626
        %v2173 = vpack.c.b16 %v1633, %v1627
        %v2174 = vpack.c.b16 %v1634, %v1628
        %v2175 = vpack.c.b16 %v1635, %v1629
        %v2176 = vpack.c.b16 %v1642, %v1636
        %v2177 = vpack.c.b16 %v1643, %v1637
        %v2178 = vpack.c.b16 %v1644, %v1638
        %v2179 = vpack.c.b16 %v1645, %v1639
        %v2180 = vpack.c.b16 %v1646, %v1640
        %v2181 = vpack.c.b16 %v1647, %v1641
        %v2182 = vpack.c.b16 %v1654, %v1648
        %v2183 = vpack.c.b16 %v1655, %v1649
        %v2184 = vpack.c.b16 %v1656, %v1650
        %v2185 = vpack.c.b16 %v1657, %v1651
        %v2186 = vpack.c.b16 %v1658, %v1652
        %v2187 = vpack.c.b16 %v1659, %v1653
        %v2188 = vpack.c.b16 %v1666, %v1660
        %v2189 = vpack.c.b16 %v1667, %v1661
        %v2190 = vpack.c.b16 %v1668, %v1662
        %v2191 = vpack.c.b16 %v1669, %v1663
        %v2192 = vpack.c.b16 %v1670, %v1664
        %v2193 = vpack.c.b16 %v1671, %v1665
        %v2194 = vpack.c.b16 %v1678, %v1672
        %v2195 = vpack.c.b16 %v1679, %v1673
        %v2196 = vpack.c.b16 %v1680, %v1674
        %v2197 = vpack.c.b16 %v1681, %v1675
        %v2198 = vpack.c.b16 %v1682, %v1676
        %v2199 = vpack.c.b16 %v1683, %v1677
        %v2200 = vpack.c.b16 %v1690, %v1684
        %v2201 = vpack.c.b16 %v1691, %v1685
        %v2202 = vpack.c.b16 %v1692, %v1686
        %v2203 = vpack.c.b16 %v1693, %v1687
        %v2204 = vpack.c.b16 %v1694, %v1688
        %v2205 = vpack.c.b16 %v1695, %v1689
        %v2206 = vpack.c.b16 %v1702, %v1696
        %v2207 = vpack.c.b16 %v1703, %v1697
        %v2208 = vpack.c.b16 %v1704, %v1698
        %v2209 = vpack.c.b16 %v1705, %v1699
        %v2210 = vpack.c.b16 %v1706, %v1700
        %v2211 = vpack.c.b16 %v1707, %v1701
        %v2212 = vpack.c.b16 %v1714, %v1708
        %v2213 = vpack.c.b16 %v1715, %v1709
        %v2214 = vpack.c.b16 %v1716, %v1710
        %v2215 = vpack.c.b16 %v1717, %v1711
        %v2216 = vpack.c.b16 %v1718, %v1712
        %v2217 = vpack.c.b16 %v1719, %v1713
        %v2218 = vpack.c.b16 %v1726, %v1720
        %v2219 = vpack.c.b16 %v1727, %v1721
        %v2220 = vpack.c.b16 %v1728, %v1722
        %v2221 = vpack.c.b16 %v1729, %v1723
        %v2222 = vpack.c.b16 %v1730, %v1724
        %v2223 = vpack.c.b16 %v1731, %v1725
        %v2224 = vpack.c.b16 %v1738, %v1732
        %v2225 = vpack.c.b16 %v1739, %v1733
        %v2226 = vpack.c.b16 %v1740, %v1734
        %v2227 = vpack.c.b16 %v1741, %v1735
        %v2228 = vpack.c.b16 %v1742, %v1736
        %v2229 = vpack.c.b16 %v1743, %v1737
        %v2230 = vpack.c.b16 %v1750, %v1744
        %v2231 = vpack.c.b16 %v1751, %v1745
        %v2232 = vpack.c.b16 %v1752, %v1746
        %v2233 = vpack.c.b16 %v1753, %v1747
        %v2234 = vpack.c.b16 %v1754, %v1748
        %v2235 = vpack.c.b16 %v1755, %v1749
        %v2236 = vpack.c.b16 %v1762, %v1756
        %v2237 = vpack.c.b16 %v1763, %v1757
        %v2238 = vpack.c.b16 %v1764, %v1758
        %v2239 = vpack.c.b16 %v1765, %v1759
        %v2240 = vpack.c.b16 %v1766, %v1760
        %v2241 = vpack.c.b16 %v1767, %v1761
        %v2242 = vpack.c.b16 %v1774, %v1768
        %v2243 = vpack.c.b16 %v1775, %v1769
        %v2244 = vpack.c.b16 %v1776, %v1770
        %v2245 = vpack.c.b16 %v1777, %v1771
        %v2246 = vpack.c.b16 %v1778, %v1772
        %v2247 = vpack.c.b16 %v1779, %v1773
        %v2248 = vpack.c.b16 %v1786, %v1780
        %v2249 = vpack.c.b16 %v1787, %v1781
        %v2250 = vpack.c.b16 %v1788, %v1782
        %v2251 = vpack.c.b16 %v1789, %v1783
        %v2252 = vpack.c.b16 %v1790, %v1784
        %v2253 = vpack.c.b16 %v1791, %v1785
        %v2254 = vpack.c.b16 %v1798, %v1792
        %v2255 = vpack.c.b16 %v1799, %v1793
        %v2256 = vpack.c.b16 %v1800, %v1794
        %v2257 = vpack.c.b16 %v1801, %v1795
        %v2258 = vpack.c.b16 %v1802, %v1796
        %v2259 = vpack.c.b16 %v1803, %v1797
        %v2260 = vpack.c.b16 %v1810, %v1804
        %v2261 = vpack.c.b16 %v1811, %v1805
        %v2262 = vpack.c.b16 %v1812, %v1806
        %v2263 = vpack.c.b16 %v1813, %v1807
        %v2264 = vpack.c.b16 %v1814, %v1808
        %v2265 = vpack.c.b16 %v1815, %v1809
        %v2266 = vpack.c.b16 %v1822, %v1816
        %v2267 = vpack.c.b16 %v1823, %v1817
        %v2268 = vpack.c.b16 %v1824, %v1818
        %v2269 = vpack.c.b16 %v1825, %v1819
        %v2270 = vpack.c.b16 %v1826, %v1820
        %v2271 = vpack.c.b16 %v1827, %v1821
        %v2272 = vpack.c.b16 %v1834, %v1828
        %v2273 = vpack.c.b16 %v1835, %v1829
        %v2274 = vpack.c.b16 %v1836, %v1830
        %v2275 = vpack.c.b16 %v1837, %v1831
        %v2276 = vpack.c.b16 %v1838, %v1832
        %v2277 = vpack.c.b16 %v1839, %v1833
        %v2278 = vpack.c.b16 %v1846, %v1840
        %v2279 = vpack.c.b16 %v1847, %v1841
        %v2280 = vpack.c.b16 %v1848, %v1842
        %v2281 = vpack.c.b16 %v1849, %v1843
        %v2282 = vpack.c.b16 %v1850, %v1844
        %v2283 = vpack.c.b16 %v1851, %v1845
        %v2284 = vpack.c.b16 %v1858, %v1852
        %v2285 = vpack.c.b16 %v1859, %v1853
        %v2286 = vpack.c.b16 %v1860, %v1854
        %v2287 = vpack.c.b16 %v1861, %v1855
        %v2288 = vpack.c.b16 %v1862, %v1856
        %v2289 = vpack.c.b16 %v1863, %v1857
        %v2290 = vpack.c.b16 %v1870, %v1864
        %v2291 = vpack.c.b16 %v1871, %v1865
        %v2292 = vpack.c.b16 %v1872, %v1866
        %v2293 = vpack.c.b16 %v1873, %v1867
        %v2294 = vpack.c.b16 %v1874, %v1868
        %v2295 = vpack.c.b16 %v1875, %v1869
        %v2296 = vpack.c.b16 %v1882, %v1876
        %v2297 = vpack.c.b16 %v1883, %v1877
        %v2298 = vpack.c.b16 %v1884, %v1878
        %v2299 = vpack.c.b16 %v1885, %v1879
        %v2300 = vpack.c.b16 %v1886, %v1880
        %v2301 = vpack.c.b16 %v1887, %v1881
        %v2302 = vpack.c.b16 %v1894, %v1888
        %v2303 = vpack.c.b16 %v1895, %v1889
        %v2304 = vpack.c.b16 %v1896, %v1890
        %v2305 = vpack.c.b16 %v1897, %v1891
        %v2306 = vpack.c.b16 %v1898, %v1892
        %v2307 = vpack.c.b16 %v1899, %v1893
        %v2308 = vpack.c.b16 %v1906, %v1900
        %v2309 = vpack.c.b16 %v1907, %v1901
        %v2310 = vpack.c.b16 %v1908, %v1902
        %v2311 = vpack.c.b16 %v1909, %v1903
        %v2312 = vpack.c.b16 %v1910, %v1904
        %v2313 = vpack.c.b16 %v1911, %v1905
        %v2314 = vpack.c.b16 %v1918, %v1912
        %v2315 = vpack.c.b16 %v1919, %v1913
        %v2316 = vpack.c.b16 %v1920, %v1914
        %v2317 = vpack.c.b16 %v1921, %v1915
        %v2318 = vpack.c.b16 %v1922, %v1916
        %v2319 = vpack.c.b16 %v1923, %v1917
        %v2320 = vpack.c.b16 %v1930, %v1924
        %v2321 = vpack.c.b16 %v1931, %v1925
        %v2322 = vpack.c.b16 %v1932, %v1926
        %v2323 = vpack.c.b16 %v1933, %v1927
        %v2324 = vpack.c.b16 %v1934, %v1928
        %v2325 = vpack.c.b16 %v1935, %v1929
        %v2326 = vpack.c.b16 %v1942, %v1936
        %v2327 = vpack.c.b16 %v1943, %v1937
        %v2328 = vpack.c.b16 %v1944, %v1938
        %v2329 = vpack.c.b16 %v1945, %v1939
        %v2330 = vpack.c.b16 %v1946, %v1940
        %v2331 = vpack.c.b16 %v1947, %v1941
        %2716 = vmatpush.bf16.msra.mxu0 %v1990
        %2717 = vmatpush.bf16.msra.mxu0 %v1984
        %2718 = vmatpush.bf16.msra.mxu0 %v1978
        %2719 = vmatpush.bf16.msra.mxu0 %v1972
        %2720 = vmatpush.bf16.msra.mxu0 %v1966
        %2721 = vmatpush.bf16.msra.mxu0 %v1960
        %2722 = vmatpush.bf16.msra.mxu0 %v1954
        %2723 = vmatpush.bf16.msra.mxu0 %v1948
        %2724 = vmatmul.bf16.gmra.mxu0 %v404
        %v2725 = vpop.f32.mrf.mxu0
        %v2726 = vadd.f32 0.0, %v2725
        %v2727 = vpop.f32.mrf.mxu0
        %v2728 = vadd.f32 0.0, %v2727
        %2729 = vdwg.mxu0
        %2730 = vmatpush.bf16.msra.mxu0 %v2038
        %2731 = vmatpush.bf16.msra.mxu0 %v2032
        %2732 = vmatpush.bf16.msra.mxu0 %v2026
        %2733 = vmatpush.bf16.msra.mxu0 %v2020
        %2734 = vmatpush.bf16.msra.mxu0 %v2014
        %2735 = vmatpush.bf16.msra.mxu0 %v2008
        %2736 = vmatpush.bf16.msra.mxu0 %v2002
        %2737 = vmatpush.bf16.msra.mxu0 %v1996
        %2738 = vmatmul.bf16.gmra.mxu0 %v405
        %v2739 = vpop.f32.mrf.mxu0
        %v2740 = vadd.f32 %v2726, %v2739
        %v2741 = vpop.f32.mrf.mxu0
        %v2742 = vadd.f32 %v2728, %v2741
        %2743 = vdwg.mxu0
        %2744 = vmatpush.bf16.msra.mxu0 %v2086
        %2745 = vmatpush.bf16.msra.mxu0 %v2080
        %2746 = vmatpush.bf16.msra.mxu0 %v2074
        %2747 = vmatpush.bf16.msra.mxu0 %v2068
        %2748 = vmatpush.bf16.msra.mxu0 %v2062
        %2749 = vmatpush.bf16.msra.mxu0 %v2056
        %2750 = vmatpush.bf16.msra.mxu0 %v2050
        %2751 = vmatpush.bf16.msra.mxu0 %v2044
        %2752 = vmatmul.bf16.gmra.mxu0 %v406
        %v2753 = vpop.f32.mrf.mxu0
        %v2754 = vadd.f32 %v2740, %v2753
        %v2755 = vpop.f32.mrf.mxu0
        %v2756 = vadd.f32 %v2742, %v2755
        %2757 = vdwg.mxu0
        %2758 = vmatpush.bf16.msra.mxu0 %v2134
        %2759 = vmatpush.bf16.msra.mxu0 %v2128
        %2760 = vmatpush.bf16.msra.mxu0 %v2122
        %2761 = vmatpush.bf16.msra.mxu0 %v2116
        %2762 = vmatpush.bf16.msra.mxu0 %v2110
        %2763 = vmatpush.bf16.msra.mxu0 %v2104
        %2764 = vmatpush.bf16.msra.mxu0 %v2098
        %2765 = vmatpush.bf16.msra.mxu0 %v2092
        %2766 = vmatmul.bf16.gmra.mxu0 %v407
        %v2767 = vpop.f32.mrf.mxu0
        %v2768 = vadd.f32 %v2754, %v2767
        %v2769 = vpop.f32.mrf.mxu0
        %v2770 = vadd.f32 %v2756, %v2769
        %2771 = vdwg.mxu0
        %2772 = vmatpush.bf16.msra.mxu0 %v2182
        %2773 = vmatpush.bf16.msra.mxu0 %v2176
        %2774 = vmatpush.bf16.msra.mxu0 %v2170
        %2775 = vmatpush.bf16.msra.mxu0 %v2164
        %2776 = vmatpush.bf16.msra.mxu0 %v2158
        %2777 = vmatpush.bf16.msra.mxu0 %v2152
        %2778 = vmatpush.bf16.msra.mxu0 %v2146
        %2779 = vmatpush.bf16.msra.mxu0 %v2140
        %2780 = vmatmul.bf16.gmra.mxu0 %v408
        %v2781 = vpop.f32.mrf.mxu0
        %v2782 = vadd.f32 %v2768, %v2781
        %v2783 = vpop.f32.mrf.mxu0
        %v2784 = vadd.f32 %v2770, %v2783
        %2785 = vdwg.mxu0
        %2786 = vmatpush.bf16.msra.mxu0 %v2230
        %2787 = vmatpush.bf16.msra.mxu0 %v2224
        %2788 = vmatpush.bf16.msra.mxu0 %v2218
        %2789 = vmatpush.bf16.msra.mxu0 %v2212
        %2790 = vmatpush.bf16.msra.mxu0 %v2206
        %2791 = vmatpush.bf16.msra.mxu0 %v2200
        %2792 = vmatpush.bf16.msra.mxu0 %v2194
        %2793 = vmatpush.bf16.msra.mxu0 %v2188
        %2794 = vmatmul.bf16.gmra.mxu0 %v409
        %v2795 = vpop.f32.mrf.mxu0
        %v2796 = vadd.f32 %v2782, %v2795
        %v2797 = vpop.f32.mrf.mxu0
        %v2798 = vadd.f32 %v2784, %v2797
        %2799 = vdwg.mxu0
        %2800 = vmatpush.bf16.msra.mxu0 %v2278
        %2801 = vmatpush.bf16.msra.mxu0 %v2272
        %2802 = vmatpush.bf16.msra.mxu0 %v2266
        %2803 = vmatpush.bf16.msra.mxu0 %v2260
        %2804 = vmatpush.bf16.msra.mxu0 %v2254
        %2805 = vmatpush.bf16.msra.mxu0 %v2248
        %2806 = vmatpush.bf16.msra.mxu0 %v2242
        %2807 = vmatpush.bf16.msra.mxu0 %v2236
        %2808 = vmatmul.bf16.gmra.mxu0 %v410
        %v2809 = vpop.f32.mrf.mxu0
        %v2810 = vadd.f32 %v2796, %v2809
        %v2811 = vpop.f32.mrf.mxu0
        %v2812 = vadd.f32 %v2798, %v2811
        %2813 = vdwg.mxu0
        %2814 = vmatpush.bf16.msra.mxu0 %v2326
        %2815 = vmatpush.bf16.msra.mxu0 %v2320
        %2816 = vmatpush.bf16.msra.mxu0 %v2314
        %2817 = vmatpush.bf16.msra.mxu0 %v2308
        %2818 = vmatpush.bf16.msra.mxu0 %v2302
        %2819 = vmatpush.bf16.msra.mxu0 %v2296
        %2820 = vmatpush.bf16.msra.mxu0 %v2290
        %2821 = vmatpush.bf16.msra.mxu0 %v2284
        %2822 = vmatmul.bf16.gmra.mxu0 %v411
        %v2823 = vpop.f32.mrf.mxu0
        %v2824 = vadd.f32 %v2810, %v2823
        %v2825 = vpop.f32.mrf.mxu0
        %v2826 = vadd.f32 %v2812, %v2825
        %2827 = vdwg.mxu0
        %2828 = vmatpush.bf16.msra.mxu0 %v1991
        %2829 = vmatpush.bf16.msra.mxu0 %v1985
        %2830 = vmatpush.bf16.msra.mxu0 %v1979
        %2831 = vmatpush.bf16.msra.mxu0 %v1973
        %2832 = vmatpush.bf16.msra.mxu0 %v1967
        %2833 = vmatpush.bf16.msra.mxu0 %v1961
        %2834 = vmatpush.bf16.msra.mxu0 %v1955
        %2835 = vmatpush.bf16.msra.mxu0 %v1949
        %2836 = vmatmul.bf16.gmra.mxu0 %v404
        %v2837 = vpop.f32.mrf.mxu0
        %v2838 = vadd.f32 0.0, %v2837
        %v2839 = vpop.f32.mrf.mxu0
        %v2840 = vadd.f32 0.0, %v2839
        %2841 = vdwg.mxu0
        %2842 = vmatpush.bf16.msra.mxu0 %v2039
        %2843 = vmatpush.bf16.msra.mxu0 %v2033
        %2844 = vmatpush.bf16.msra.mxu0 %v2027
        %2845 = vmatpush.bf16.msra.mxu0 %v2021
        %2846 = vmatpush.bf16.msra.mxu0 %v2015
        %2847 = vmatpush.bf16.msra.mxu0 %v2009
        %2848 = vmatpush.bf16.msra.mxu0 %v2003
        %2849 = vmatpush.bf16.msra.mxu0 %v1997
        %2850 = vmatmul.bf16.gmra.mxu0 %v405
        %v2851 = vpop.f32.mrf.mxu0
        %v2852 = vadd.f32 %v2838, %v2851
        %v2853 = vpop.f32.mrf.mxu0
        %v2854 = vadd.f32 %v2840, %v2853
        %2855 = vdwg.mxu0
        %2856 = vmatpush.bf16.msra.mxu0 %v2087
        %2857 = vmatpush.bf16.msra.mxu0 %v2081
        %2858 = vmatpush.bf16.msra.mxu0 %v2075
        %2859 = vmatpush.bf16.msra.mxu0 %v2069
        %2860 = vmatpush.bf16.msra.mxu0 %v2063
        %2861 = vmatpush.bf16.msra.mxu0 %v2057
        %2862 = vmatpush.bf16.msra.mxu0 %v2051
        %2863 = vmatpush.bf16.msra.mxu0 %v2045
        %2864 = vmatmul.bf16.gmra.mxu0 %v406
        %v2865 = vpop.f32.mrf.mxu0
        %v2866 = vadd.f32 %v2852, %v2865
        %v2867 = vpop.f32.mrf.mxu0
        %v2868 = vadd.f32 %v2854, %v2867
        %2869 = vdwg.mxu0
        %2870 = vmatpush.bf16.msra.mxu0 %v2135
        %2871 = vmatpush.bf16.msra.mxu0 %v2129
        %2872 = vmatpush.bf16.msra.mxu0 %v2123
        %2873 = vmatpush.bf16.msra.mxu0 %v2117
        %2874 = vmatpush.bf16.msra.mxu0 %v2111
        %2875 = vmatpush.bf16.msra.mxu0 %v2105
        %2876 = vmatpush.bf16.msra.mxu0 %v2099
        %2877 = vmatpush.bf16.msra.mxu0 %v2093
        %2878 = vmatmul.bf16.gmra.mxu0 %v407
        %v2879 = vpop.f32.mrf.mxu0
        %v2880 = vadd.f32 %v2866, %v2879
        %v2881 = vpop.f32.mrf.mxu0
        %v2882 = vadd.f32 %v2868, %v2881
        %2883 = vdwg.mxu0
        %2884 = vmatpush.bf16.msra.mxu0 %v2183
        %2885 = vmatpush.bf16.msra.mxu0 %v2177
        %2886 = vmatpush.bf16.msra.mxu0 %v2171
        %2887 = vmatpush.bf16.msra.mxu0 %v2165
        %2888 = vmatpush.bf16.msra.mxu0 %v2159
        %2889 = vmatpush.bf16.msra.mxu0 %v2153
        %2890 = vmatpush.bf16.msra.mxu0 %v2147
        %2891 = vmatpush.bf16.msra.mxu0 %v2141
        %2892 = vmatmul.bf16.gmra.mxu0 %v408
        %v2893 = vpop.f32.mrf.mxu0
        %v2894 = vadd.f32 %v2880, %v2893
        %v2895 = vpop.f32.mrf.mxu0
        %v2896 = vadd.f32 %v2882, %v2895
        %2897 = vdwg.mxu0
        %2898 = vmatpush.bf16.msra.mxu0 %v2231
        %2899 = vmatpush.bf16.msra.mxu0 %v2225
        %2900 = vmatpush.bf16.msra.mxu0 %v2219
        %2901 = vmatpush.bf16.msra.mxu0 %v2213
        %2902 = vmatpush.bf16.msra.mxu0 %v2207
        %2903 = vmatpush.bf16.msra.mxu0 %v2201
        %2904 = vmatpush.bf16.msra.mxu0 %v2195
        %2905 = vmatpush.bf16.msra.mxu0 %v2189
        %2906 = vmatmul.bf16.gmra.mxu0 %v409
        %v2907 = vpop.f32.mrf.mxu0
        %v2908 = vadd.f32 %v2894, %v2907
        %v2909 = vpop.f32.mrf.mxu0
        %v2910 = vadd.f32 %v2896, %v2909
        %2911 = vdwg.mxu0
        %2912 = vmatpush.bf16.msra.mxu0 %v2279
        %2913 = vmatpush.bf16.msra.mxu0 %v2273
        %2914 = vmatpush.bf16.msra.mxu0 %v2267
        %2915 = vmatpush.bf16.msra.mxu0 %v2261
        %2916 = vmatpush.bf16.msra.mxu0 %v2255
        %2917 = vmatpush.bf16.msra.mxu0 %v2249
        %2918 = vmatpush.bf16.msra.mxu0 %v2243
        %2919 = vmatpush.bf16.msra.mxu0 %v2237
        %2920 = vmatmul.bf16.gmra.mxu0 %v410
        %v2921 = vpop.f32.mrf.mxu0
        %v2922 = vadd.f32 %v2908, %v2921
        %v2923 = vpop.f32.mrf.mxu0
        %v2924 = vadd.f32 %v2910, %v2923
        %2925 = vdwg.mxu0
        %2926 = vmatpush.bf16.msra.mxu0 %v2327
        %2927 = vmatpush.bf16.msra.mxu0 %v2321
        %2928 = vmatpush.bf16.msra.mxu0 %v2315
        %2929 = vmatpush.bf16.msra.mxu0 %v2309
        %2930 = vmatpush.bf16.msra.mxu0 %v2303
        %2931 = vmatpush.bf16.msra.mxu0 %v2297
        %2932 = vmatpush.bf16.msra.mxu0 %v2291
        %2933 = vmatpush.bf16.msra.mxu0 %v2285
        %2934 = vmatmul.bf16.gmra.mxu0 %v411
        %v2935 = vpop.f32.mrf.mxu0
        %v2936 = vadd.f32 %v2922, %v2935
        %v2937 = vpop.f32.mrf.mxu0
        %v2938 = vadd.f32 %v2924, %v2937
        %2939 = vdwg.mxu0
        %2940 = vmatpush.bf16.msra.mxu0 %v1992
        %2941 = vmatpush.bf16.msra.mxu0 %v1986
        %2942 = vmatpush.bf16.msra.mxu0 %v1980
        %2943 = vmatpush.bf16.msra.mxu0 %v1974
        %2944 = vmatpush.bf16.msra.mxu0 %v1968
        %2945 = vmatpush.bf16.msra.mxu0 %v1962
        %2946 = vmatpush.bf16.msra.mxu0 %v1956
        %2947 = vmatpush.bf16.msra.mxu0 %v1950
        %2948 = vmatmul.bf16.gmra.mxu0 %v404
        %v2949 = vpop.f32.mrf.mxu0
        %v2950 = vadd.f32 0.0, %v2949
        %v2951 = vpop.f32.mrf.mxu0
        %v2952 = vadd.f32 0.0, %v2951
        %2953 = vdwg.mxu0
        %2954 = vmatpush.bf16.msra.mxu0 %v2040
        %2955 = vmatpush.bf16.msra.mxu0 %v2034
        %2956 = vmatpush.bf16.msra.mxu0 %v2028
        %2957 = vmatpush.bf16.msra.mxu0 %v2022
        %2958 = vmatpush.bf16.msra.mxu0 %v2016
        %2959 = vmatpush.bf16.msra.mxu0 %v2010
        %2960 = vmatpush.bf16.msra.mxu0 %v2004
        %2961 = vmatpush.bf16.msra.mxu0 %v1998
        %2962 = vmatmul.bf16.gmra.mxu0 %v405
        %v2963 = vpop.f32.mrf.mxu0
        %v2964 = vadd.f32 %v2950, %v2963
        %v2965 = vpop.f32.mrf.mxu0
        %v2966 = vadd.f32 %v2952, %v2965
        %2967 = vdwg.mxu0
        %2968 = vmatpush.bf16.msra.mxu0 %v2088
        %2969 = vmatpush.bf16.msra.mxu0 %v2082
        %2970 = vmatpush.bf16.msra.mxu0 %v2076
        %2971 = vmatpush.bf16.msra.mxu0 %v2070
        %2972 = vmatpush.bf16.msra.mxu0 %v2064
        %2973 = vmatpush.bf16.msra.mxu0 %v2058
        %2974 = vmatpush.bf16.msra.mxu0 %v2052
        %2975 = vmatpush.bf16.msra.mxu0 %v2046
        %2976 = vmatmul.bf16.gmra.mxu0 %v406
        %v2977 = vpop.f32.mrf.mxu0
        %v2978 = vadd.f32 %v2964, %v2977
        %v2979 = vpop.f32.mrf.mxu0
        %v2980 = vadd.f32 %v2966, %v2979
        %2981 = vdwg.mxu0
        %2982 = vmatpush.bf16.msra.mxu0 %v2136
        %2983 = vmatpush.bf16.msra.mxu0 %v2130
        %2984 = vmatpush.bf16.msra.mxu0 %v2124
        %2985 = vmatpush.bf16.msra.mxu0 %v2118
        %2986 = vmatpush.bf16.msra.mxu0 %v2112
        %2987 = vmatpush.bf16.msra.mxu0 %v2106
        %2988 = vmatpush.bf16.msra.mxu0 %v2100
        %2989 = vmatpush.bf16.msra.mxu0 %v2094
        %2990 = vmatmul.bf16.gmra.mxu0 %v407
        %v2991 = vpop.f32.mrf.mxu0
        %v2992 = vadd.f32 %v2978, %v2991
        %v2993 = vpop.f32.mrf.mxu0
        %v2994 = vadd.f32 %v2980, %v2993
        %2995 = vdwg.mxu0
        %2996 = vmatpush.bf16.msra.mxu0 %v2184
        %2997 = vmatpush.bf16.msra.mxu0 %v2178
        %2998 = vmatpush.bf16.msra.mxu0 %v2172
        %2999 = vmatpush.bf16.msra.mxu0 %v2166
        %3000 = vmatpush.bf16.msra.mxu0 %v2160
        %3001 = vmatpush.bf16.msra.mxu0 %v2154
        %3002 = vmatpush.bf16.msra.mxu0 %v2148
        %3003 = vmatpush.bf16.msra.mxu0 %v2142
        %3004 = vmatmul.bf16.gmra.mxu0 %v408
        %v3005 = vpop.f32.mrf.mxu0
        %v3006 = vadd.f32 %v2992, %v3005
        %v3007 = vpop.f32.mrf.mxu0
        %v3008 = vadd.f32 %v2994, %v3007
        %3009 = vdwg.mxu0
        %3010 = vmatpush.bf16.msra.mxu0 %v2232
        %3011 = vmatpush.bf16.msra.mxu0 %v2226
        %3012 = vmatpush.bf16.msra.mxu0 %v2220
        %3013 = vmatpush.bf16.msra.mxu0 %v2214
        %3014 = vmatpush.bf16.msra.mxu0 %v2208
        %3015 = vmatpush.bf16.msra.mxu0 %v2202
        %3016 = vmatpush.bf16.msra.mxu0 %v2196
        %3017 = vmatpush.bf16.msra.mxu0 %v2190
        %3018 = vmatmul.bf16.gmra.mxu0 %v409
        %v3019 = vpop.f32.mrf.mxu0
        %v3020 = vadd.f32 %v3006, %v3019
        %v3021 = vpop.f32.mrf.mxu0
        %v3022 = vadd.f32 %v3008, %v3021
        %3023 = vdwg.mxu0
        %3024 = vmatpush.bf16.msra.mxu0 %v2280
        %3025 = vmatpush.bf16.msra.mxu0 %v2274
        %3026 = vmatpush.bf16.msra.mxu0 %v2268
        %3027 = vmatpush.bf16.msra.mxu0 %v2262
        %3028 = vmatpush.bf16.msra.mxu0 %v2256
        %3029 = vmatpush.bf16.msra.mxu0 %v2250
        %3030 = vmatpush.bf16.msra.mxu0 %v2244
        %3031 = vmatpush.bf16.msra.mxu0 %v2238
        %3032 = vmatmul.bf16.gmra.mxu0 %v410
        %v3033 = vpop.f32.mrf.mxu0
        %v3034 = vadd.f32 %v3020, %v3033
        %v3035 = vpop.f32.mrf.mxu0
        %v3036 = vadd.f32 %v3022, %v3035
        %3037 = vdwg.mxu0
        %3038 = vmatpush.bf16.msra.mxu0 %v2328
        %3039 = vmatpush.bf16.msra.mxu0 %v2322
        %3040 = vmatpush.bf16.msra.mxu0 %v2316
        %3041 = vmatpush.bf16.msra.mxu0 %v2310
        %3042 = vmatpush.bf16.msra.mxu0 %v2304
        %3043 = vmatpush.bf16.msra.mxu0 %v2298
        %3044 = vmatpush.bf16.msra.mxu0 %v2292
        %3045 = vmatpush.bf16.msra.mxu0 %v2286
        %3046 = vmatmul.bf16.gmra.mxu0 %v411
        %v3047 = vpop.f32.mrf.mxu0
        %v3048 = vadd.f32 %v3034, %v3047
        %v3049 = vpop.f32.mrf.mxu0
        %v3050 = vadd.f32 %v3036, %v3049
        %3051 = vdwg.mxu0
        %3052 = vmatpush.bf16.msra.mxu0 %v1993
        %3053 = vmatpush.bf16.msra.mxu0 %v1987
        %3054 = vmatpush.bf16.msra.mxu0 %v1981
        %3055 = vmatpush.bf16.msra.mxu0 %v1975
        %3056 = vmatpush.bf16.msra.mxu0 %v1969
        %3057 = vmatpush.bf16.msra.mxu0 %v1963
        %3058 = vmatpush.bf16.msra.mxu0 %v1957
        %3059 = vmatpush.bf16.msra.mxu0 %v1951
        %3060 = vmatmul.bf16.gmra.mxu0 %v404
        %v3061 = vpop.f32.mrf.mxu0
        %v3062 = vadd.f32 0.0, %v3061
        %v3063 = vpop.f32.mrf.mxu0
        %v3064 = vadd.f32 0.0, %v3063
        %3065 = vdwg.mxu0
        %3066 = vmatpush.bf16.msra.mxu0 %v2041
        %3067 = vmatpush.bf16.msra.mxu0 %v2035
        %3068 = vmatpush.bf16.msra.mxu0 %v2029
        %3069 = vmatpush.bf16.msra.mxu0 %v2023
        %3070 = vmatpush.bf16.msra.mxu0 %v2017
        %3071 = vmatpush.bf16.msra.mxu0 %v2011
        %3072 = vmatpush.bf16.msra.mxu0 %v2005
        %3073 = vmatpush.bf16.msra.mxu0 %v1999
        %3074 = vmatmul.bf16.gmra.mxu0 %v405
        %v3075 = vpop.f32.mrf.mxu0
        %v3076 = vadd.f32 %v3062, %v3075
        %v3077 = vpop.f32.mrf.mxu0
        %v3078 = vadd.f32 %v3064, %v3077
        %3079 = vdwg.mxu0
        %3080 = vmatpush.bf16.msra.mxu0 %v2089
        %3081 = vmatpush.bf16.msra.mxu0 %v2083
        %3082 = vmatpush.bf16.msra.mxu0 %v2077
        %3083 = vmatpush.bf16.msra.mxu0 %v2071
        %3084 = vmatpush.bf16.msra.mxu0 %v2065
        %3085 = vmatpush.bf16.msra.mxu0 %v2059
        %3086 = vmatpush.bf16.msra.mxu0 %v2053
        %3087 = vmatpush.bf16.msra.mxu0 %v2047
        %3088 = vmatmul.bf16.gmra.mxu0 %v406
        %v3089 = vpop.f32.mrf.mxu0
        %v3090 = vadd.f32 %v3076, %v3089
        %v3091 = vpop.f32.mrf.mxu0
        %v3092 = vadd.f32 %v3078, %v3091
        %3093 = vdwg.mxu0
        %3094 = vmatpush.bf16.msra.mxu0 %v2137
        %3095 = vmatpush.bf16.msra.mxu0 %v2131
        %3096 = vmatpush.bf16.msra.mxu0 %v2125
        %3097 = vmatpush.bf16.msra.mxu0 %v2119
        %3098 = vmatpush.bf16.msra.mxu0 %v2113
        %3099 = vmatpush.bf16.msra.mxu0 %v2107
        %3100 = vmatpush.bf16.msra.mxu0 %v2101
        %3101 = vmatpush.bf16.msra.mxu0 %v2095
        %3102 = vmatmul.bf16.gmra.mxu0 %v407
        %v3103 = vpop.f32.mrf.mxu0
        %v3104 = vadd.f32 %v3090, %v3103
        %v3105 = vpop.f32.mrf.mxu0
        %v3106 = vadd.f32 %v3092, %v3105
        %3107 = vdwg.mxu0
        %3108 = vmatpush.bf16.msra.mxu0 %v2185
        %3109 = vmatpush.bf16.msra.mxu0 %v2179
        %3110 = vmatpush.bf16.msra.mxu0 %v2173
        %3111 = vmatpush.bf16.msra.mxu0 %v2167
        %3112 = vmatpush.bf16.msra.mxu0 %v2161
        %3113 = vmatpush.bf16.msra.mxu0 %v2155
        %3114 = vmatpush.bf16.msra.mxu0 %v2149
        %3115 = vmatpush.bf16.msra.mxu0 %v2143
        %3116 = vmatmul.bf16.gmra.mxu0 %v408
        %v3117 = vpop.f32.mrf.mxu0
        %v3118 = vadd.f32 %v3104, %v3117
        %v3119 = vpop.f32.mrf.mxu0
        %v3120 = vadd.f32 %v3106, %v3119
        %3121 = vdwg.mxu0
        %3122 = vmatpush.bf16.msra.mxu0 %v2233
        %3123 = vmatpush.bf16.msra.mxu0 %v2227
        %3124 = vmatpush.bf16.msra.mxu0 %v2221
        %3125 = vmatpush.bf16.msra.mxu0 %v2215
        %3126 = vmatpush.bf16.msra.mxu0 %v2209
        %3127 = vmatpush.bf16.msra.mxu0 %v2203
        %3128 = vmatpush.bf16.msra.mxu0 %v2197
        %3129 = vmatpush.bf16.msra.mxu0 %v2191
        %3130 = vmatmul.bf16.gmra.mxu0 %v409
        %v3131 = vpop.f32.mrf.mxu0
        %v3132 = vadd.f32 %v3118, %v3131
        %v3133 = vpop.f32.mrf.mxu0
        %v3134 = vadd.f32 %v3120, %v3133
        %3135 = vdwg.mxu0
        %3136 = vmatpush.bf16.msra.mxu0 %v2281
        %3137 = vmatpush.bf16.msra.mxu0 %v2275
        %3138 = vmatpush.bf16.msra.mxu0 %v2269
        %3139 = vmatpush.bf16.msra.mxu0 %v2263
        %3140 = vmatpush.bf16.msra.mxu0 %v2257
        %3141 = vmatpush.bf16.msra.mxu0 %v2251
        %3142 = vmatpush.bf16.msra.mxu0 %v2245
        %3143 = vmatpush.bf16.msra.mxu0 %v2239
        %3144 = vmatmul.bf16.gmra.mxu0 %v410
        %v3145 = vpop.f32.mrf.mxu0
        %v3146 = vadd.f32 %v3132, %v3145
        %v3147 = vpop.f32.mrf.mxu0
        %v3148 = vadd.f32 %v3134, %v3147
        %3149 = vdwg.mxu0
        %3150 = vmatpush.bf16.msra.mxu0 %v2329
        %3151 = vmatpush.bf16.msra.mxu0 %v2323
        %3152 = vmatpush.bf16.msra.mxu0 %v2317
        %3153 = vmatpush.bf16.msra.mxu0 %v2311
        %3154 = vmatpush.bf16.msra.mxu0 %v2305
        %3155 = vmatpush.bf16.msra.mxu0 %v2299
        %3156 = vmatpush.bf16.msra.mxu0 %v2293
        %3157 = vmatpush.bf16.msra.mxu0 %v2287
        %3158 = vmatmul.bf16.gmra.mxu0 %v411
        %v3159 = vpop.f32.mrf.mxu0
        %v3160 = vadd.f32 %v3146, %v3159
        %v3161 = vpop.f32.mrf.mxu0
        %v3162 = vadd.f32 %v3148, %v3161
        %3163 = vdwg.mxu0
        %3164 = vmatpush.bf16.msra.mxu0 %v1994
        %3165 = vmatpush.bf16.msra.mxu0 %v1988
        %3166 = vmatpush.bf16.msra.mxu0 %v1982
        %3167 = vmatpush.bf16.msra.mxu0 %v1976
        %3168 = vmatpush.bf16.msra.mxu0 %v1970
        %3169 = vmatpush.bf16.msra.mxu0 %v1964
        %3170 = vmatpush.bf16.msra.mxu0 %v1958
        %3171 = vmatpush.bf16.msra.mxu0 %v1952
        %3172 = vmatmul.bf16.gmra.mxu0 %v404
        %v3173 = vpop.f32.mrf.mxu0
        %v3174 = vadd.f32 0.0, %v3173
        %v3175 = vpop.f32.mrf.mxu0
        %v3176 = vadd.f32 0.0, %v3175
        %3177 = vdwg.mxu0
        %3178 = vmatpush.bf16.msra.mxu0 %v2042
        %3179 = vmatpush.bf16.msra.mxu0 %v2036
        %3180 = vmatpush.bf16.msra.mxu0 %v2030
        %3181 = vmatpush.bf16.msra.mxu0 %v2024
        %3182 = vmatpush.bf16.msra.mxu0 %v2018
        %3183 = vmatpush.bf16.msra.mxu0 %v2012
        %3184 = vmatpush.bf16.msra.mxu0 %v2006
        %3185 = vmatpush.bf16.msra.mxu0 %v2000
        %3186 = vmatmul.bf16.gmra.mxu0 %v405
        %v3187 = vpop.f32.mrf.mxu0
        %v3188 = vadd.f32 %v3174, %v3187
        %v3189 = vpop.f32.mrf.mxu0
        %v3190 = vadd.f32 %v3176, %v3189
        %3191 = vdwg.mxu0
        %3192 = vmatpush.bf16.msra.mxu0 %v2090
        %3193 = vmatpush.bf16.msra.mxu0 %v2084
        %3194 = vmatpush.bf16.msra.mxu0 %v2078
        %3195 = vmatpush.bf16.msra.mxu0 %v2072
        %3196 = vmatpush.bf16.msra.mxu0 %v2066
        %3197 = vmatpush.bf16.msra.mxu0 %v2060
        %3198 = vmatpush.bf16.msra.mxu0 %v2054
        %3199 = vmatpush.bf16.msra.mxu0 %v2048
        %3200 = vmatmul.bf16.gmra.mxu0 %v406
        %v3201 = vpop.f32.mrf.mxu0
        %v3202 = vadd.f32 %v3188, %v3201
        %v3203 = vpop.f32.mrf.mxu0
        %v3204 = vadd.f32 %v3190, %v3203
        %3205 = vdwg.mxu0
        %3206 = vmatpush.bf16.msra.mxu0 %v2138
        %3207 = vmatpush.bf16.msra.mxu0 %v2132
        %3208 = vmatpush.bf16.msra.mxu0 %v2126
        %3209 = vmatpush.bf16.msra.mxu0 %v2120
        %3210 = vmatpush.bf16.msra.mxu0 %v2114
        %3211 = vmatpush.bf16.msra.mxu0 %v2108
        %3212 = vmatpush.bf16.msra.mxu0 %v2102
        %3213 = vmatpush.bf16.msra.mxu0 %v2096
        %3214 = vmatmul.bf16.gmra.mxu0 %v407
        %v3215 = vpop.f32.mrf.mxu0
        %v3216 = vadd.f32 %v3202, %v3215
        %v3217 = vpop.f32.mrf.mxu0
        %v3218 = vadd.f32 %v3204, %v3217
        %3219 = vdwg.mxu0
        %3220 = vmatpush.bf16.msra.mxu0 %v2186
        %3221 = vmatpush.bf16.msra.mxu0 %v2180
        %3222 = vmatpush.bf16.msra.mxu0 %v2174
        %3223 = vmatpush.bf16.msra.mxu0 %v2168
        %3224 = vmatpush.bf16.msra.mxu0 %v2162
        %3225 = vmatpush.bf16.msra.mxu0 %v2156
        %3226 = vmatpush.bf16.msra.mxu0 %v2150
        %3227 = vmatpush.bf16.msra.mxu0 %v2144
        %3228 = vmatmul.bf16.gmra.mxu0 %v408
        %v3229 = vpop.f32.mrf.mxu0
        %v3230 = vadd.f32 %v3216, %v3229
        %v3231 = vpop.f32.mrf.mxu0
        %v3232 = vadd.f32 %v3218, %v3231
        %3233 = vdwg.mxu0
        %3234 = vmatpush.bf16.msra.mxu0 %v2234
        %3235 = vmatpush.bf16.msra.mxu0 %v2228
        %3236 = vmatpush.bf16.msra.mxu0 %v2222
        %3237 = vmatpush.bf16.msra.mxu0 %v2216
        %3238 = vmatpush.bf16.msra.mxu0 %v2210
        %3239 = vmatpush.bf16.msra.mxu0 %v2204
        %3240 = vmatpush.bf16.msra.mxu0 %v2198
        %3241 = vmatpush.bf16.msra.mxu0 %v2192
        %3242 = vmatmul.bf16.gmra.mxu0 %v409
        %v3243 = vpop.f32.mrf.mxu0
        %v3244 = vadd.f32 %v3230, %v3243
        %v3245 = vpop.f32.mrf.mxu0
        %v3246 = vadd.f32 %v3232, %v3245
        %3247 = vdwg.mxu0
        %3248 = vmatpush.bf16.msra.mxu0 %v2282
        %3249 = vmatpush.bf16.msra.mxu0 %v2276
        %3250 = vmatpush.bf16.msra.mxu0 %v2270
        %3251 = vmatpush.bf16.msra.mxu0 %v2264
        %3252 = vmatpush.bf16.msra.mxu0 %v2258
        %3253 = vmatpush.bf16.msra.mxu0 %v2252
        %3254 = vmatpush.bf16.msra.mxu0 %v2246
        %3255 = vmatpush.bf16.msra.mxu0 %v2240
        %3256 = vmatmul.bf16.gmra.mxu0 %v410
        %v3257 = vpop.f32.mrf.mxu0
        %v3258 = vadd.f32 %v3244, %v3257
        %v3259 = vpop.f32.mrf.mxu0
        %v3260 = vadd.f32 %v3246, %v3259
        %3261 = vdwg.mxu0
        %3262 = vmatpush.bf16.msra.mxu0 %v2330
        %3263 = vmatpush.bf16.msra.mxu0 %v2324
        %3264 = vmatpush.bf16.msra.mxu0 %v2318
        %3265 = vmatpush.bf16.msra.mxu0 %v2312
        %3266 = vmatpush.bf16.msra.mxu0 %v2306
        %3267 = vmatpush.bf16.msra.mxu0 %v2300
        %3268 = vmatpush.bf16.msra.mxu0 %v2294
        %3269 = vmatpush.bf16.msra.mxu0 %v2288
        %3270 = vmatmul.bf16.gmra.mxu0 %v411
        %v3271 = vpop.f32.mrf.mxu0
        %v3272 = vadd.f32 %v3258, %v3271
        %v3273 = vpop.f32.mrf.mxu0
        %v3274 = vadd.f32 %v3260, %v3273
        %3275 = vdwg.mxu0
        %3276 = vmatpush.bf16.msra.mxu0 %v1995
        %3277 = vmatpush.bf16.msra.mxu0 %v1989
        %3278 = vmatpush.bf16.msra.mxu0 %v1983
        %3279 = vmatpush.bf16.msra.mxu0 %v1977
        %3280 = vmatpush.bf16.msra.mxu0 %v1971
        %3281 = vmatpush.bf16.msra.mxu0 %v1965
        %3282 = vmatpush.bf16.msra.mxu0 %v1959
        %3283 = vmatpush.bf16.msra.mxu0 %v1953
        %3284 = vmatmul.bf16.gmra.mxu0 %v404
        %v3285 = vpop.f32.mrf.mxu0
        %v3286 = vadd.f32 0.0, %v3285
        %v3287 = vpop.f32.mrf.mxu0
        %v3288 = vadd.f32 0.0, %v3287
        %3289 = vdwg.mxu0
        %3290 = vmatpush.bf16.msra.mxu0 %v2043
        %3291 = vmatpush.bf16.msra.mxu0 %v2037
        %3292 = vmatpush.bf16.msra.mxu0 %v2031
        %3293 = vmatpush.bf16.msra.mxu0 %v2025
        %3294 = vmatpush.bf16.msra.mxu0 %v2019
        %3295 = vmatpush.bf16.msra.mxu0 %v2013
        %3296 = vmatpush.bf16.msra.mxu0 %v2007
        %3297 = vmatpush.bf16.msra.mxu0 %v2001
        %3298 = vmatmul.bf16.gmra.mxu0 %v405
        %v3299 = vpop.f32.mrf.mxu0
        %v3300 = vadd.f32 %v3286, %v3299
        %v3301 = vpop.f32.mrf.mxu0
        %v3302 = vadd.f32 %v3288, %v3301
        %3303 = vdwg.mxu0
        %3304 = vmatpush.bf16.msra.mxu0 %v2091
        %3305 = vmatpush.bf16.msra.mxu0 %v2085
        %3306 = vmatpush.bf16.msra.mxu0 %v2079
        %3307 = vmatpush.bf16.msra.mxu0 %v2073
        %3308 = vmatpush.bf16.msra.mxu0 %v2067
        %3309 = vmatpush.bf16.msra.mxu0 %v2061
        %3310 = vmatpush.bf16.msra.mxu0 %v2055
        %3311 = vmatpush.bf16.msra.mxu0 %v2049
        %3312 = vmatmul.bf16.gmra.mxu0 %v406
        %v3313 = vpop.f32.mrf.mxu0
        %v3314 = vadd.f32 %v3300, %v3313
        %v3315 = vpop.f32.mrf.mxu0
        %v3316 = vadd.f32 %v3302, %v3315
        %3317 = vdwg.mxu0
        %3318 = vmatpush.bf16.msra.mxu0 %v2139
        %3319 = vmatpush.bf16.msra.mxu0 %v2133
        %3320 = vmatpush.bf16.msra.mxu0 %v2127
        %3321 = vmatpush.bf16.msra.mxu0 %v2121
        %3322 = vmatpush.bf16.msra.mxu0 %v2115
        %3323 = vmatpush.bf16.msra.mxu0 %v2109
        %3324 = vmatpush.bf16.msra.mxu0 %v2103
        %3325 = vmatpush.bf16.msra.mxu0 %v2097
        %3326 = vmatmul.bf16.gmra.mxu0 %v407
        %v3327 = vpop.f32.mrf.mxu0
        %v3328 = vadd.f32 %v3314, %v3327
        %v3329 = vpop.f32.mrf.mxu0
        %v3330 = vadd.f32 %v3316, %v3329
        %3331 = vdwg.mxu0
        %3332 = vmatpush.bf16.msra.mxu0 %v2187
        %3333 = vmatpush.bf16.msra.mxu0 %v2181
        %3334 = vmatpush.bf16.msra.mxu0 %v2175
        %3335 = vmatpush.bf16.msra.mxu0 %v2169
        %3336 = vmatpush.bf16.msra.mxu0 %v2163
        %3337 = vmatpush.bf16.msra.mxu0 %v2157
        %3338 = vmatpush.bf16.msra.mxu0 %v2151
        %3339 = vmatpush.bf16.msra.mxu0 %v2145
        %3340 = vmatmul.bf16.gmra.mxu0 %v408
        %v3341 = vpop.f32.mrf.mxu0
        %v3342 = vadd.f32 %v3328, %v3341
        %v3343 = vpop.f32.mrf.mxu0
        %v3344 = vadd.f32 %v3330, %v3343
        %3345 = vdwg.mxu0
        %3346 = vmatpush.bf16.msra.mxu0 %v2235
        %3347 = vmatpush.bf16.msra.mxu0 %v2229
        %3348 = vmatpush.bf16.msra.mxu0 %v2223
        %3349 = vmatpush.bf16.msra.mxu0 %v2217
        %3350 = vmatpush.bf16.msra.mxu0 %v2211
        %3351 = vmatpush.bf16.msra.mxu0 %v2205
        %3352 = vmatpush.bf16.msra.mxu0 %v2199
        %3353 = vmatpush.bf16.msra.mxu0 %v2193
        %3354 = vmatmul.bf16.gmra.mxu0 %v409
        %v3355 = vpop.f32.mrf.mxu0
        %v3356 = vadd.f32 %v3342, %v3355
        %v3357 = vpop.f32.mrf.mxu0
        %v3358 = vadd.f32 %v3344, %v3357
        %3359 = vdwg.mxu0
        %3360 = vmatpush.bf16.msra.mxu0 %v2283
        %3361 = vmatpush.bf16.msra.mxu0 %v2277
        %3362 = vmatpush.bf16.msra.mxu0 %v2271
        %3363 = vmatpush.bf16.msra.mxu0 %v2265
        %3364 = vmatpush.bf16.msra.mxu0 %v2259
        %3365 = vmatpush.bf16.msra.mxu0 %v2253
        %3366 = vmatpush.bf16.msra.mxu0 %v2247
        %3367 = vmatpush.bf16.msra.mxu0 %v2241
        %3368 = vmatmul.bf16.gmra.mxu0 %v410
        %v3369 = vpop.f32.mrf.mxu0
        %v3370 = vadd.f32 %v3356, %v3369
        %v3371 = vpop.f32.mrf.mxu0
        %v3372 = vadd.f32 %v3358, %v3371
        %3373 = vdwg.mxu0
        %3374 = vmatpush.bf16.msra.mxu0 %v2331
        %3375 = vmatpush.bf16.msra.mxu0 %v2325
        %3376 = vmatpush.bf16.msra.mxu0 %v2319
        %3377 = vmatpush.bf16.msra.mxu0 %v2313
        %3378 = vmatpush.bf16.msra.mxu0 %v2307
        %3379 = vmatpush.bf16.msra.mxu0 %v2301
        %3380 = vmatpush.bf16.msra.mxu0 %v2295
        %3381 = vmatpush.bf16.msra.mxu0 %v2289
        %3382 = vmatmul.bf16.gmra.mxu0 %v411
        %v3383 = vpop.f32.mrf.mxu0
        %v3384 = vadd.f32 %v3370, %v3383
        %v3385 = vpop.f32.mrf.mxu0
        %v3386 = vadd.f32 %v3372, %v3385
        %3387 = vdwg.mxu0
        %v3388 = vmul.f32 %v2824, %v2824
        %v3389 = vmul.f32 %v2936, %v2936
        %v3390 = vmul.f32 %v3048, %v3048
        %v3391 = vmul.f32 %v2826, %v2826
        %v3392 = vmul.f32 %v2938, %v2938
        %v3393 = vmul.f32 %v3050, %v3050
        %v3394 = vmul.f32 %v3160, %v3160
        %v3395 = vmul.f32 %v3272, %v3272
        %v3396 = vmul.f32 %v3384, %v3384
        %v3397 = vmul.f32 %v3162, %v3162
        %v3398 = vmul.f32 %v3274, %v3274
        %v3399 = vmul.f32 %v3386, %v3386
        %v3400 = vadd.f32 %v3388, %v3394
        %v3401 = vadd.f32 %v3389, %v3395
        %v3402 = vadd.f32 %v3390, %v3396
        %v3403 = vadd.f32 %v3391, %v3397
        %v3404 = vadd.f32 %v3392, %v3398
        %v3405 = vadd.f32 %v3393, %v3399
        %v3406 = vrsqrt.pop %v3400
        %v3407 = vmul.f32 %v3406, %v3400
        %v3408 = vmul.f32 %v3407, %v3406
        %v3409 = vmul.f32 0.5, %v3408
        %v3410 = vsub.f32 1.5, %v3409
        %v3411 = vmul.f32 %v3406, %v3410
        %v3412 = vmul.f32 %v3400, %v3411
        %vm3413 = vcmp.eq.f32.partialorder %v3400, inf
        %v3414 = vsel %vm3413, %v3400, %v3412
        %vm3415 = vcmp.eq.f32.partialorder %v3400, 0.0
        %v3416 = vand.u32 %v3400, 2147483648
        %v3417 = vsel %vm3415, %v3416, %v3414
        %v3418 = vrsqrt.pop %v3401
        %v3419 = vmul.f32 %v3418, %v3401
        %v3420 = vmul.f32 %v3419, %v3418
        %v3421 = vmul.f32 0.5, %v3420
        %v3422 = vsub.f32 1.5, %v3421
        %v3423 = vmul.f32 %v3418, %v3422
        %v3424 = vmul.f32 %v3401, %v3423
        %vm3425 = vcmp.eq.f32.partialorder %v3401, inf
        %v3426 = vsel %vm3425, %v3401, %v3424
        %vm3427 = vcmp.eq.f32.partialorder %v3401, 0.0
        %v3428 = vand.u32 %v3401, 2147483648
        %v3429 = vsel %vm3427, %v3428, %v3426
        %v3430 = vrsqrt.pop %v3402
        %v3431 = vmul.f32 %v3430, %v3402
        %v3432 = vmul.f32 %v3431, %v3430
        %v3433 = vmul.f32 0.5, %v3432
        %v3434 = vsub.f32 1.5, %v3433
        %v3435 = vmul.f32 %v3430, %v3434
        %v3436 = vmul.f32 %v3402, %v3435
        %vm3437 = vcmp.eq.f32.partialorder %v3402, inf
        %v3438 = vsel %vm3437, %v3402, %v3436
        %vm3439 = vcmp.eq.f32.partialorder %v3402, 0.0
        %v3440 = vand.u32 %v3402, 2147483648
        %v3441 = vsel %vm3439, %v3440, %v3438
        %v3442 = vrsqrt.pop %v3403
        %v3443 = vmul.f32 %v3442, %v3403
        %v3444 = vmul.f32 %v3443, %v3442
        %v3445 = vmul.f32 0.5, %v3444
        %v3446 = vsub.f32 1.5, %v3445
        %v3447 = vmul.f32 %v3442, %v3446
        %v3448 = vmul.f32 %v3403, %v3447
        %vm3449 = vcmp.eq.f32.partialorder %v3403, inf
        %v3450 = vsel %vm3449, %v3403, %v3448
        %vm3451 = vcmp.eq.f32.partialorder %v3403, 0.0
        %v3452 = vand.u32 %v3403, 2147483648
        %v3453 = vsel %vm3451, %v3452, %v3450
        %v3454 = vrsqrt.pop %v3404
        %v3455 = vmul.f32 %v3454, %v3404
        %v3456 = vmul.f32 %v3455, %v3454
        %v3457 = vmul.f32 0.5, %v3456
        %v3458 = vsub.f32 1.5, %v3457
        %v3459 = vmul.f32 %v3454, %v3458
        %v3460 = vmul.f32 %v3404, %v3459
        %vm3461 = vcmp.eq.f32.partialorder %v3404, inf
        %v3462 = vsel %vm3461, %v3404, %v3460
        %vm3463 = vcmp.eq.f32.partialorder %v3404, 0.0
        %v3464 = vand.u32 %v3404, 2147483648
        %v3465 = vsel %vm3463, %v3464, %v3462
        %v3466 = vrsqrt.pop %v3405
        %v3467 = vmul.f32 %v3466, %v3405
        %v3468 = vmul.f32 %v3467, %v3466
        %v3469 = vmul.f32 0.5, %v3468
        %v3470 = vsub.f32 1.5, %v3469
        %v3471 = vmul.f32 %v3466, %v3470
        %v3472 = vmul.f32 %v3405, %v3471
        %vm3473 = vcmp.eq.f32.partialorder %v3405, inf
        %v3474 = vsel %vm3473, %v3405, %v3472
        %vm3475 = vcmp.eq.f32.partialorder %v3405, 0.0
        %v3476 = vand.u32 %v3405, 2147483648
        %v3477 = vsel %vm3475, %v3476, %v3474
        %v3478 = vpack.c.bf16 %v3453, %v3417
        %v3479 = vpack.c.bf16 %v3465, %v3429
        %v3480 = vpack.c.bf16 %v3477, %v3441
        %v3481 = vld [vmem:[#allocation4] sm:$0xf]
        %v3482 = vld [vmem:[#allocation4 + $0x4] sm:$0xf]
        %v3483 = vld [vmem:[#allocation4 + $0x8] sm:$0xf]
        %v3484 = vld [vmem:[#allocation4 + $0xc] sm:$0xf]
        %v3485 = vld [vmem:[#allocation4 + $0x10] sm:$0xf]
        %v3486 = vld [vmem:[#allocation4 + $0x14] sm:$0xf]
        %v3487 = vld [vmem:[#allocation4 + $0x18] sm:$0xf]
        %v3488 = vld [vmem:[#allocation4 + $0x1c] sm:$0xf]
        %v3489 = vld [vmem:[#allocation4 + $0x20] sm:$0xf]
        %v3490 = vld [vmem:[#allocation4 + $0x24] sm:$0xf]
        %v3491 = vld [vmem:[#allocation4 + $0x28] sm:$0xf]
        %v3492 = vld [vmem:[#allocation4 + $0x2c] sm:$0xf]
        %v3493 = vld [vmem:[#allocation4 + $0x30] sm:$0xf]
        %v3494 = vld [vmem:[#allocation4 + $0x34] sm:$0xf]
        %v3495 = vld [vmem:[#allocation4 + $0x38] sm:$0xf]
        %v3496 = vld [vmem:[#allocation4 + $0x3c] sm:$0xf]
        %v3497 = vld [vmem:[#allocation4 + $0x40] sm:$0xf]
        %v3498 = vld [vmem:[#allocation4 + $0x44] sm:$0xf]
        %v3499 = vld [vmem:[#allocation4 + $0x48] sm:$0xf]
        %v3500 = vld [vmem:[#allocation4 + $0x4c] sm:$0xf]
        %v3501 = vld [vmem:[#allocation4 + $0x50] sm:$0xf]
        %v3502 = vld [vmem:[#allocation4 + $0x54] sm:$0xf]
        %v3503 = vld [vmem:[#allocation4 + $0x58] sm:$0xf]
        %v3504 = vld [vmem:[#allocation4 + $0x5c] sm:$0xf]
        %v3505 = vld [vmem:[#allocation4 + $0x60] sm:$0xf]
        %v3506 = vld [vmem:[#allocation4 + $0x64] sm:$0xf]
        %v3507 = vld [vmem:[#allocation4 + $0x68] sm:$0xf]
        %v3508 = vld [vmem:[#allocation4 + $0x6c] sm:$0xf]
        %v3509 = vld [vmem:[#allocation4 + $0x70] sm:$0xf]
        %v3510 = vld [vmem:[#allocation4 + $0x74] sm:$0xf]
        %v3511 = vld [vmem:[#allocation4 + $0x78] sm:$0xf]
        %v3512 = vld [vmem:[#allocation4 + $0x7c] sm:$0xf]
        %v3513 = vld [vmem:[#allocation4 + $0x80] sm:$0xf]
        %v3514 = vld [vmem:[#allocation4 + $0x84] sm:$0xf]
        %v3515 = vld [vmem:[#allocation4 + $0x88] sm:$0xf]
        %v3516 = vld [vmem:[#allocation4 + $0x8c] sm:$0xf]
        %v3517 = vld [vmem:[#allocation4 + $0x90] sm:$0xf]
        %v3518 = vld [vmem:[#allocation4 + $0x94] sm:$0xf]
        %v3519 = vld [vmem:[#allocation4 + $0x98] sm:$0xf]
        %v3520 = vld [vmem:[#allocation4 + $0x9c] sm:$0xf]
        %v3521 = vld [vmem:[#allocation4 + $0xa0] sm:$0xf]
        %v3522 = vld [vmem:[#allocation4 + $0xa4] sm:$0xf]
        %v3523 = vld [vmem:[#allocation4 + $0xa8] sm:$0xf]
        %v3524 = vld [vmem:[#allocation4 + $0xac] sm:$0xf]
        %v3525 = vld [vmem:[#allocation4 + $0xb0] sm:$0xf]
        %v3526 = vld [vmem:[#allocation4 + $0xb4] sm:$0xf]
        %v3527 = vld [vmem:[#allocation4 + $0xb8] sm:$0xf]
        %v3528 = vld [vmem:[#allocation4 + $0xbc] sm:$0xf]
        %v3577 = vunpack.c.l.b16 %v3481
        %v3578 = vunpack.c.l.b16 %v3482
        %v3579 = vunpack.c.l.b16 %v3483
        %v3580 = vunpack.c.l.b16 %v3484
        %v3581 = vunpack.c.l.b16 %v3485
        %v3582 = vunpack.c.l.b16 %v3486
        %v3583 = vunpack.c.l.b16 %v3487
        %v3584 = vunpack.c.l.b16 %v3488
        %v3585 = vunpack.c.l.b16 %v3489
        %v3586 = vunpack.c.l.b16 %v3490
        %v3587 = vunpack.c.l.b16 %v3491
        %v3588 = vunpack.c.l.b16 %v3492
        %v3589 = vunpack.c.l.b16 %v3493
        %v3590 = vunpack.c.l.b16 %v3494
        %v3591 = vunpack.c.l.b16 %v3495
        %v3592 = vunpack.c.l.b16 %v3496
        %v3593 = vunpack.c.l.b16 %v3497
        %v3594 = vunpack.c.l.b16 %v3498
        %v3595 = vunpack.c.l.b16 %v3499
        %v3596 = vunpack.c.l.b16 %v3500
        %v3597 = vunpack.c.l.b16 %v3501
        %v3598 = vunpack.c.l.b16 %v3502
        %v3599 = vunpack.c.l.b16 %v3503
        %v3600 = vunpack.c.l.b16 %v3504
        %v3601 = vunpack.c.l.b16 %v3505
        %v3602 = vunpack.c.l.b16 %v3506
        %v3603 = vunpack.c.l.b16 %v3507
        %v3604 = vunpack.c.l.b16 %v3508
        %v3605 = vunpack.c.l.b16 %v3509
        %v3606 = vunpack.c.l.b16 %v3510
        %v3607 = vunpack.c.l.b16 %v3511
        %v3608 = vunpack.c.l.b16 %v3512
        %v3609 = vunpack.c.l.b16 %v3513
        %v3610 = vunpack.c.l.b16 %v3514
        %v3611 = vunpack.c.l.b16 %v3515
        %v3612 = vunpack.c.l.b16 %v3516
        %v3613 = vunpack.c.l.b16 %v3517
        %v3614 = vunpack.c.l.b16 %v3518
        %v3615 = vunpack.c.l.b16 %v3519
        %v3616 = vunpack.c.l.b16 %v3520
        %v3617 = vunpack.c.l.b16 %v3521
        %v3618 = vunpack.c.l.b16 %v3522
        %v3619 = vunpack.c.l.b16 %v3523
        %v3620 = vunpack.c.l.b16 %v3524
        %v3621 = vunpack.c.l.b16 %v3525
        %v3622 = vunpack.c.l.b16 %v3526
        %v3623 = vunpack.c.l.b16 %v3527
        %v3624 = vunpack.c.l.b16 %v3528
        %v3625 = vpack.c.b16 %v3578, %v3577
        %v3626 = vpack.c.b16 %v3580, %v3579
        %v3627 = vpack.c.b16 %v3582, %v3581
        %v3628 = vpack.c.b16 %v3584, %v3583
        %v3629 = vpack.c.b16 %v3586, %v3585
        %v3630 = vpack.c.b16 %v3588, %v3587
        %v3631 = vpack.c.b16 %v3590, %v3589
        %v3632 = vpack.c.b16 %v3592, %v3591
        %v3633 = vpack.c.b16 %v3594, %v3593
        %v3634 = vpack.c.b16 %v3596, %v3595
        %v3635 = vpack.c.b16 %v3598, %v3597
        %v3636 = vpack.c.b16 %v3600, %v3599
        %v3637 = vpack.c.b16 %v3602, %v3601
        %v3638 = vpack.c.b16 %v3604, %v3603
        %v3639 = vpack.c.b16 %v3606, %v3605
        %v3640 = vpack.c.b16 %v3608, %v3607
        %v3641 = vpack.c.b16 %v3610, %v3609
        %v3642 = vpack.c.b16 %v3612, %v3611
        %v3643 = vpack.c.b16 %v3614, %v3613
        %v3644 = vpack.c.b16 %v3616, %v3615
        %v3645 = vpack.c.b16 %v3618, %v3617
        %v3646 = vpack.c.b16 %v3620, %v3619
        %v3647 = vpack.c.b16 %v3622, %v3621
        %v3648 = vpack.c.b16 %v3624, %v3623
        %3673 = vmatpush.bf16.msra.mxu0 %v3632
        %3674 = vmatpush.bf16.msra.mxu0 %v3631
        %3675 = vmatpush.bf16.msra.mxu0 %v3630
        %3676 = vmatpush.bf16.msra.mxu0 %v3629
        %3677 = vmatpush.bf16.msra.mxu0 %v3628
        %3678 = vmatpush.bf16.msra.mxu0 %v3627
        %3679 = vmatpush.bf16.msra.mxu0 %v3626
        %3680 = vmatpush.bf16.msra.mxu0 %v3625
        %3681 = vmatmul.bf16.gmra.mxu0 %v3478
        %v3682 = vpop.f32.mrf.mxu0
        %v3683 = vadd.f32 0.0, %v3682
        %v3684 = vpop.f32.mrf.mxu0
        %v3685 = vadd.f32 0.0, %v3684
        %3686 = vdwg.mxu0
        %3687 = vmatpush.bf16.msra.mxu0 %v3640
        %3688 = vmatpush.bf16.msra.mxu0 %v3639
        %3689 = vmatpush.bf16.msra.mxu0 %v3638
        %3690 = vmatpush.bf16.msra.mxu0 %v3637
        %3691 = vmatpush.bf16.msra.mxu0 %v3636
        %3692 = vmatpush.bf16.msra.mxu0 %v3635
        %3693 = vmatpush.bf16.msra.mxu0 %v3634
        %3694 = vmatpush.bf16.msra.mxu0 %v3633
        %3695 = vmatmul.bf16.gmra.mxu0 %v3479
        %v3696 = vpop.f32.mrf.mxu0
        %v3697 = vadd.f32 %v3683, %v3696
        %v3698 = vpop.f32.mrf.mxu0
        %v3699 = vadd.f32 %v3685, %v3698
        %3700 = vdwg.mxu0
        %3701 = vmatpush.bf16.msra.mxu0 %v3648
        %3702 = vmatpush.bf16.msra.mxu0 %v3647
        %3703 = vmatpush.bf16.msra.mxu0 %v3646
        %3704 = vmatpush.bf16.msra.mxu0 %v3645
        %3705 = vmatpush.bf16.msra.mxu0 %v3644
        %3706 = vmatpush.bf16.msra.mxu0 %v3643
        %3707 = vmatpush.bf16.msra.mxu0 %v3642
        %3708 = vmatpush.bf16.msra.mxu0 %v3641
        %3709 = vmatmul.bf16.gmra.mxu0 %v3480
        %v3710 = vpop.f32.mrf.mxu0
        %v3711 = vadd.f32 %v3697, %v3710
        %v3712 = vpop.f32.mrf.mxu0
        %v3713 = vadd.f32 %v3699, %v3712
        %3714 = vdwg.mxu0
        %v3715 = vmax.f32 %v3711, 1e-05
        %v3716 = vmax.f32 %v3713, 1e-05
        %v3717 = vlog2.pop %v3715
        %v3718 = vmul.f32 %v3717, 0.6931472
        %v3719 = vlog2.pop %v3716
        %v3720 = vmul.f32 %v3719, 0.6931472
        %3721 = vst [vmem:[%s345] sm:$0xff] %v3718
        %3722 = vst [vmem:[%s345 + $0x8] sm:$0xff] %v3720
        %s3723 = smul.u32 2, %s22
        %p3724 = scmp.lt.s32.totalorder %s21, 1
        %s3725 = scalar_select %p3724, %s21, 1
        %p3726 = scmp.lt.s32.totalorder %s3723, 1
        %s3727 = scalar_select %p3726, %s3723, 1
        %s3728 = smul.addr %s3725, 2
        %s3729 = sadd.s32 %s3727, %s3728
        %s3730 = smul.addr %s3729, 8
        %s3731 = scalar_lea.vmem %s4, %s3730
        // Predicated region
        $region45: #{mel_spectrogram.1} parent=35 // pred_check
          %p3732 = pneg %p151
        $region46: #{mel_spectrogram.1} parent=35 // pred_check_branch
          %3734 = sbr.rel (%p3732) target = $region48
        $region47: #{mel_spectrogram.1} parent=35 // pred_region
          %s3735 = smul.u32 2, %s22
        $region48: #{mel_spectrogram.1} parent=35 // pred_fallthru
          _
      $region36: #{mel_spectrogram.1} parent=5 // pred_fallthru
        _
      %p3736 = scmp.le.s32.totalorder 2, %s12
      // Predicated region
      $region49: #{mel_spectrogram.1} parent=5 // pred_check
        %p3737 = pneg %p3736
      $region50: #{mel_spectrogram.1} parent=5 // pred_check_branch
        %3739 = sbr.rel (%p3737) target = $region52
      $region51: #{mel_spectrogram.1} parent=5 // pred_region
        %s3740 = ssub.s32 %s12, 2
        // Predicated region
        $region53: #{mel_spectrogram.1} parent=51 // pred_check
          %p3741 = pneg %p157
        $region54: #{mel_spectrogram.1} parent=51 // pred_check_branch
          %3743 = sbr.rel (%p3741) target = $region56
        $region55: #{mel_spectrogram.1} parent=51 // pred_region
          %s3744 = smul.u32 2, %s24
          %p3745 = scmp.lt.s32.totalorder %s23, 1
          %s3746 = scalar_select %p3745, %s23, 1
          %p3747 = scmp.lt.s32.totalorder %s3744, 1
          %s3748 = scalar_select %p3747, %s3744, 1
          %s3749 = smul.addr %s3746, 2
          %s3750 = sadd.s32 %s3748, %s3749
          %s3751 = smul.addr %s3750, 8
          %s3752 = scalar_lea.vmem %s4, %s3751
        $region56: #{mel_spectrogram.1} parent=51 // pred_fallthru
          _
      $region52: #{mel_spectrogram.1} parent=5 // pred_fallthru
        _
    $region6: #{mel_spectrogram.1} parent=1 // loop_footer
      %s16 = sadd.s32 1, %s12
    $region7: #{mel_spectrogram.1} parent=1 // loop_footer_branch
      %11 = sbr.rel target = $region3
    $region8: #{mel_spectrogram.1} parent=1 // loop_exit
      _
    %3753 = vsyncpa [#allocation3], 1
    %s3754 = scalar_lea.sflag [#allocation3], 1
    %3755 = vsyncpa %s3754, 1
    %3756 = vsyncpa [#allocation5], 1

</llo_original>
